<compile_context>
chip_gen: v7x
topology: tpu7x:2x2x1
jax: 0.10.0
libtpu: 0.0.40
codegen_flags: <defaults>
</compile_context>

<pallas_src>
import math

import jax
import jax.numpy as jnp
import numpy as np
from jax.experimental import pallas as pl
from jax.experimental.pallas import tpu as pltpu

EPS = 1e-5          # nn.LayerNorm default eps
NEG_INF = -1e30     # mask value for padded attention keys


def _gelu_exact(x):
    # PyTorch nn.GELU() default (erf form)
    return 0.5 * x * (1.0 + jax.lax.erf(x * (1.0 / math.sqrt(2.0))))


def _layernorm(x):
    # Two-pass mean/variance (matches nn.LayerNorm numerics) + EUP rsqrt.
    mu = jnp.mean(x, axis=-1, keepdims=True)
    d = x - mu
    var = jnp.mean(d * d, axis=-1, keepdims=True)
    return d * jax.lax.rsqrt(var + EPS)


# ---------------------------------------------------------------------------
# Fused kernel: patch-embed (layer 0) -> depth x Block -> head (last layer)
# ---------------------------------------------------------------------------
def _mapformer_kernel(patches_ref, pe_w_ref, pe_b_ref,
                      q_ref, ab_ref, w1_ref, b1_ref, w2_ref, b2_ref,
                      hw2_ref, hw1t_ref, hb_ref,
                      out_ref, x_acc, zt_scr, o_scr):
    layer = pl.program_id(1)
    n_layers = pl.num_programs(1)
    bt, t_pad, e_dim = x_acc.shape

    # --- depth step 0: patch embedding (conv k=s=P == per-patch matmul) ---
    @pl.when(layer == 0)
    def _():
        # Flatten (Bt, T, Kp) -> (Bt*T, Kp): T is a multiple of 8 so this is a
        # layout-preserving reshape; one 2-D f32 matmul, run once per batch
        # block.
        p2 = patches_ref[...].reshape(bt * t_pad, -1)
        xe = jax.lax.dot_general(p2, pe_w_ref[...], (((1,), (1,)), ((), ())),
                                 preferred_element_type=jnp.float32)
        x_acc[...] = xe.reshape(bt, t_pad, e_dim) + pe_b_ref[...]

    x = x_acc[...]                                          # (Bt, T, E) f32

    # --- LayerNorm 1 -> ColumnAttention -> residual ---
    y = _layernorm(x)
    y16 = y.astype(jnp.bfloat16)
    # Shared per-token query broadcast over the batch block.  Both matmuls
    # contract the last dim of both operands (flash-attention pattern, no
    # explicit XLU transpose on the per-layer critical path).
    qb = jnp.broadcast_to(q_ref[...], (bt, t_pad, e_dim))   # bf16
    s = jnp.einsum("bqd,bkd->bqk", qb, y16,
                   preferred_element_type=jnp.float32) + ab_ref[...]
    m = jnp.max(s, axis=-1, keepdims=True)
    e = jnp.exp(s - m)
    denom = jnp.sum(e, axis=-1, keepdims=True)              # (Bt, T, 1)
    pv = jnp.einsum("bqk,bkd->bqd", e.astype(jnp.bfloat16), y16,
                    preferred_element_type=jnp.float32)
    # Normalize after the PV matmul (exact; only Bt*T reciprocals).
    x = x + pv * (1.0 / denom)

    # --- LayerNorm 2 -> ColumnMlp (per-token linears) -> residual ---
    z = _layernorm(x)
    # Relayout (Bt, T, E) -> (T, Bt, E) via Bt row copies through a scratch so
    # the per-token matmuls run token-batched on the MXU with M = Bt.
    for i in range(bt):                                     # bt is static
        zt_scr[:, i, :] = z[i]
    zt = zt_scr[...].astype(jnp.bfloat16)                   # (T, Bt, E)
    h = jax.lax.dot_general(zt, w1_ref[...],
                            (((2,), (2,)), ((0,), (0,))),
                            preferred_element_type=jnp.float32)   # (T, Bt, Hd)
    h = _gelu_exact(h + b1_ref[...])                        # b1: (T, 1, Hd)
    o = jax.lax.dot_general(h.astype(jnp.bfloat16), w2_ref[...],
                            (((2,), (2,)), ((0,), (0,))),
                            preferred_element_type=jnp.float32)   # (T, Bt, E)
    o_scr[...] = o + b2_ref[...]                            # b2: (T, 1, E)
    for i in range(bt):
        x_acc[i] = x[i] + o_scr[:, i, :]

    # --- last depth step: FactorLinear2D head (lane-dense (Bt, Kpad) store) --
    @pl.when(layer == n_layers - 1)
    def _():
        xf = x_acc[...]
        x2 = xf.reshape(bt * t_pad, e_dim).astype(jnp.bfloat16)
        t2 = jax.lax.dot_general(x2, hw2_ref[...], (((1,), (1,)), ((), ())),
                                 preferred_element_type=jnp.float32)
        tk = t2.reshape(bt, t_pad, -1)                      # (Bt, T, Kpad)
        out_ref[...] = jnp.sum(tk * hw1t_ref[...], axis=1) + hb_ref[...]


# ---------------------------------------------------------------------------
# Wrapper
# ---------------------------------------------------------------------------
def _extract_patches(x_nchw, P):
    B, C, H, W = x_nchw.shape
    Hp, Wp = H // P, W // P
    patches = x_nchw.reshape(B, C, Hp, P, Wp, P)
    patches = patches.transpose(0, 2, 4, 1, 3, 5)   # (B, Hp, Wp, C, P, P)
    return patches.reshape(B, Hp * Wp, C * P * P)


def _round_up(v, m):
    return ((v + m - 1) // m) * m


def _vmem_limit_bytes(fraction=0.85):
    # Ask for a fraction of the physical per-core VMEM (v5e/v6e: 128 MiB,
    # v7x: 64 MiB) instead of hard-coding the whole chip.
    try:
        cap = int(pltpu.get_tpu_info().vmem_capacity_bytes)
    except Exception:
        cap = 64 * 1024 * 1024
    return int(cap * fraction)


def mapformer_forward(x_nchw, params, patch_size, *, batch_block=8):
    P = patch_size
    E, C = params["pe_w"].shape[0], params["pe_w"].shape[1]
    K = params["head_w1"].shape[0]
    L = len(params["blocks"])
    Hd = params["blocks"][0]["w1"].shape[1]

    patches = _extract_patches(x_nchw, P)                    # (B, T, Kp) f32
    B, T, Kp = patches.shape

    wdt = jnp.bfloat16                                       # streamed-weight dtype

    # Sublane-align T, lane-align the head output, batch-block B.
    Tp = _round_up(max(T, 8), 8)
    Kpad = _round_up(max(K, 128), 128)
    Bt = batch_block                                         # multiple of 8 -> dense store
    Bpad = _round_up(B, Bt)

    patches = jnp.pad(patches, ((0, Bpad - B), (0, Tp - T), (0, 0)))

    # Stack per-block params along a leading depth axis; the pipeline streams
    # one layer's weights per grid step while activations stay in VMEM.
    stack = lambda name: jnp.stack([blk[name] for blk in params["blocks"]])
    q = jnp.pad(stack("q"), ((0, 0), (0, Tp - T), (0, 0))).astype(wdt)
    ab = jnp.zeros((L, Tp, Tp), jnp.float32).at[:, :T, :T].set(stack("ab"))
    if Tp > T:                      # mask padded key tokens out of every row
        ab = ab.at[:, :, T:].set(NEG_INF)
    w1 = jnp.pad(stack("w1"), ((0, 0), (0, Tp - T), (0, 0), (0, 0))).astype(wdt)
    b1 = jnp.pad(stack("b1"), ((0, 0), (0, Tp - T), (0, 0)))[:, :, None, :]
    w2 = jnp.pad(stack("w2"), ((0, 0), (0, Tp - T), (0, 0), (0, 0))).astype(wdt)
    b2 = jnp.pad(stack("b2"), ((0, 0), (0, Tp - T), (0, 0)))[:, :, None, :]

    pe_w = params["pe_w"].reshape(E, C * P * P)              # f32
    pe_b = params["pe_b"].reshape(1, E)                      # f32

    # Lane-dense head: zero-pad classes to Kpad and token rows to Tp.
    hw2 = jnp.zeros((Kpad, E), jnp.float32).at[:K].set(params["head_w2"]).astype(wdt)
    hw1t = jnp.zeros((Tp, Kpad), jnp.float32).at[:T, :K].set(params["head_w1"].T)
    hb = jnp.zeros((1, Kpad), jnp.float32).at[0, :K].set(params["head_b"])

    out = pl.pallas_call(
        _mapformer_kernel,
        out_shape=jax.ShapeDtypeStruct((Bpad, Kpad), jnp.float32),
        grid=(Bpad // Bt, L),
        in_specs=[
            pl.BlockSpec((Bt, Tp, Kp), lambda b, l: (b, 0, 0)),        # patches
            pl.BlockSpec((E, Kp), lambda b, l: (0, 0)),                # pe_w
            pl.BlockSpec((1, E), lambda b, l: (0, 0)),                 # pe_b
            pl.BlockSpec((None, Tp, E), lambda b, l: (l, 0, 0)),       # q
            pl.BlockSpec((None, Tp, Tp), lambda b, l: (l, 0, 0)),      # attn bias
            pl.BlockSpec((None, Tp, Hd, E), lambda b, l: (l, 0, 0, 0)),  # w1
            pl.BlockSpec((None, Tp, 1, Hd), lambda b, l: (l, 0, 0, 0)),  # b1
            pl.BlockSpec((None, Tp, E, Hd), lambda b, l: (l, 0, 0, 0)),  # w2
            pl.BlockSpec((None, Tp, 1, E), lambda b, l: (l, 0, 0, 0)),   # b2
            pl.BlockSpec((Kpad, E), lambda b, l: (0, 0)),              # head_w2
            pl.BlockSpec((Tp, Kpad), lambda b, l: (0, 0)),             # head_w1^T
            pl.BlockSpec((1, Kpad), lambda b, l: (0, 0)),              # head bias
        ],
        out_specs=pl.BlockSpec((Bt, Kpad), lambda b, l: (b, 0)),
        scratch_shapes=[
            pltpu.VMEM((Bt, Tp, E), jnp.float32),    # resident activations
            pltpu.VMEM((Tp, Bt, E), jnp.float32),    # token-major MLP input
            pltpu.VMEM((Tp, Bt, E), jnp.float32),    # token-major MLP output
        ],
        compiler_params=pltpu.CompilerParams(
            dimension_semantics=("parallel", "arbitrary"),
            vmem_limit_bytes=_vmem_limit_bytes()),
    )(patches, pe_w, pe_b, q, ab, w1, b1, w2, b2, hw2, hw1t, hb)
    return out[:B, :K]


# ---------------------------------------------------------------------------
# Parameter init (deterministic, mirrors the PyTorch init distributions)
# ---------------------------------------------------------------------------
def init_params(key, *, img_size, patch_size, in_chans, embed_dim, depth,
                mlp_ratio, num_classes):
    T = (img_size // patch_size) ** 2
    hidden = int(embed_dim * mlp_ratio)
    keys = jax.random.split(key, 2 + depth)
    params = {}

    kpe = jax.random.split(keys[0], 2)
    fan_in = in_chans * patch_size * patch_size
    bpe = 1.0 / math.sqrt(fan_in)
    params["pe_w"] = jax.random.uniform(
        kpe[0], (embed_dim, in_chans, patch_size, patch_size), jnp.float32, -bpe, bpe)
    params["pe_b"] = jax.random.uniform(kpe[1], (embed_dim,), jnp.float32, -bpe, bpe)

    blocks = []
    for i in range(depth):
        ks = jax.random.split(keys[2 + i], 5)
        bq = 1.0 / math.sqrt(embed_dim)
        qp = jax.random.uniform(ks[0], (T, embed_dim), jnp.float32, -bq, bq)
        abp = jnp.zeros((T, T), jnp.float32)
        b1b = 1.0 / math.sqrt(embed_dim)
        w1 = jax.random.uniform(ks[1], (T, hidden, embed_dim), jnp.float32, -b1b, b1b)
        b1 = jax.random.uniform(ks[2], (T, hidden), jnp.float32, -b1b, b1b)
        b2b = 1.0 / math.sqrt(hidden)
        w2 = jax.random.uniform(ks[3], (T, embed_dim, hidden), jnp.float32, -b2b, b2b)
        b2 = jax.random.uniform(ks[4], (T, embed_dim), jnp.float32, -b2b, b2b)
        blocks.append(dict(q=qp, ab=abp, w1=w1, b1=b1, w2=w2, b2=b2))
    params["blocks"] = blocks

    kh = jax.random.split(keys[1], 2)
    bw1 = 1.0 / math.sqrt(T)
    bw2 = 1.0 / math.sqrt(embed_dim)
    params["head_w1"] = jax.random.uniform(kh[0], (num_classes, T), jnp.float32, -bw1, bw1)
    params["head_w2"] = jax.random.uniform(kh[1], (num_classes, embed_dim), jnp.float32, -bw2, bw2)
    params["head_b"] = jnp.zeros((num_classes,), jnp.float32)
    return params


# ---------------------------------------------------------------------------
# Pure-JAX reference (f32 module semantics)
# ---------------------------------------------------------------------------
def mapformer_reference(x_nchw, params, patch_size):
    P = patch_size
    E = params["pe_w"].shape[0]
    C = params["pe_w"].shape[1]
    patches = _extract_patches(x_nchw, P)
    w = params["pe_w"].reshape(E, C * P * P)
    x = jnp.einsum("btk,ek->bte", patches, w) + params["pe_b"]
    for blk in params["blocks"]:
        mu = x.mean(-1, keepdims=True)
        var = ((x - mu) ** 2).mean(-1, keepdims=True)
        y = (x - mu) / jnp.sqrt(var + EPS)
        s = jnp.einsum("td,bkd->btk", blk["q"], y) + blk["ab"]
        a = jax.nn.softmax(s, axis=-1)
        y = jnp.einsum("btk,bkd->btd", a, y)
        x = x + y
        mu = x.mean(-1, keepdims=True)
        var = ((x - mu) ** 2).mean(-1, keepdims=True)
        z = (x - mu) / jnp.sqrt(var + EPS)
        h = jnp.einsum("btc,thc->bth", z, blk["w1"]) + blk["b1"]
        h = _gelu_exact(h)
        o = jnp.einsum("bth,tdh->btd", h, blk["w2"]) + blk["b2"]
        x = x + o
    t = jnp.einsum("btd,kd->btk", x, params["head_w2"])
    out = jnp.sum(t * params["head_w1"].T[None], axis=1) + params["head_b"]
    return out


if __name__ == "__main__":
    # Small config: img 16x16, patch 8 -> 2x2 grid of tokens (T=4, padded to 8).
    img_size, patch_size, in_chans = 16, 8, 3
    embed_dim, depth, mlp_ratio, num_classes = 32, 2, 1 / 8.0, 10
    batch, batch_block = 16, 8      # two batch blocks -> both cores get work

    key = jax.random.PRNGKey(0)
    kx, kp = jax.random.split(key)
    x = jax.random.normal(kx, (batch, in_chans, img_size, img_size), jnp.float32)
    params = init_params(kp, img_size=img_size, patch_size=patch_size,
                         in_chans=in_chans, embed_dim=embed_dim, depth=depth,
                         mlp_ratio=mlp_ratio, num_classes=num_classes)

    fwd = jax.jit(lambda xx, pp: mapformer_forward(xx, pp, patch_size,
                                                   batch_block=batch_block))
    out = jax.block_until_ready(fwd(x, params))
    assert out.shape == (batch, num_classes)

    # Reference runs in f32 but with the same bf16-rounded weights the kernel
    # streams, so the check isolates the kernel's own numerics.  The remaining
    # difference is bf16 rounding of the MXU activation operands -> 2e-2 tol.
    q16 = lambda a: a.astype(jnp.bfloat16).astype(jnp.float32)
    ref_params = dict(params)
    ref_params["head_w2"] = q16(params["head_w2"])
    ref_params["blocks"] = [dict(blk, q=q16(blk["q"]), w1=q16(blk["w1"]),
                                 w2=q16(blk["w2"]))
                            for blk in params["blocks"]]
    ref = jax.block_until_ready(mapformer_reference(x, ref_params, patch_size))
    np.testing.assert_allclose(np.asarray(out), np.asarray(ref),
                               rtol=2e-2, atol=2e-2)

    print("KERNEL_OK")
</pallas_src>

<mosaic_0001>
module attributes {stable_mosaic.version = 11 : i64} {
  func.func @_mapformer_kernel(%arg0: i32, %arg1: i32, %arg2: memref<8x8x192xf32, #tpu.memory_space<vmem>>, %arg3: memref<32x192xf32, #tpu.memory_space<vmem>>, %arg4: memref<1x32xf32, #tpu.memory_space<vmem>>, %arg5: memref<1x8x32xbf16, #tpu.memory_space<vmem>>, %arg6: memref<1x8x8xf32, #tpu.memory_space<vmem>>, %arg7: memref<1x8x4x32xbf16, #tpu.memory_space<vmem>>, %arg8: memref<1x8x1x4xf32, #tpu.memory_space<vmem>>, %arg9: memref<1x8x32x4xbf16, #tpu.memory_space<vmem>>, %arg10: memref<1x8x1x32xf32, #tpu.memory_space<vmem>>, %arg11: memref<128x32xbf16, #tpu.memory_space<vmem>>, %arg12: memref<8x128xf32, #tpu.memory_space<vmem>>, %arg13: memref<1x128xf32, #tpu.memory_space<vmem>>, %arg14: memref<8x128xf32, #tpu.memory_space<vmem>>, %arg15: memref<8x8x32xf32, #tpu.memory_space<vmem>>, %arg16: memref<8x8x32xf32, #tpu.memory_space<vmem>>, %arg17: memref<8x8x32xf32, #tpu.memory_space<vmem>>) attributes {dimension_semantics = [#tpu.dimension_semantics<parallel>, #tpu.dimension_semantics<arbitrary>], iteration_bounds = array<i64: 2, 2>, scalar_prefetch = 0 : i64, scratch_operands = 3 : i64, tpu.core_type = #tpu.core_type<tc>, window_params = [{transform_indices = @transform_0, window_bounds = array<i64: 8, 8, 192>}, {pipeline_mode = #tpu.pipeline_mode<synchronous>, transform_indices = @transform_1, window_bounds = array<i64: 32, 192>}, {pipeline_mode = #tpu.pipeline_mode<synchronous>, transform_indices = @transform_2, window_bounds = array<i64: 1, 32>}, {transform_indices = @transform_3, window_bounds = array<i64: 1, 8, 32>}, {transform_indices = @transform_4, window_bounds = array<i64: 1, 8, 8>}, {transform_indices = @transform_5, window_bounds = array<i64: 1, 8, 4, 32>}, {transform_indices = @transform_6, window_bounds = array<i64: 1, 8, 1, 4>}, {transform_indices = @transform_7, window_bounds = array<i64: 1, 8, 32, 4>}, {transform_indices = @transform_8, window_bounds = array<i64: 1, 8, 1, 32>}, {pipeline_mode = #tpu.pipeline_mode<synchronous>, transform_indices = @transform_9, window_bounds = array<i64: 128, 32>}, {pipeline_mode = #tpu.pipeline_mode<synchronous>, transform_indices = @transform_10, window_bounds = array<i64: 8, 128>}, {pipeline_mode = #tpu.pipeline_mode<synchronous>, transform_indices = @transform_11, window_bounds = array<i64: 1, 128>}, {transform_indices = @transform_12, window_bounds = array<i64: 8, 128>}]} {
    %c0_i32 = arith.constant 0 : i32
    %0 = arith.cmpi eq, %arg1, %c0_i32 : i32
    %1 = arith.extui %0 : i1 to i32
    %c0_i32_0 = arith.constant 0 : i32
    %2 = arith.cmpi ne, %1, %c0_i32_0 : i32
    scf.if %2 {
      %c0_116 = arith.constant 0 : index
      %c0_117 = arith.constant 0 : index
      %c0_118 = arith.constant 0 : index
      %194 = vector.load %arg2[%c0_116, %c0_117, %c0_118] : memref<8x8x192xf32, #tpu.memory_space<vmem>>, vector<8x8x192xf32>
      %195 = vector.shape_cast %194 : vector<8x8x192xf32> to vector<64x192xf32>
      %c0_119 = arith.constant 0 : index
      %c0_120 = arith.constant 0 : index
      %196 = vector.load %arg3[%c0_119, %c0_120] : memref<32x192xf32, #tpu.memory_space<vmem>>, vector<32x192xf32>
      %cst_121 = arith.constant dense<0.000000e+00> : vector<64x32xf32>
      %197 = tpu.matmul %195, %196, %cst_121 {dimension_numbers = #tpu.dot_dimension_numbers<[1], [1], [0], [0], [0, 0, 1, 0], [], []>} : vector<64x192xf32>, vector<32x192xf32>, vector<64x32xf32> -> vector<64x32xf32>
      %198 = vector.shape_cast %197 : vector<64x32xf32> to vector<8x8x32xf32>
      %c0_122 = arith.constant 0 : index
      %c0_123 = arith.constant 0 : index
      %199 = vector.load %arg4[%c0_122, %c0_123] : memref<1x32xf32, #tpu.memory_space<vmem>>, vector<1x32xf32>
      %200 = vector.shape_cast %199 : vector<1x32xf32> to vector<1x1x32xf32>
      %201 = vector.broadcast %200 : vector<1x1x32xf32> to vector<8x8x32xf32>
      %202 = arith.addf %198, %201 : vector<8x8x32xf32>
      %c0_124 = arith.constant 0 : index
      %c0_125 = arith.constant 0 : index
      %c0_126 = arith.constant 0 : index
      %203 = vector.load %arg15[%c0_124, %c0_125, %c0_126] : memref<8x8x32xf32, #tpu.memory_space<vmem>>, vector<8x8x32xf32>
      tpu.vector_store %arg15[%c0_124, %c0_125, %c0_126], %202 {strides = array<i32>} : memref<8x8x32xf32, #tpu.memory_space<vmem>>, vector<8x8x32xf32>,
    } else {
    }
    %c0 = arith.constant 0 : index
    %c0_1 = arith.constant 0 : index
    %c0_2 = arith.constant 0 : index
    %3 = vector.load %arg15[%c0, %c0_1, %c0_2] : memref<8x8x32xf32, #tpu.memory_space<vmem>>, vector<8x8x32xf32>
    %cst = arith.constant dense<0.000000e+00> : vector<8x8xf32>
    %4 = vector.multi_reduction <add>, %3, %cst [2] : vector<8x8x32xf32> to vector<8x8xf32>
    %5 = vector.shape_cast %4 : vector<8x8xf32> to vector<8x8x1xf32>
    %cst_3 = arith.constant 3.200000e+01 : f32
    %6 = vector.broadcast %cst_3 : f32 to vector<8x8x1xf32>
    %7 = arith.divf %5, %6 : vector<8x8x1xf32>
    %8 = vector.broadcast %7 : vector<8x8x1xf32> to vector<8x8x32xf32>
    %9 = arith.subf %3, %8 : vector<8x8x32xf32>
    %10 = arith.mulf %9, %9 : vector<8x8x32xf32>
    %cst_4 = arith.constant dense<0.000000e+00> : vector<8x8xf32>
    %11 = vector.multi_reduction <add>, %10, %cst_4 [2] : vector<8x8x32xf32> to vector<8x8xf32>
    %12 = vector.shape_cast %11 : vector<8x8xf32> to vector<8x8x1xf32>
    %cst_5 = arith.constant 3.200000e+01 : f32
    %13 = vector.broadcast %cst_5 : f32 to vector<8x8x1xf32>
    %14 = arith.divf %12, %13 : vector<8x8x1xf32>
    %cst_6 = arith.constant 9.99999974E-6 : f32
    %15 = vector.broadcast %cst_6 : f32 to vector<8x8x1xf32>
    %16 = arith.addf %14, %15 : vector<8x8x1xf32>
    %17 = math.rsqrt %16 : vector<8x8x1xf32>
    %18 = vector.broadcast %17 : vector<8x8x1xf32> to vector<8x8x32xf32>
    %19 = arith.mulf %9, %18 : vector<8x8x32xf32>
    %20 = arith.truncf %19 : vector<8x8x32xf32> to vector<8x8x32xbf16>
    %c0_7 = arith.constant 0 : index
    %c0_8 = arith.constant 0 : index
    %c0_9 = arith.constant 0 : index
    %21 = vector.load %arg5[%c0_7, %c0_8, %c0_9] : memref<1x8x32xbf16, #tpu.memory_space<vmem>>, vector<1x8x32xbf16>
    %22 = vector.shape_cast %21 : vector<1x8x32xbf16> to vector<8x32xbf16>
    %23 = vector.shape_cast %22 : vector<8x32xbf16> to vector<1x8x32xbf16>
    %24 = vector.broadcast %23 : vector<1x8x32xbf16> to vector<8x8x32xbf16>
    "tpu.trace_start"() <{level = 10 : i32, message = "bqd,bkd->bqk"}> : () -> ()
    %cst_10 = arith.constant dense<0.000000e+00> : vector<8x8x8xf32>
    %25 = tpu.matmul %24, %20, %cst_10 {dimension_numbers = #tpu.dot_dimension_numbers<[2], [2], [1], [1], [0, 0, 0, 1, 1, 1], [0], [0]>} : vector<8x8x32xbf16>, vector<8x8x32xbf16>, vector<8x8x8xf32> -> vector<8x8x8xf32>
    "tpu.trace_stop"() : () -> ()
    %c0_11 = arith.constant 0 : index
    %c0_12 = arith.constant 0 : index
    %c0_13 = arith.constant 0 : index
    %26 = vector.load %arg6[%c0_11, %c0_12, %c0_13] : memref<1x8x8xf32, #tpu.memory_space<vmem>>, vector<1x8x8xf32>
    %27 = vector.shape_cast %26 : vector<1x8x8xf32> to vector<8x8xf32>
    %28 = vector.shape_cast %27 : vector<8x8xf32> to vector<1x8x8xf32>
    %29 = vector.broadcast %28 : vector<1x8x8xf32> to vector<8x8x8xf32>
    %30 = arith.addf %25, %29 : vector<8x8x8xf32>
    %cst_14 = arith.constant dense<0xFF800000> : vector<8x8xf32>
    %31 = vector.multi_reduction <maximumf>, %30, %cst_14 [2] : vector<8x8x8xf32> to vector<8x8xf32>
    %32 = vector.shape_cast %31 : vector<8x8xf32> to vector<8x8x1xf32>
    %33 = vector.broadcast %32 : vector<8x8x1xf32> to vector<8x8x8xf32>
    %34 = arith.subf %30, %33 : vector<8x8x8xf32>
    %35 = math.exp %34 : vector<8x8x8xf32>
    %cst_15 = arith.constant dense<0.000000e+00> : vector<8x8xf32>
    %36 = vector.multi_reduction <add>, %35, %cst_15 [2] : vector<8x8x8xf32> to vector<8x8xf32>
    %37 = vector.shape_cast %36 : vector<8x8xf32> to vector<8x8x1xf32>
    %38 = arith.truncf %35 : vector<8x8x8xf32> to vector<8x8x8xbf16>
    "tpu.trace_start"() <{level = 10 : i32, message = "bqk,bkd->bqd"}> : () -> ()
    %cst_16 = arith.constant dense<0.000000e+00> : vector<8x8x32xf32>
    %39 = tpu.matmul %38, %20, %cst_16 {dimension_numbers = #tpu.dot_dimension_numbers<[2], [1], [1], [2], [0, 0, 0, 1, 1, 2], [0], [0]>} : vector<8x8x8xbf16>, vector<8x8x32xbf16>, vector<8x8x32xf32> -> vector<8x8x32xf32>
    "tpu.trace_stop"() : () -> ()
    %cst_17 = arith.constant 1.000000e+00 : f32
    %40 = vector.broadcast %cst_17 : f32 to vector<8x8x1xf32>
    %41 = arith.divf %40, %37 : vector<8x8x1xf32>
    %42 = vector.broadcast %41 : vector<8x8x1xf32> to vector<8x8x32xf32>
    %43 = arith.mulf %39, %42 : vector<8x8x32xf32>
    %44 = arith.addf %3, %43 : vector<8x8x32xf32>
    %cst_18 = arith.constant dense<0.000000e+00> : vector<8x8xf32>
    %45 = vector.multi_reduction <add>, %44, %cst_18 [2] : vector<8x8x32xf32> to vector<8x8xf32>
    %46 = vector.shape_cast %45 : vector<8x8xf32> to vector<8x8x1xf32>
    %cst_19 = arith.constant 3.200000e+01 : f32
    %47 = vector.broadcast %cst_19 : f32 to vector<8x8x1xf32>
    %48 = arith.divf %46, %47 : vector<8x8x1xf32>
    %49 = vector.broadcast %48 : vector<8x8x1xf32> to vector<8x8x32xf32>
    %50 = arith.subf %44, %49 : vector<8x8x32xf32>
    %51 = arith.mulf %50, %50 : vector<8x8x32xf32>
    %cst_20 = arith.constant dense<0.000000e+00> : vector<8x8xf32>
    %52 = vector.multi_reduction <add>, %51, %cst_20 [2] : vector<8x8x32xf32> to vector<8x8xf32>
    %53 = vector.shape_cast %52 : vector<8x8xf32> to vector<8x8x1xf32>
    %cst_21 = arith.constant 3.200000e+01 : f32
    %54 = vector.broadcast %cst_21 : f32 to vector<8x8x1xf32>
    %55 = arith.divf %53, %54 : vector<8x8x1xf32>
    %cst_22 = arith.constant 9.99999974E-6 : f32
    %56 = vector.broadcast %cst_22 : f32 to vector<8x8x1xf32>
    %57 = arith.addf %55, %56 : vector<8x8x1xf32>
    %58 = math.rsqrt %57 : vector<8x8x1xf32>
    %59 = vector.broadcast %58 : vector<8x8x1xf32> to vector<8x8x32xf32>
    %60 = arith.mulf %50, %59 : vector<8x8x32xf32>
    %61 = vector.extract_strided_slice %60 {offsets = [0, 0, 0], sizes = [1, 8, 32], strides = [1, 1, 1]} : vector<8x8x32xf32> to vector<1x8x32xf32>
    %62 = vector.shape_cast %61 : vector<1x8x32xf32> to vector<8x32xf32>
    %c0_23 = arith.constant 0 : index
    %c0_24 = arith.constant 0 : index
    %c0_25 = arith.constant 0 : index
    %63 = vector.load %arg16[%c0_23, %c0_24, %c0_25] : memref<8x8x32xf32, #tpu.memory_space<vmem>>, vector<8x1x32xf32>
    %64 = vector.shape_cast %63 : vector<8x1x32xf32> to vector<8x32xf32>
    %65 = vector.shape_cast %62 : vector<8x32xf32> to vector<8x1x32xf32>
    tpu.vector_store %arg16[%c0_23, %c0_24, %c0_25], %65 {strides = array<i32>} : memref<8x8x32xf32, #tpu.memory_space<vmem>>, vector<8x1x32xf32>,
    %66 = vector.extract_strided_slice %60 {offsets = [1, 0, 0], sizes = [1, 8, 32], strides = [1, 1, 1]} : vector<8x8x32xf32> to vector<1x8x32xf32>
    %67 = vector.shape_cast %66 : vector<1x8x32xf32> to vector<8x32xf32>
    %c0_26 = arith.constant 0 : index
    %c1 = arith.constant 1 : index
    %c0_27 = arith.constant 0 : index
    %68 = vector.load %arg16[%c0_26, %c1, %c0_27] : memref<8x8x32xf32, #tpu.memory_space<vmem>>, vector<8x1x32xf32>
    %69 = vector.shape_cast %68 : vector<8x1x32xf32> to vector<8x32xf32>
    %70 = vector.shape_cast %67 : vector<8x32xf32> to vector<8x1x32xf32>
    tpu.vector_store %arg16[%c0_26, %c1, %c0_27], %70 {strides = array<i32>} : memref<8x8x32xf32, #tpu.memory_space<vmem>>, vector<8x1x32xf32>,
    %71 = vector.extract_strided_slice %60 {offsets = [2, 0, 0], sizes = [1, 8, 32], strides = [1, 1, 1]} : vector<8x8x32xf32> to vector<1x8x32xf32>
    %72 = vector.shape_cast %71 : vector<1x8x32xf32> to vector<8x32xf32>
    %c0_28 = arith.constant 0 : index
    %c2 = arith.constant 2 : index
    %c0_29 = arith.constant 0 : index
    %73 = vector.load %arg16[%c0_28, %c2, %c0_29] : memref<8x8x32xf32, #tpu.memory_space<vmem>>, vector<8x1x32xf32>
    %74 = vector.shape_cast %73 : vector<8x1x32xf32> to vector<8x32xf32>
    %75 = vector.shape_cast %72 : vector<8x32xf32> to vector<8x1x32xf32>
    tpu.vector_store %arg16[%c0_28, %c2, %c0_29], %75 {strides = array<i32>} : memref<8x8x32xf32, #tpu.memory_space<vmem>>, vector<8x1x32xf32>,
    %76 = vector.extract_strided_slice %60 {offsets = [3, 0, 0], sizes = [1, 8, 32], strides = [1, 1, 1]} : vector<8x8x32xf32> to vector<1x8x32xf32>
    %77 = vector.shape_cast %76 : vector<1x8x32xf32> to vector<8x32xf32>
    %c0_30 = arith.constant 0 : index
    %c3 = arith.constant 3 : index
    %c0_31 = arith.constant 0 : index
    %78 = vector.load %arg16[%c0_30, %c3, %c0_31] : memref<8x8x32xf32, #tpu.memory_space<vmem>>, vector<8x1x32xf32>
    %79 = vector.shape_cast %78 : vector<8x1x32xf32> to vector<8x32xf32>
    %80 = vector.shape_cast %77 : vector<8x32xf32> to vector<8x1x32xf32>
    tpu.vector_store %arg16[%c0_30, %c3, %c0_31], %80 {strides = array<i32>} : memref<8x8x32xf32, #tpu.memory_space<vmem>>, vector<8x1x32xf32>,
    %81 = vector.extract_strided_slice %60 {offsets = [4, 0, 0], sizes = [1, 8, 32], strides = [1, 1, 1]} : vector<8x8x32xf32> to vector<1x8x32xf32>
    %82 = vector.shape_cast %81 : vector<1x8x32xf32> to vector<8x32xf32>
    %c0_32 = arith.constant 0 : index
    %c4 = arith.constant 4 : index
    %c0_33 = arith.constant 0 : index
    %83 = vector.load %arg16[%c0_32, %c4, %c0_33] : memref<8x8x32xf32, #tpu.memory_space<vmem>>, vector<8x1x32xf32>
    %84 = vector.shape_cast %83 : vector<8x1x32xf32> to vector<8x32xf32>
    %85 = vector.shape_cast %82 : vector<8x32xf32> to vector<8x1x32xf32>
    tpu.vector_store %arg16[%c0_32, %c4, %c0_33], %85 {strides = array<i32>} : memref<8x8x32xf32, #tpu.memory_space<vmem>>, vector<8x1x32xf32>,
    %86 = vector.extract_strided_slice %60 {offsets = [5, 0, 0], sizes = [1, 8, 32], strides = [1, 1, 1]} : vector<8x8x32xf32> to vector<1x8x32xf32>
    %87 = vector.shape_cast %86 : vector<1x8x32xf32> to vector<8x32xf32>
    %c0_34 = arith.constant 0 : index
    %c5 = arith.constant 5 : index
    %c0_35 = arith.constant 0 : index
    %88 = vector.load %arg16[%c0_34, %c5, %c0_35] : memref<8x8x32xf32, #tpu.memory_space<vmem>>, vector<8x1x32xf32>
    %89 = vector.shape_cast %88 : vector<8x1x32xf32> to vector<8x32xf32>
    %90 = vector.shape_cast %87 : vector<8x32xf32> to vector<8x1x32xf32>
    tpu.vector_store %arg16[%c0_34, %c5, %c0_35], %90 {strides = array<i32>} : memref<8x8x32xf32, #tpu.memory_space<vmem>>, vector<8x1x32xf32>,
    %91 = vector.extract_strided_slice %60 {offsets = [6, 0, 0], sizes = [1, 8, 32], strides = [1, 1, 1]} : vector<8x8x32xf32> to vector<1x8x32xf32>
    %92 = vector.shape_cast %91 : vector<1x8x32xf32> to vector<8x32xf32>
    %c0_36 = arith.constant 0 : index
    %c6 = arith.constant 6 : index
    %c0_37 = arith.constant 0 : index
    %93 = vector.load %arg16[%c0_36, %c6, %c0_37] : memref<8x8x32xf32, #tpu.memory_space<vmem>>, vector<8x1x32xf32>
    %94 = vector.shape_cast %93 : vector<8x1x32xf32> to vector<8x32xf32>
    %95 = vector.shape_cast %92 : vector<8x32xf32> to vector<8x1x32xf32>
    tpu.vector_store %arg16[%c0_36, %c6, %c0_37], %95 {strides = array<i32>} : memref<8x8x32xf32, #tpu.memory_space<vmem>>, vector<8x1x32xf32>,
    %96 = vector.extract_strided_slice %60 {offsets = [7, 0, 0], sizes = [1, 8, 32], strides = [1, 1, 1]} : vector<8x8x32xf32> to vector<1x8x32xf32>
    %97 = vector.shape_cast %96 : vector<1x8x32xf32> to vector<8x32xf32>
    %c0_38 = arith.constant 0 : index
    %c7 = arith.constant 7 : index
    %c0_39 = arith.constant 0 : index
    %98 = vector.load %arg16[%c0_38, %c7, %c0_39] : memref<8x8x32xf32, #tpu.memory_space<vmem>>, vector<8x1x32xf32>
    %99 = vector.shape_cast %98 : vector<8x1x32xf32> to vector<8x32xf32>
    %100 = vector.shape_cast %97 : vector<8x32xf32> to vector<8x1x32xf32>
    tpu.vector_store %arg16[%c0_38, %c7, %c0_39], %100 {strides = array<i32>} : memref<8x8x32xf32, #tpu.memory_space<vmem>>, vector<8x1x32xf32>,
    %c0_40 = arith.constant 0 : index
    %c0_41 = arith.constant 0 : index
    %c0_42 = arith.constant 0 : index
    %101 = vector.load %arg16[%c0_40, %c0_41, %c0_42] : memref<8x8x32xf32, #tpu.memory_space<vmem>>, vector<8x8x32xf32>
    %102 = arith.truncf %101 : vector<8x8x32xf32> to vector<8x8x32xbf16>
    %c0_43 = arith.constant 0 : index
    %c0_44 = arith.constant 0 : index
    %c0_45 = arith.constant 0 : index
    %c0_46 = arith.constant 0 : index
    %103 = vector.load %arg7[%c0_43, %c0_44, %c0_45, %c0_46] : memref<1x8x4x32xbf16, #tpu.memory_space<vmem>>, vector<1x8x4x32xbf16>
    %104 = vector.shape_cast %103 : vector<1x8x4x32xbf16> to vector<8x4x32xbf16>
    %cst_47 = arith.constant dense<0.000000e+00> : vector<8x8x4xf32>
    %105 = tpu.matmul %102, %104, %cst_47 {dimension_numbers = #tpu.dot_dimension_numbers<[2], [2], [1], [1], [0, 0, 0, 1, 1, 1], [0], [0]>} : vector<8x8x32xbf16>, vector<8x4x32xbf16>, vector<8x8x4xf32> -> vector<8x8x4xf32>
    %c0_48 = arith.constant 0 : index
    %c0_49 = arith.constant 0 : index
    %c0_50 = arith.constant 0 : index
    %c0_51 = arith.constant 0 : index
    %106 = vector.load %arg8[%c0_48, %c0_49, %c0_50, %c0_51] : memref<1x8x1x4xf32, #tpu.memory_space<vmem>>, vector<1x8x1x4xf32>
    %107 = vector.shape_cast %106 : vector<1x8x1x4xf32> to vector<8x1x4xf32>
    %108 = vector.broadcast %107 : vector<8x1x4xf32> to vector<8x8x4xf32>
    %109 = arith.addf %105, %108 : vector<8x8x4xf32>
    %cst_52 = arith.constant 5.000000e-01 : f32
    %110 = vector.broadcast %cst_52 : f32 to vector<8x8x4xf32>
    %111 = arith.mulf %110, %109 : vector<8x8x4xf32>
    %cst_53 = arith.constant 0.707106769 : f32
    %112 = vector.broadcast %cst_53 : f32 to vector<8x8x4xf32>
    %113 = arith.mulf %109, %112 : vector<8x8x4xf32>
    %114 = math.erf %113 : vector<8x8x4xf32>
    %cst_54 = arith.constant 1.000000e+00 : f32
    %115 = vector.broadcast %cst_54 : f32 to vector<8x8x4xf32>
    %116 = arith.addf %115, %114 : vector<8x8x4xf32>
    %117 = arith.mulf %111, %116 : vector<8x8x4xf32>
    %118 = arith.truncf %117 : vector<8x8x4xf32> to vector<8x8x4xbf16>
    %c0_55 = arith.constant 0 : index
    %c0_56 = arith.constant 0 : index
    %c0_57 = arith.constant 0 : index
    %c0_58 = arith.constant 0 : index
    %119 = vector.load %arg9[%c0_55, %c0_56, %c0_57, %c0_58] : memref<1x8x32x4xbf16, #tpu.memory_space<vmem>>, vector<1x8x32x4xbf16>
    %120 = vector.shape_cast %119 : vector<1x8x32x4xbf16> to vector<8x32x4xbf16>
    %cst_59 = arith.constant dense<0.000000e+00> : vector<8x8x32xf32>
    %121 = tpu.matmul %118, %120, %cst_59 {dimension_numbers = #tpu.dot_dimension_numbers<[2], [2], [1], [1], [0, 0, 0, 1, 1, 1], [0], [0]>} : vector<8x8x4xbf16>, vector<8x32x4xbf16>, vector<8x8x32xf32> -> vector<8x8x32xf32>
    %c0_60 = arith.constant 0 : index
    %c0_61 = arith.constant 0 : index
    %c0_62 = arith.constant 0 : index
    %c0_63 = arith.constant 0 : index
    %122 = vector.load %arg10[%c0_60, %c0_61, %c0_62, %c0_63] : memref<1x8x1x32xf32, #tpu.memory_space<vmem>>, vector<1x8x1x32xf32>
    %123 = vector.shape_cast %122 : vector<1x8x1x32xf32> to vector<8x1x32xf32>
    %124 = vector.broadcast %123 : vector<8x1x32xf32> to vector<8x8x32xf32>
    %125 = arith.addf %121, %124 : vector<8x8x32xf32>
    %c0_64 = arith.constant 0 : index
    %c0_65 = arith.constant 0 : index
    %c0_66 = arith.constant 0 : index
    %126 = vector.load %arg17[%c0_64, %c0_65, %c0_66] : memref<8x8x32xf32, #tpu.memory_space<vmem>>, vector<8x8x32xf32>
    tpu.vector_store %arg17[%c0_64, %c0_65, %c0_66], %125 {strides = array<i32>} : memref<8x8x32xf32, #tpu.memory_space<vmem>>, vector<8x8x32xf32>,
    %127 = vector.extract_strided_slice %44 {offsets = [0, 0, 0], sizes = [1, 8, 32], strides = [1, 1, 1]} : vector<8x8x32xf32> to vector<1x8x32xf32>
    %128 = vector.shape_cast %127 : vector<1x8x32xf32> to vector<8x32xf32>
    %c0_67 = arith.constant 0 : index
    %c0_68 = arith.constant 0 : index
    %c0_69 = arith.constant 0 : index
    %129 = vector.load %arg17[%c0_67, %c0_68, %c0_69] : memref<8x8x32xf32, #tpu.memory_space<vmem>>, vector<8x1x32xf32>
    %130 = vector.shape_cast %129 : vector<8x1x32xf32> to vector<8x32xf32>
    %131 = arith.addf %128, %130 : vector<8x32xf32>
    %c0_70 = arith.constant 0 : index
    %c0_71 = arith.constant 0 : index
    %c0_72 = arith.constant 0 : index
    %132 = vector.load %arg15[%c0_70, %c0_71, %c0_72] : memref<8x8x32xf32, #tpu.memory_space<vmem>>, vector<1x8x32xf32>
    %133 = vector.shape_cast %132 : vector<1x8x32xf32> to vector<8x32xf32>
    %134 = vector.shape_cast %131 : vector<8x32xf32> to vector<1x8x32xf32>
    tpu.vector_store %arg15[%c0_70, %c0_71, %c0_72], %134 {strides = array<i32>} : memref<8x8x32xf32, #tpu.memory_space<vmem>>, vector<1x8x32xf32>,
    %135 = vector.extract_strided_slice %44 {offsets = [1, 0, 0], sizes = [1, 8, 32], strides = [1, 1, 1]} : vector<8x8x32xf32> to vector<1x8x32xf32>
    %136 = vector.shape_cast %135 : vector<1x8x32xf32> to vector<8x32xf32>
    %c0_73 = arith.constant 0 : index
    %c1_74 = arith.constant 1 : index
    %c0_75 = arith.constant 0 : index
    %137 = vector.load %arg17[%c0_73, %c1_74, %c0_75] : memref<8x8x32xf32, #tpu.memory_space<vmem>>, vector<8x1x32xf32>
    %138 = vector.shape_cast %137 : vector<8x1x32xf32> to vector<8x32xf32>
    %139 = arith.addf %136, %138 : vector<8x32xf32>
    %c1_76 = arith.constant 1 : index
    %c0_77 = arith.constant 0 : index
    %c0_78 = arith.constant 0 : index
    %140 = vector.load %arg15[%c1_76, %c0_77, %c0_78] : memref<8x8x32xf32, #tpu.memory_space<vmem>>, vector<1x8x32xf32>
    %141 = vector.shape_cast %140 : vector<1x8x32xf32> to vector<8x32xf32>
    %142 = vector.shape_cast %139 : vector<8x32xf32> to vector<1x8x32xf32>
    tpu.vector_store %arg15[%c1_76, %c0_77, %c0_78], %142 {strides = array<i32>} : memref<8x8x32xf32, #tpu.memory_space<vmem>>, vector<1x8x32xf32>,
    %143 = vector.extract_strided_slice %44 {offsets = [2, 0, 0], sizes = [1, 8, 32], strides = [1, 1, 1]} : vector<8x8x32xf32> to vector<1x8x32xf32>
    %144 = vector.shape_cast %143 : vector<1x8x32xf32> to vector<8x32xf32>
    %c0_79 = arith.constant 0 : index
    %c2_80 = arith.constant 2 : index
    %c0_81 = arith.constant 0 : index
    %145 = vector.load %arg17[%c0_79, %c2_80, %c0_81] : memref<8x8x32xf32, #tpu.memory_space<vmem>>, vector<8x1x32xf32>
    %146 = vector.shape_cast %145 : vector<8x1x32xf32> to vector<8x32xf32>
    %147 = arith.addf %144, %146 : vector<8x32xf32>
    %c2_82 = arith.constant 2 : index
    %c0_83 = arith.constant 0 : index
    %c0_84 = arith.constant 0 : index
    %148 = vector.load %arg15[%c2_82, %c0_83, %c0_84] : memref<8x8x32xf32, #tpu.memory_space<vmem>>, vector<1x8x32xf32>
    %149 = vector.shape_cast %148 : vector<1x8x32xf32> to vector<8x32xf32>
    %150 = vector.shape_cast %147 : vector<8x32xf32> to vector<1x8x32xf32>
    tpu.vector_store %arg15[%c2_82, %c0_83, %c0_84], %150 {strides = array<i32>} : memref<8x8x32xf32, #tpu.memory_space<vmem>>, vector<1x8x32xf32>,
    %151 = vector.extract_strided_slice %44 {offsets = [3, 0, 0], sizes = [1, 8, 32], strides = [1, 1, 1]} : vector<8x8x32xf32> to vector<1x8x32xf32>
    %152 = vector.shape_cast %151 : vector<1x8x32xf32> to vector<8x32xf32>
    %c0_85 = arith.constant 0 : index
    %c3_86 = arith.constant 3 : index
    %c0_87 = arith.constant 0 : index
    %153 = vector.load %arg17[%c0_85, %c3_86, %c0_87] : memref<8x8x32xf32, #tpu.memory_space<vmem>>, vector<8x1x32xf32>
    %154 = vector.shape_cast %153 : vector<8x1x32xf32> to vector<8x32xf32>
    %155 = arith.addf %152, %154 : vector<8x32xf32>
    %c3_88 = arith.constant 3 : index
    %c0_89 = arith.constant 0 : index
    %c0_90 = arith.constant 0 : index
    %156 = vector.load %arg15[%c3_88, %c0_89, %c0_90] : memref<8x8x32xf32, #tpu.memory_space<vmem>>, vector<1x8x32xf32>
    %157 = vector.shape_cast %156 : vector<1x8x32xf32> to vector<8x32xf32>
    %158 = vector.shape_cast %155 : vector<8x32xf32> to vector<1x8x32xf32>
    tpu.vector_store %arg15[%c3_88, %c0_89, %c0_90], %158 {strides = array<i32>} : memref<8x8x32xf32, #tpu.memory_space<vmem>>, vector<1x8x32xf32>,
    %159 = vector.extract_strided_slice %44 {offsets = [4, 0, 0], sizes = [1, 8, 32], strides = [1, 1, 1]} : vector<8x8x32xf32> to vector<1x8x32xf32>
    %160 = vector.shape_cast %159 : vector<1x8x32xf32> to vector<8x32xf32>
    %c0_91 = arith.constant 0 : index
    %c4_92 = arith.constant 4 : index
    %c0_93 = arith.constant 0 : index
    %161 = vector.load %arg17[%c0_91, %c4_92, %c0_93] : memref<8x8x32xf32, #tpu.memory_space<vmem>>, vector<8x1x32xf32>
    %162 = vector.shape_cast %161 : vector<8x1x32xf32> to vector<8x32xf32>
    %163 = arith.addf %160, %162 : vector<8x32xf32>
    %c4_94 = arith.constant 4 : index
    %c0_95 = arith.constant 0 : index
    %c0_96 = arith.constant 0 : index
    %164 = vector.load %arg15[%c4_94, %c0_95, %c0_96] : memref<8x8x32xf32, #tpu.memory_space<vmem>>, vector<1x8x32xf32>
    %165 = vector.shape_cast %164 : vector<1x8x32xf32> to vector<8x32xf32>
    %166 = vector.shape_cast %163 : vector<8x32xf32> to vector<1x8x32xf32>
    tpu.vector_store %arg15[%c4_94, %c0_95, %c0_96], %166 {strides = array<i32>} : memref<8x8x32xf32, #tpu.memory_space<vmem>>, vector<1x8x32xf32>,
    %167 = vector.extract_strided_slice %44 {offsets = [5, 0, 0], sizes = [1, 8, 32], strides = [1, 1, 1]} : vector<8x8x32xf32> to vector<1x8x32xf32>
    %168 = vector.shape_cast %167 : vector<1x8x32xf32> to vector<8x32xf32>
    %c0_97 = arith.constant 0 : index
    %c5_98 = arith.constant 5 : index
    %c0_99 = arith.constant 0 : index
    %169 = vector.load %arg17[%c0_97, %c5_98, %c0_99] : memref<8x8x32xf32, #tpu.memory_space<vmem>>, vector<8x1x32xf32>
    %170 = vector.shape_cast %169 : vector<8x1x32xf32> to vector<8x32xf32>
    %171 = arith.addf %168, %170 : vector<8x32xf32>
    %c5_100 = arith.constant 5 : index
    %c0_101 = arith.constant 0 : index
    %c0_102 = arith.constant 0 : index
    %172 = vector.load %arg15[%c5_100, %c0_101, %c0_102] : memref<8x8x32xf32, #tpu.memory_space<vmem>>, vector<1x8x32xf32>
    %173 = vector.shape_cast %172 : vector<1x8x32xf32> to vector<8x32xf32>
    %174 = vector.shape_cast %171 : vector<8x32xf32> to vector<1x8x32xf32>
    tpu.vector_store %arg15[%c5_100, %c0_101, %c0_102], %174 {strides = array<i32>} : memref<8x8x32xf32, #tpu.memory_space<vmem>>, vector<1x8x32xf32>,
    %175 = vector.extract_strided_slice %44 {offsets = [6, 0, 0], sizes = [1, 8, 32], strides = [1, 1, 1]} : vector<8x8x32xf32> to vector<1x8x32xf32>
    %176 = vector.shape_cast %175 : vector<1x8x32xf32> to vector<8x32xf32>
    %c0_103 = arith.constant 0 : index
    %c6_104 = arith.constant 6 : index
    %c0_105 = arith.constant 0 : index
    %177 = vector.load %arg17[%c0_103, %c6_104, %c0_105] : memref<8x8x32xf32, #tpu.memory_space<vmem>>, vector<8x1x32xf32>
    %178 = vector.shape_cast %177 : vector<8x1x32xf32> to vector<8x32xf32>
    %179 = arith.addf %176, %178 : vector<8x32xf32>
    %c6_106 = arith.constant 6 : index
    %c0_107 = arith.constant 0 : index
    %c0_108 = arith.constant 0 : index
    %180 = vector.load %arg15[%c6_106, %c0_107, %c0_108] : memref<8x8x32xf32, #tpu.memory_space<vmem>>, vector<1x8x32xf32>
    %181 = vector.shape_cast %180 : vector<1x8x32xf32> to vector<8x32xf32>
    %182 = vector.shape_cast %179 : vector<8x32xf32> to vector<1x8x32xf32>
    tpu.vector_store %arg15[%c6_106, %c0_107, %c0_108], %182 {strides = array<i32>} : memref<8x8x32xf32, #tpu.memory_space<vmem>>, vector<1x8x32xf32>,
    %183 = vector.extract_strided_slice %44 {offsets = [7, 0, 0], sizes = [1, 8, 32], strides = [1, 1, 1]} : vector<8x8x32xf32> to vector<1x8x32xf32>
    %184 = vector.shape_cast %183 : vector<1x8x32xf32> to vector<8x32xf32>
    %c0_109 = arith.constant 0 : index
    %c7_110 = arith.constant 7 : index
    %c0_111 = arith.constant 0 : index
    %185 = vector.load %arg17[%c0_109, %c7_110, %c0_111] : memref<8x8x32xf32, #tpu.memory_space<vmem>>, vector<8x1x32xf32>
    %186 = vector.shape_cast %185 : vector<8x1x32xf32> to vector<8x32xf32>
    %187 = arith.addf %184, %186 : vector<8x32xf32>
    %c7_112 = arith.constant 7 : index
    %c0_113 = arith.constant 0 : index
    %c0_114 = arith.constant 0 : index
    %188 = vector.load %arg15[%c7_112, %c0_113, %c0_114] : memref<8x8x32xf32, #tpu.memory_space<vmem>>, vector<1x8x32xf32>
    %189 = vector.shape_cast %188 : vector<1x8x32xf32> to vector<8x32xf32>
    %190 = vector.shape_cast %187 : vector<8x32xf32> to vector<1x8x32xf32>
    tpu.vector_store %arg15[%c7_112, %c0_113, %c0_114], %190 {strides = array<i32>} : memref<8x8x32xf32, #tpu.memory_space<vmem>>, vector<1x8x32xf32>,
    %c1_i32 = arith.constant 1 : i32
    %191 = arith.cmpi eq, %arg1, %c1_i32 : i32
    %192 = arith.extui %191 : i1 to i32
    %c0_i32_115 = arith.constant 0 : i32
    %193 = arith.cmpi ne, %192, %c0_i32_115 : i32
    scf.if %193 {
      %c0_116 = arith.constant 0 : index
      %c0_117 = arith.constant 0 : index
      %c0_118 = arith.constant 0 : index
      %194 = vector.load %arg15[%c0_116, %c0_117, %c0_118] : memref<8x8x32xf32, #tpu.memory_space<vmem>>, vector<8x8x32xf32>
      %195 = vector.shape_cast %194 : vector<8x8x32xf32> to vector<64x32xf32>
      %196 = arith.truncf %195 : vector<64x32xf32> to vector<64x32xbf16>
      %c0_119 = arith.constant 0 : index
      %c0_120 = arith.constant 0 : index
      %197 = vector.load %arg11[%c0_119, %c0_120] : memref<128x32xbf16, #tpu.memory_space<vmem>>, vector<128x32xbf16>
      %cst_121 = arith.constant dense<0.000000e+00> : vector<64x128xf32>
      %198 = tpu.matmul %196, %197, %cst_121 {dimension_numbers = #tpu.dot_dimension_numbers<[1], [1], [0], [0], [0, 0, 1, 0], [], []>} : vector<64x32xbf16>, vector<128x32xbf16>, vector<64x128xf32> -> vector<64x128xf32>
      %199 = vector.shape_cast %198 : vector<64x128xf32> to vector<8x8x128xf32>
      %c0_122 = arith.constant 0 : index
      %c0_123 = arith.constant 0 : index
      %200 = vector.load %arg12[%c0_122, %c0_123] : memref<8x128xf32, #tpu.memory_space<vmem>>, vector<8x128xf32>
      %201 = vector.shape_cast %200 : vector<8x128xf32> to vector<1x8x128xf32>
      %202 = vector.broadcast %201 : vector<1x8x128xf32> to vector<8x8x128xf32>
      %203 = arith.mulf %199, %202 : vector<8x8x128xf32>
      %cst_124 = arith.constant dense<0.000000e+00> : vector<8x128xf32>
      %204 = vector.multi_reduction <add>, %203, %cst_124 [1] : vector<8x8x128xf32> to vector<8x128xf32>
      %c0_125 = arith.constant 0 : index
      %c0_126 = arith.constant 0 : index
      %205 = vector.load %arg13[%c0_125, %c0_126] : memref<1x128xf32, #tpu.memory_space<vmem>>, vector<1x128xf32>
      %206 = vector.broadcast %205 : vector<1x128xf32> to vector<8x128xf32>
      %207 = arith.addf %204, %206 : vector<8x128xf32>
      %c0_127 = arith.constant 0 : index
      %c0_128 = arith.constant 0 : index
      %208 = vector.load %arg14[%c0_127, %c0_128] : memref<8x128xf32, #tpu.memory_space<vmem>>, vector<8x128xf32>
      tpu.vector_store %arg14[%c0_127, %c0_128], %207 {strides = array<i32>} : memref<8x128xf32, #tpu.memory_space<vmem>>, vector<8x128xf32>,
    } else {
    }
    return
  }
  func.func @transform_0(%arg0: i32, %arg1: i32) -> (i32, i32, i32) {
    %c0_i32 = arith.constant 0 : i32
    %c0_i32_0 = arith.constant 0 : i32
    %c0_i32_1 = arith.constant 0 : i32
    return %arg0, %c0_i32, %c0_i32_0 : i32, i32, i32
  }
  func.func @transform_1(%arg0: i32, %arg1: i32) -> (i32, i32) {
    %c0_i32 = arith.constant 0 : i32
    %c0_i32_0 = arith.constant 0 : i32
    %c0_i32_1 = arith.constant 0 : i32
    return %c0_i32, %c0_i32_0 : i32, i32
  }
  func.func @transform_2(%arg0: i32, %arg1: i32) -> (i32, i32) {
    %c0_i32 = arith.constant 0 : i32
    %c0_i32_0 = arith.constant 0 : i32
    %c0_i32_1 = arith.constant 0 : i32
    return %c0_i32, %c0_i32_0 : i32, i32
  }
  func.func @transform_3(%arg0: i32, %arg1: i32) -> (i32, i32, i32) {
    %c0_i32 = arith.constant 0 : i32
    %c0_i32_0 = arith.constant 0 : i32
    %c0_i32_1 = arith.constant 0 : i32
    return %arg1, %c0_i32, %c0_i32_0 : i32, i32, i32
  }
  func.func @transform_4(%arg0: i32, %arg1: i32) -> (i32, i32, i32) {
    %c0_i32 = arith.constant 0 : i32
    %c0_i32_0 = arith.constant 0 : i32
    %c0_i32_1 = arith.constant 0 : i32
    return %arg1, %c0_i32, %c0_i32_0 : i32, i32, i32
  }
  func.func @transform_5(%arg0: i32, %arg1: i32) -> (i32, i32, i32, i32) {
    %c0_i32 = arith.constant 0 : i32
    %c0_i32_0 = arith.constant 0 : i32
    %c0_i32_1 = arith.constant 0 : i32
    %c0_i32_2 = arith.constant 0 : i32
    return %arg1, %c0_i32, %c0_i32_0, %c0_i32_1 : i32, i32, i32, i32
  }
  func.func @transform_6(%arg0: i32, %arg1: i32) -> (i32, i32, i32, i32) {
    %c0_i32 = arith.constant 0 : i32
    %c0_i32_0 = arith.constant 0 : i32
    %c0_i32_1 = arith.constant 0 : i32
    %c0_i32_2 = arith.constant 0 : i32
    return %arg1, %c0_i32, %c0_i32_0, %c0_i32_1 : i32, i32, i32, i32
  }
  func.func @transform_7(%arg0: i32, %arg1: i32) -> (i32, i32, i32, i32) {
    %c0_i32 = arith.constant 0 : i32
    %c0_i32_0 = arith.constant 0 : i32
    %c0_i32_1 = arith.constant 0 : i32
    %c0_i32_2 = arith.constant 0 : i32
    return %arg1, %c0_i32, %c0_i32_0, %c0_i32_1 : i32, i32, i32, i32
  }
  func.func @transform_8(%arg0: i32, %arg1: i32) -> (i32, i32, i32, i32) {
    %c0_i32 = arith.constant 0 : i32
    %c0_i32_0 = arith.constant 0 : i32
    %c0_i32_1 = arith.constant 0 : i32
    %c0_i32_2 = arith.constant 0 : i32
    return %arg1, %c0_i32, %c0_i32_0, %c0_i32_1 : i32, i32, i32, i32
  }
  func.func @transform_9(%arg0: i32, %arg1: i32) -> (i32, i32) {
    %c0_i32 = arith.constant 0 : i32
    %c0_i32_0 = arith.constant 0 : i32
    %c0_i32_1 = arith.constant 0 : i32
    return %c0_i32, %c0_i32_0 : i32, i32
  }
  func.func @transform_10(%arg0: i32, %arg1: i32) -> (i32, i32) {
    %c0_i32 = arith.constant 0 : i32
    %c0_i32_0 = arith.constant 0 : i32
    %c0_i32_1 = arith.constant 0 : i32
    return %c0_i32, %c0_i32_0 : i32, i32
  }
  func.func @transform_11(%arg0: i32, %arg1: i32) -> (i32, i32) {
    %c0_i32 = arith.constant 0 : i32
    %c0_i32_0 = arith.constant 0 : i32
    %c0_i32_1 = arith.constant 0 : i32
    return %c0_i32, %c0_i32_0 : i32, i32
  }
  func.func @transform_12(%arg0: i32, %arg1: i32) -> (i32, i32) {
    %c0_i32 = arith.constant 0 : i32
    %c0_i32_0 = arith.constant 0 : i32
    return %arg0, %c0_i32 : i32, i32
  }
}

</mosaic_0001>

<llo_original>
// kernel: _lambda_.1
$region0: #{_lambda_.1}
  #allocation0 [shape = 'u32[]', space=smem, size = 0x4, offset = 0x4, fixed_abs, tag = 'smem constant byte address 0x4 - core index']
  #allocation1 [shape = 'u32[144,128]{1,0:T(1,128)}', space=vmem, size = 0x12000, scoped, tag = 'internal scratch']
  #allocation2 [shape = 'f32[8,8,32]{2,1,0:T(8,128)}', space=vmem, size = 0x8000, scoped, tag = 'scratch operand']
  #allocation3 [shape = 'f32[8,8,32]{2,1,0:T(8,128)}', space=vmem, size = 0x8000, scoped, tag = 'scratch operand']
  #allocation4 [shape = 'f32[8,8,32]{2,1,0:T(8,128)}', space=vmem, size = 0x8000, scoped, tag = 'scratch operand']
  %s0 = inlined_call_operand.vmem [shape: f32[16,8,192], index: 0, kind: input, shape index: {}]
  %s1 = inlined_call_operand.vmem [shape: f32[32,192], index: 1, kind: input, shape index: {}]
  %s2 = inlined_call_operand.vmem [shape: f32[1,32], index: 2, kind: input, shape index: {}]
  %s3 = inlined_call_operand.vmem [shape: bf16[2,8,32], index: 3, kind: input, shape index: {}]
  %s4 = inlined_call_operand.vmem [shape: f32[2,8,8], index: 4, kind: input, shape index: {}]
  %s5 = inlined_call_operand.vmem [shape: bf16[2,8,4,32], index: 5, kind: input, shape index: {}]
  %s6 = inlined_call_operand.vmem [shape: f32[2,8,1,4], index: 6, kind: input, shape index: {}]
  %s7 = inlined_call_operand.vmem [shape: bf16[2,8,32,4], index: 7, kind: input, shape index: {}]
  %s8 = inlined_call_operand.vmem [shape: f32[2,8,1,32], index: 8, kind: input, shape index: {}]
  %s9 = inlined_call_operand.vmem [shape: bf16[128,32], index: 9, kind: input, shape index: {}]
  %s10 = inlined_call_operand.vmem [shape: f32[8,128], index: 10, kind: input, shape index: {}]
  %s11 = inlined_call_operand.vmem [shape: f32[1,128], index: 11, kind: input, shape index: {}]
  %s12 = inlined_call_operand.hbm [shape: f32[16,128], index: 12, kind: output, shape index: {}]
  %s13 = sld [smem:[#allocation0]]
  $region89: #{_lambda_.1} parent=0
    _
  %s15 = ssub.s32 1, %s13
  %s16 = scalar_select 0, %s15, %s13
  $region1: #{_lambda_.1} parent=0
    #allocation5 [shape = 'u8[8192]{0}', space=vmem, size = 0x2000, scoped, tag = 'output window, operand 0']
    #allocation6 [shape = 's32[2]{0}', space=sflag, size = 0x8, scoped, tag = 'scoped memory for _lambda_.1']
    %17 = vsyncpa [#allocation6], 0
    %s18 = scalar_lea.sflag [#allocation6], 1
    %19 = vsyncpa %s18, 0
    loop: start=0, step=1, limit=6
    $region2: #{_lambda_.1} parent=1 // loop_pre_header
      _
    $region3: #{_lambda_.1} parent=1 // loop_header
      %s21 = sphi 0, %s25
      %p22 = scmp.ge.s32.totalorder %s21, 6
      %s28 = sphi 0, %s40
      %s29 = sphi 0, %s36
      %s30 = sphi 0, %s28
      %s31 = sphi 0, %s29
      %s32 = sphi 0, %s30
      %s33 = sphi 0, %s31
      %s43 = sphi 0, %s45
      %s46 = sphi 0, %s43
      %s47 = sphi 0, %s46
      %s63 = sphi 0, %s47
      %s67 = sphi 0, %s67
      %s69 = sphi 0, %s67
      %s70 = sphi 0, %s69
      %s84 = sphi 0, %s70
      %s88 = sphi 0, %s88
      %s90 = sphi 0, %s88
      %s91 = sphi 0, %s90
      %s105 = sphi 0, %s91
      %s111 = sphi 0, %s113
      %s114 = sphi 0, %s111
      %s115 = sphi 0, %s114
      %s131 = sphi 0, %s115
      %s137 = sphi 0, %s139
      %s140 = sphi 0, %s137
      %s141 = sphi 0, %s140
      %s157 = sphi 0, %s141
      %s163 = sphi 0, %s165
      %s166 = sphi 0, %s163
      %s167 = sphi 0, %s166
      %s183 = sphi 0, %s167
      %s189 = sphi 0, %s191
      %s192 = sphi 0, %s189
      %s193 = sphi 0, %s192
      %s209 = sphi 0, %s193
      %s215 = sphi 0, %s217
      %s218 = sphi 0, %s215
      %s219 = sphi 0, %s218
      %s235 = sphi 0, %s219
      %s241 = sphi 0, %s243
      %s244 = sphi 0, %s241
      %s245 = sphi 0, %s244
      %s261 = sphi 0, %s245
      %s265 = sphi 0, %s265
      %s267 = sphi 0, %s265
      %s268 = sphi 0, %s267
      %s282 = sphi 0, %s268
      %s286 = sphi 0, %s286
      %s288 = sphi 0, %s286
      %s289 = sphi 0, %s288
      %s303 = sphi 0, %s289
      %s307 = sphi 0, %s307
      %s309 = sphi 0, %s307
      %s310 = sphi 0, %s309
      %s324 = sphi 0, %s310
      %s330 = sphi 0, %s332
      %s333 = sphi 0, %s330
      %s334 = sphi 0, %s333
      %s350 = sphi 0, %s334
    $region4: #{_lambda_.1} parent=1 // loop_header_branch
      %24 = sbr.rel (%p22) target = $region8
    $region5: #{_lambda_.1} parent=1 // loop_body
      %s26 = ssub.s32 %s21, 1
      %s27 = ssub.s32 %s21, 2
      %s34 = sadd.s32 1, %s29
      %p35 = scmp.ge.s32.totalorder %s34, 2
      %s36 = scalar_select %p35, 0, %s34
      %s37 = sadd.s32 1, %s28
      %s38 = scalar_select %p35, %s37, %s28
      %p39 = scmp.ge.s32.totalorder %s38, 2
      %s40 = scalar_select %p39, 0, %s38
      %s41 = ssub.s32 %s28, %s40
      %p42 = scmp.eq.s32.totalorder %s41, 0
      %s44 = sadd.s32 %s43, 1
      %s45 = scalar_select %p42, %s43, %s44
      %p48 = pneg %p42
      %p49 = scmp.eq.s32.totalorder %s21, 3
      %p50 = por %p48, %p49
      %p51 = scmp.ne.s32.totalorder %s43, %s46
      %p52 = scmp.eq.s32.totalorder %s21, 0
      %p53 = por %p51, %p52
      %p54 = scmp.ne.s32.totalorder %s43, %s46
      %p55 = scmp.eq.s32.totalorder %s26, 3
      %p56 = por %p54, %p55
      %p57 = scmp.ne.s32.totalorder %s46, %s47
      %p58 = scmp.eq.s32.totalorder %s26, 0
      %p59 = por %p57, %p58
      %p60 = scmp.ne.s32.totalorder %s46, %s47
      %p61 = scmp.eq.s32.totalorder %s27, 3
      %p62 = por %p60, %p61
      %p64 = scmp.ne.s32.totalorder %s47, %s63
      %p65 = scmp.eq.s32.totalorder %s27, 0
      %p66 = por %p64, %p65
      %s68 = sadd.s32 %s67, 1
      %p71 = scmp.eq.s32.totalorder %s21, 3
      %p72 = scmp.ne.s32.totalorder %s67, %s69
      %p73 = scmp.eq.s32.totalorder %s21, 0
      %p74 = por %p72, %p73
      %p75 = scmp.ne.s32.totalorder %s67, %s69
      %p76 = scmp.eq.s32.totalorder %s26, 3
      %p77 = por %p75, %p76
      %p78 = scmp.ne.s32.totalorder %s69, %s70
      %p79 = scmp.eq.s32.totalorder %s26, 0
      %p80 = por %p78, %p79
      %p81 = scmp.ne.s32.totalorder %s69, %s70
      %p82 = scmp.eq.s32.totalorder %s27, 3
      %p83 = por %p81, %p82
      %p85 = scmp.ne.s32.totalorder %s70, %s84
      %p86 = scmp.eq.s32.totalorder %s27, 0
      %p87 = por %p85, %p86
      %s89 = sadd.s32 %s88, 1
      %p92 = scmp.eq.s32.totalorder %s21, 3
      %p93 = scmp.ne.s32.totalorder %s88, %s90
      %p94 = scmp.eq.s32.totalorder %s21, 0
      %p95 = por %p93, %p94
      %p96 = scmp.ne.s32.totalorder %s88, %s90
      %p97 = scmp.eq.s32.totalorder %s26, 3
      %p98 = por %p96, %p97
      %p99 = scmp.ne.s32.totalorder %s90, %s91
      %p100 = scmp.eq.s32.totalorder %s26, 0
      %p101 = por %p99, %p100
      %p102 = scmp.ne.s32.totalorder %s90, %s91
      %p103 = scmp.eq.s32.totalorder %s27, 3
      %p104 = por %p102, %p103
      %p106 = scmp.ne.s32.totalorder %s91, %s105
      %p107 = scmp.eq.s32.totalorder %s27, 0
      %p108 = por %p106, %p107
      %s109 = ssub.s32 %s29, %s36
      %p110 = scmp.eq.s32.totalorder %s109, 0
      %s112 = sadd.s32 %s111, 1
      %s113 = scalar_select %p110, %s111, %s112
      %p116 = pneg %p110
      %p117 = scmp.eq.s32.totalorder %s21, 3
      %p118 = por %p116, %p117
      %p119 = scmp.ne.s32.totalorder %s111, %s114
      %p120 = scmp.eq.s32.totalorder %s21, 0
      %p121 = por %p119, %p120
      %p122 = scmp.ne.s32.totalorder %s111, %s114
      %p123 = scmp.eq.s32.totalorder %s26, 3
      %p124 = por %p122, %p123
      %p125 = scmp.ne.s32.totalorder %s114, %s115
      %p126 = scmp.eq.s32.totalorder %s26, 0
      %p127 = por %p125, %p126
      %p128 = scmp.ne.s32.totalorder %s114, %s115
      %p129 = scmp.eq.s32.totalorder %s27, 3
      %p130 = por %p128, %p129
      %p132 = scmp.ne.s32.totalorder %s115, %s131
      %p133 = scmp.eq.s32.totalorder %s27, 0
      %p134 = por %p132, %p133
      %s135 = ssub.s32 %s29, %s36
      %p136 = scmp.eq.s32.totalorder %s135, 0
      %s138 = sadd.s32 %s137, 1
      %s139 = scalar_select %p136, %s137, %s138
      %p142 = pneg %p136
      %p143 = scmp.eq.s32.totalorder %s21, 3
      %p144 = por %p142, %p143
      %p145 = scmp.ne.s32.totalorder %s137, %s140
      %p146 = scmp.eq.s32.totalorder %s21, 0
      %p147 = por %p145, %p146
      %p148 = scmp.ne.s32.totalorder %s137, %s140
      %p149 = scmp.eq.s32.totalorder %s26, 3
      %p150 = por %p148, %p149
      %p151 = scmp.ne.s32.totalorder %s140, %s141
      %p152 = scmp.eq.s32.totalorder %s26, 0
      %p153 = por %p151, %p152
      %p154 = scmp.ne.s32.totalorder %s140, %s141
      %p155 = scmp.eq.s32.totalorder %s27, 3
      %p156 = por %p154, %p155
      %p158 = scmp.ne.s32.totalorder %s141, %s157
      %p159 = scmp.eq.s32.totalorder %s27, 0
      %p160 = por %p158, %p159
      %s161 = ssub.s32 %s29, %s36
      %p162 = scmp.eq.s32.totalorder %s161, 0
      %s164 = sadd.s32 %s163, 1
      %s165 = scalar_select %p162, %s163, %s164
      %p168 = pneg %p162
      %p169 = scmp.eq.s32.totalorder %s21, 3
      %p170 = por %p168, %p169
      %p171 = scmp.ne.s32.totalorder %s163, %s166
      %p172 = scmp.eq.s32.totalorder %s21, 0
      %p173 = por %p171, %p172
      %p174 = scmp.ne.s32.totalorder %s163, %s166
      %p175 = scmp.eq.s32.totalorder %s26, 3
      %p176 = por %p174, %p175
      %p177 = scmp.ne.s32.totalorder %s166, %s167
      %p178 = scmp.eq.s32.totalorder %s26, 0
      %p179 = por %p177, %p178
      %p180 = scmp.ne.s32.totalorder %s166, %s167
      %p181 = scmp.eq.s32.totalorder %s27, 3
      %p182 = por %p180, %p181
      %p184 = scmp.ne.s32.totalorder %s167, %s183
      %p185 = scmp.eq.s32.totalorder %s27, 0
      %p186 = por %p184, %p185
      %s187 = ssub.s32 %s29, %s36
      %p188 = scmp.eq.s32.totalorder %s187, 0
      %s190 = sadd.s32 %s189, 1
      %s191 = scalar_select %p188, %s189, %s190
      %p194 = pneg %p188
      %p195 = scmp.eq.s32.totalorder %s21, 3
      %p196 = por %p194, %p195
      %p197 = scmp.ne.s32.totalorder %s189, %s192
      %p198 = scmp.eq.s32.totalorder %s21, 0
      %p199 = por %p197, %p198
      %p200 = scmp.ne.s32.totalorder %s189, %s192
      %p201 = scmp.eq.s32.totalorder %s26, 3
      %p202 = por %p200, %p201
      %p203 = scmp.ne.s32.totalorder %s192, %s193
      %p204 = scmp.eq.s32.totalorder %s26, 0
      %p205 = por %p203, %p204
      %p206 = scmp.ne.s32.totalorder %s192, %s193
      %p207 = scmp.eq.s32.totalorder %s27, 3
      %p208 = por %p206, %p207
      %p210 = scmp.ne.s32.totalorder %s193, %s209
      %p211 = scmp.eq.s32.totalorder %s27, 0
      %p212 = por %p210, %p211
      %s213 = ssub.s32 %s29, %s36
      %p214 = scmp.eq.s32.totalorder %s213, 0
      %s216 = sadd.s32 %s215, 1
      %s217 = scalar_select %p214, %s215, %s216
      %p220 = pneg %p214
      %p221 = scmp.eq.s32.totalorder %s21, 3
      %p222 = por %p220, %p221
      %p223 = scmp.ne.s32.totalorder %s215, %s218
      %p224 = scmp.eq.s32.totalorder %s21, 0
      %p225 = por %p223, %p224
      %p226 = scmp.ne.s32.totalorder %s215, %s218
      %p227 = scmp.eq.s32.totalorder %s26, 3
      %p228 = por %p226, %p227
      %p229 = scmp.ne.s32.totalorder %s218, %s219
      %p230 = scmp.eq.s32.totalorder %s26, 0
      %p231 = por %p229, %p230
      %p232 = scmp.ne.s32.totalorder %s218, %s219
      %p233 = scmp.eq.s32.totalorder %s27, 3
      %p234 = por %p232, %p233
      %p236 = scmp.ne.s32.totalorder %s219, %s235
      %p237 = scmp.eq.s32.totalorder %s27, 0
      %p238 = por %p236, %p237
      %s239 = ssub.s32 %s29, %s36
      %p240 = scmp.eq.s32.totalorder %s239, 0
      %s242 = sadd.s32 %s241, 1
      %s243 = scalar_select %p240, %s241, %s242
      %p246 = pneg %p240
      %p247 = scmp.eq.s32.totalorder %s21, 3
      %p248 = por %p246, %p247
      %p249 = scmp.ne.s32.totalorder %s241, %s244
      %p250 = scmp.eq.s32.totalorder %s21, 0
      %p251 = por %p249, %p250
      %p252 = scmp.ne.s32.totalorder %s241, %s244
      %p253 = scmp.eq.s32.totalorder %s26, 3
      %p254 = por %p252, %p253
      %p255 = scmp.ne.s32.totalorder %s244, %s245
      %p256 = scmp.eq.s32.totalorder %s26, 0
      %p257 = por %p255, %p256
      %p258 = scmp.ne.s32.totalorder %s244, %s245
      %p259 = scmp.eq.s32.totalorder %s27, 3
      %p260 = por %p258, %p259
      %p262 = scmp.ne.s32.totalorder %s245, %s261
      %p263 = scmp.eq.s32.totalorder %s27, 0
      %p264 = por %p262, %p263
      %s266 = sadd.s32 %s265, 1
      %p269 = scmp.eq.s32.totalorder %s21, 3
      %p270 = scmp.ne.s32.totalorder %s265, %s267
      %p271 = scmp.eq.s32.totalorder %s21, 0
      %p272 = por %p270, %p271
      %p273 = scmp.ne.s32.totalorder %s265, %s267
      %p274 = scmp.eq.s32.totalorder %s26, 3
      %p275 = por %p273, %p274
      %p276 = scmp.ne.s32.totalorder %s267, %s268
      %p277 = scmp.eq.s32.totalorder %s26, 0
      %p278 = por %p276, %p277
      %p279 = scmp.ne.s32.totalorder %s267, %s268
      %p280 = scmp.eq.s32.totalorder %s27, 3
      %p281 = por %p279, %p280
      %p283 = scmp.ne.s32.totalorder %s268, %s282
      %p284 = scmp.eq.s32.totalorder %s27, 0
      %p285 = por %p283, %p284
      %s287 = sadd.s32 %s286, 1
      %p290 = scmp.eq.s32.totalorder %s21, 3
      %p291 = scmp.ne.s32.totalorder %s286, %s288
      %p292 = scmp.eq.s32.totalorder %s21, 0
      %p293 = por %p291, %p292
      %p294 = scmp.ne.s32.totalorder %s286, %s288
      %p295 = scmp.eq.s32.totalorder %s26, 3
      %p296 = por %p294, %p295
      %p297 = scmp.ne.s32.totalorder %s288, %s289
      %p298 = scmp.eq.s32.totalorder %s26, 0
      %p299 = por %p297, %p298
      %p300 = scmp.ne.s32.totalorder %s288, %s289
      %p301 = scmp.eq.s32.totalorder %s27, 3
      %p302 = por %p300, %p301
      %p304 = scmp.ne.s32.totalorder %s289, %s303
      %p305 = scmp.eq.s32.totalorder %s27, 0
      %p306 = por %p304, %p305
      %s308 = sadd.s32 %s307, 1
      %p311 = scmp.eq.s32.totalorder %s21, 3
      %p312 = scmp.ne.s32.totalorder %s307, %s309
      %p313 = scmp.eq.s32.totalorder %s21, 0
      %p314 = por %p312, %p313
      %p315 = scmp.ne.s32.totalorder %s307, %s309
      %p316 = scmp.eq.s32.totalorder %s26, 3
      %p317 = por %p315, %p316
      %p318 = scmp.ne.s32.totalorder %s309, %s310
      %p319 = scmp.eq.s32.totalorder %s26, 0
      %p320 = por %p318, %p319
      %p321 = scmp.ne.s32.totalorder %s309, %s310
      %p322 = scmp.eq.s32.totalorder %s27, 3
      %p323 = por %p321, %p322
      %p325 = scmp.ne.s32.totalorder %s310, %s324
      %p326 = scmp.eq.s32.totalorder %s27, 0
      %p327 = por %p325, %p326
      %s328 = ssub.s32 %s28, %s40
      %p329 = scmp.eq.s32.totalorder %s328, 0
      %s331 = sadd.s32 %s330, 1
      %s332 = scalar_select %p329, %s330, %s331
      %p335 = pneg %p329
      %p336 = scmp.eq.s32.totalorder %s21, 3
      %p337 = por %p335, %p336
      %p338 = scmp.ne.s32.totalorder %s330, %s333
      %p339 = scmp.eq.s32.totalorder %s21, 0
      %p340 = por %p338, %p339
      %p341 = scmp.ne.s32.totalorder %s330, %s333
      %p342 = scmp.eq.s32.totalorder %s26, 3
      %p343 = por %p341, %p342
      %p344 = scmp.ne.s32.totalorder %s333, %s334
      %p345 = scmp.eq.s32.totalorder %s26, 0
      %p346 = por %p344, %p345
      %p347 = scmp.ne.s32.totalorder %s333, %s334
      %p348 = scmp.eq.s32.totalorder %s27, 3
      %p349 = por %p347, %p348
      %p351 = scmp.ne.s32.totalorder %s334, %s350
      %p352 = scmp.eq.s32.totalorder %s27, 0
      %p353 = por %p351, %p352
      %p354 = scmp.le.s32.totalorder 1, %s21
      %p355 = scmp.lt.s32.totalorder %s21, 5
      %p356 = pnand %p354, %p355
      %p357 = pneg %p356
      // Predicated region
      $region9: #{_lambda_.1} parent=5 // pred_check
        _
      $region10: #{_lambda_.1} parent=5 // pred_check_branch
        %359 = sbr.rel (%p356) target = $region12
      $region11: #{_lambda_.1} parent=5 // pred_region
        %s360 = ssub.s32 %s21, 1
        // Predicated region
        $region13: #{_lambda_.1} parent=11 // pred_check
          %p361 = pneg %p80
        $region14: #{_lambda_.1} parent=11 // pred_check_branch
          %363 = sbr.rel (%p361) target = $region16
        $region15: #{_lambda_.1} parent=11 // pred_region
          _
        $region16: #{_lambda_.1} parent=11 // pred_fallthru
          _
        // Predicated region
        $region17: #{_lambda_.1} parent=11 // pred_check
          %p364 = pneg %p101
        $region18: #{_lambda_.1} parent=11 // pred_check_branch
          %366 = sbr.rel (%p364) target = $region20
        $region19: #{_lambda_.1} parent=11 // pred_region
          _
        $region20: #{_lambda_.1} parent=11 // pred_fallthru
          _
        // Predicated region
        $region21: #{_lambda_.1} parent=11 // pred_check
          %p367 = pneg %p278
        $region22: #{_lambda_.1} parent=11 // pred_check_branch
          %369 = sbr.rel (%p367) target = $region24
        $region23: #{_lambda_.1} parent=11 // pred_region
          _
        $region24: #{_lambda_.1} parent=11 // pred_fallthru
          _
        // Predicated region
        $region25: #{_lambda_.1} parent=11 // pred_check
          %p370 = pneg %p299
        $region26: #{_lambda_.1} parent=11 // pred_check_branch
          %372 = sbr.rel (%p370) target = $region28
        $region27: #{_lambda_.1} parent=11 // pred_region
          _
        $region28: #{_lambda_.1} parent=11 // pred_fallthru
          _
        // Predicated region
        $region29: #{_lambda_.1} parent=11 // pred_check
          %p373 = pneg %p320
        $region30: #{_lambda_.1} parent=11 // pred_check_branch
          %375 = sbr.rel (%p373) target = $region32
        $region31: #{_lambda_.1} parent=11 // pred_region
          _
        $region32: #{_lambda_.1} parent=11 // pred_fallthru
          _
      $region12: #{_lambda_.1} parent=5 // pred_fallthru
        _
      %p376 = scmp.lt.s32.totalorder %s21, 4
      // Predicated region
      $region33: #{_lambda_.1} parent=5 // pred_check
        %p377 = pneg %p376
      $region34: #{_lambda_.1} parent=5 // pred_check_branch
        %379 = sbr.rel (%p377) target = $region36
      $region35: #{_lambda_.1} parent=5 // pred_region
        // Predicated region
        $region37: #{_lambda_.1} parent=35 // pred_check
          %p380 = pneg %p53
        $region38: #{_lambda_.1} parent=35 // pred_check_branch
          %382 = sbr.rel (%p380) target = $region40
        $region39: #{_lambda_.1} parent=35 // pred_region
          %s383 = smul.u32 8, %s28
          %p384 = scmp.lt.s32.totalorder %s383, 15
          %s385 = scalar_select %p384, %s383, 15
          %s386 = smul.addr %s385, 2
          %s387 = smul.addr %s386, 8
          %s388 = scalar_lea.vmem %s0, %s387
          %s389 = smul.u32 8, %s28
        $region40: #{_lambda_.1} parent=35 // pred_fallthru
          _
        // Predicated region
        $region41: #{_lambda_.1} parent=35 // pred_check
          %p390 = pneg %p121
        $region42: #{_lambda_.1} parent=35 // pred_check_branch
          %392 = sbr.rel (%p390) target = $region44
        $region43: #{_lambda_.1} parent=35 // pred_region
          %p393 = scmp.lt.s32.totalorder %s29, 1
          %s394 = scalar_select %p393, %s29, 1
          %s395 = smul.addr %s394, 4
          %s396 = scalar_lea.vmem %s3, %s395
        $region44: #{_lambda_.1} parent=35 // pred_fallthru
          _
        // Predicated region
        $region45: #{_lambda_.1} parent=35 // pred_check
          %p397 = pneg %p147
        $region46: #{_lambda_.1} parent=35 // pred_check_branch
          %399 = sbr.rel (%p397) target = $region48
        $region47: #{_lambda_.1} parent=35 // pred_region
          %p400 = scmp.lt.s32.totalorder %s29, 1
          %s401 = scalar_select %p400, %s29, 1
          %s402 = smul.addr %s401, 8
          %s403 = scalar_lea.vmem %s4, %s402
        $region48: #{_lambda_.1} parent=35 // pred_fallthru
          _
        // Predicated region
        $region49: #{_lambda_.1} parent=35 // pred_check
          %p404 = pneg %p173
        $region50: #{_lambda_.1} parent=35 // pred_check_branch
          %406 = sbr.rel (%p404) target = $region52
        $region51: #{_lambda_.1} parent=35 // pred_region
          %p407 = scmp.lt.s32.totalorder %s29, 1
          %s408 = scalar_select %p407, %s29, 1
          %s409 = smul.addr %s408, 8
          %s410 = smul.addr %s409, 2
          %s411 = scalar_lea.vmem %s5, %s410
        $region52: #{_lambda_.1} parent=35 // pred_fallthru
          _
        // Predicated region
        $region53: #{_lambda_.1} parent=35 // pred_check
          %p412 = pneg %p199
        $region54: #{_lambda_.1} parent=35 // pred_check_branch
          %414 = sbr.rel (%p412) target = $region56
        $region55: #{_lambda_.1} parent=35 // pred_region
          %p415 = scmp.lt.s32.totalorder %s29, 1
          %s416 = scalar_select %p415, %s29, 1
          %s417 = smul.addr %s416, 8
          %s418 = scalar_lea.vmem %s6, %s417
        $region56: #{_lambda_.1} parent=35 // pred_fallthru
          _
        // Predicated region
        $region57: #{_lambda_.1} parent=35 // pred_check
          %p419 = pneg %p225
        $region58: #{_lambda_.1} parent=35 // pred_check_branch
          %421 = sbr.rel (%p419) target = $region60
        $region59: #{_lambda_.1} parent=35 // pred_region
          %p422 = scmp.lt.s32.totalorder %s29, 1
          %s423 = scalar_select %p422, %s29, 1
          %s424 = smul.addr %s423, 32
          %s425 = smul.addr %s424, 4
          %s426 = scalar_lea.vmem %s7, %s425
        $region60: #{_lambda_.1} parent=35 // pred_fallthru
          _
        // Predicated region
        $region61: #{_lambda_.1} parent=35 // pred_check
          %p427 = pneg %p251
        $region62: #{_lambda_.1} parent=35 // pred_check_branch
          %429 = sbr.rel (%p427) target = $region64
        $region63: #{_lambda_.1} parent=35 // pred_region
          %p430 = scmp.lt.s32.totalorder %s29, 1
          %s431 = scalar_select %p430, %s29, 1
          %s432 = smul.addr %s431, 8
          %s433 = scalar_lea.vmem %s8, %s432
        $region64: #{_lambda_.1} parent=35 // pred_fallthru
          _
      $region36: #{_lambda_.1} parent=5 // pred_fallthru
        _
      %p434 = scmp.le.s32.totalorder 1, %s21
      %p435 = scmp.lt.s32.totalorder %s21, 5
      %p436 = pnand %p434, %p435
      %p437 = pneg %p436
      // Predicated region
      $region65: #{_lambda_.1} parent=5 // pred_check
        _
      $region66: #{_lambda_.1} parent=5 // pred_check_branch
        %439 = sbr.rel (%p436) target = $region68
      $region67: #{_lambda_.1} parent=5 // pred_region
        %s440 = ssub.s32 %s21, 1
        %s441 = smul.u32 8, %s30
        %p442 = scmp.lt.s32.totalorder %s441, 15
        %s443 = scalar_select %p442, %s441, 15
        %s444 = smul.addr %s443, 2
        %s445 = smul.addr %s444, 8
        %s446 = scalar_lea.vmem %s0, %s445
        %p447 = pneg %p59
        %p448 = pneg %p56
        %p449 = pneg %p80
        %p450 = pneg %p77
        %p451 = pneg %p101
        %p452 = pneg %p98
        %p453 = scmp.lt.s32.totalorder %s31, 1
        %s454 = scalar_select %p453, %s31, 1
        %s455 = smul.addr %s454, 4
        %s456 = scalar_lea.vmem %s3, %s455
        %p457 = pneg %p127
        %p458 = pneg %p124
        %p459 = scmp.lt.s32.totalorder %s31, 1
        %s460 = scalar_select %p459, %s31, 1
        %s461 = smul.addr %s460, 8
        %s462 = scalar_lea.vmem %s4, %s461
        %p463 = pneg %p153
        %p464 = pneg %p150
        %p465 = scmp.lt.s32.totalorder %s31, 1
        %s466 = scalar_select %p465, %s31, 1
        %s467 = smul.addr %s466, 8
        %s468 = smul.addr %s467, 2
        %s469 = scalar_lea.vmem %s5, %s468
        %p470 = pneg %p179
        %p471 = pneg %p176
        %p472 = scmp.lt.s32.totalorder %s31, 1
        %s473 = scalar_select %p472, %s31, 1
        %s474 = smul.addr %s473, 8
        %s475 = scalar_lea.vmem %s6, %s474
        %p476 = pneg %p205
        %p477 = pneg %p202
        %p478 = scmp.lt.s32.totalorder %s31, 1
        %s479 = scalar_select %p478, %s31, 1
        %s480 = smul.addr %s479, 32
        %s481 = smul.addr %s480, 4
        %s482 = scalar_lea.vmem %s7, %s481
        %p483 = pneg %p231
        %p484 = pneg %p228
        %p485 = scmp.lt.s32.totalorder %s31, 1
        %s486 = scalar_select %p485, %s31, 1
        %s487 = smul.addr %s486, 8
        %s488 = scalar_lea.vmem %s8, %s487
        %p489 = pneg %p257
        %p490 = pneg %p254
        %p491 = pneg %p278
        %p492 = pneg %p275
        %p493 = pneg %p299
        %p494 = pneg %p296
        %p495 = pneg %p320
        %p496 = pneg %p317
        %p497 = pneg %p346
        %p498 = pneg %p343
        %s499 = sand.u32 %s333, 1
        %s500 = scalar_lea.sflag [#allocation6], %s499
        %s501 = sand.u32 %s333, 1
        %s502 = smul.addr %s501, 8
        %s503 = scalar_lea.vmem [#allocation5], %s502
        %s504 = smul.u32 8, %s30
        %p505 = scmp.lt.s32.totalorder %s504, 15
        %s506 = scalar_select %p505, %s504, 15
        %s507 = smul.addr %s506, 2
        %s508 = smul.addr %s507, 8
        %s509 = scalar_lea.vmem %s0, %s508
        %s510 = smul.u32 8, %s30
        %p511 = scmp.lt.s32.totalorder %s31, 1
        %s512 = scalar_select %p511, %s31, 1
        %s513 = smul.addr %s512, 4
        %s514 = scalar_lea.vmem %s3, %s513
        %p515 = scmp.lt.s32.totalorder %s31, 1
        %s516 = scalar_select %p515, %s31, 1
        %s517 = smul.addr %s516, 8
        %s518 = scalar_lea.vmem %s4, %s517
        %p519 = scmp.lt.s32.totalorder %s31, 1
        %s520 = scalar_select %p519, %s31, 1
        %s521 = smul.addr %s520, 8
        %s522 = smul.addr %s521, 2
        %s523 = scalar_lea.vmem %s5, %s522
        %p524 = scmp.lt.s32.totalorder %s31, 1
        %s525 = scalar_select %p524, %s31, 1
        %s526 = smul.addr %s525, 8
        %s527 = scalar_lea.vmem %s6, %s526
        %p528 = scmp.lt.s32.totalorder %s31, 1
        %s529 = scalar_select %p528, %s31, 1
        %s530 = smul.addr %s529, 32
        %s531 = smul.addr %s530, 4
        %s532 = scalar_lea.vmem %s7, %s531
        %p533 = scmp.lt.s32.totalorder %s31, 1
        %s534 = scalar_select %p533, %s31, 1
        %s535 = smul.addr %s534, 8
        %s536 = scalar_lea.vmem %s8, %s535
        %p538 = scmp.eq.s32.totalorder %s31, 0
        // Predicated region
        $region69: #{_lambda_.1} parent=67 // pred_check
          %p539 = pneg %p538
        $region70: #{_lambda_.1} parent=67 // pred_check_branch
          %541 = sbr.rel (%p539) target = $region72
        $region71: #{_lambda_.1} parent=67 // pred_region
          %v542 = vld [vmem:[%s509] sm:$0xff]
          %v543 = vld [vmem:[%s509 + $0x8] sm:$0xff]
          %v544 = vld [vmem:[%s509 + $0x10] sm:$0xff]
          %v545 = vld [vmem:[%s509 + $0x18] sm:$0xff]
          %v546 = vld [vmem:[%s509 + $0x20] sm:$0xff]
          %v547 = vld [vmem:[%s509 + $0x28] sm:$0xff]
          %v548 = vld [vmem:[%s509 + $0x30] sm:$0xff]
          %v549 = vld [vmem:[%s509 + $0x38] sm:$0xff]
          %v550 = vld [vmem:[%s509 + $0x40] sm:$0xff]
          %v551 = vld [vmem:[%s509 + $0x48] sm:$0xff]
          %v552 = vld [vmem:[%s509 + $0x50] sm:$0xff]
          %v553 = vld [vmem:[%s509 + $0x58] sm:$0xff]
          %v554 = vld [vmem:[%s509 + $0x60] sm:$0xff]
          %v555 = vld [vmem:[%s509 + $0x68] sm:$0xff]
          %v556 = vld [vmem:[%s509 + $0x70] sm:$0xff]
          %v557 = vld [vmem:[%s509 + $0x78] sm:$0xff]
          %v558 = vld [vmem:[%s1] sm:$0xff]
          %v559 = vld [vmem:[%s1 + $0x8] sm:$0xff]
          %v560 = vld [vmem:[%s1 + $0x10] sm:$0xff]
          %v561 = vld [vmem:[%s1 + $0x18] sm:$0xff]
          %v562 = vld [vmem:[%s1 + $0x20] sm:$0xff]
          %v563 = vld [vmem:[%s1 + $0x28] sm:$0xff]
          %v564 = vld [vmem:[%s1 + $0x30] sm:$0xff]
          %v565 = vld [vmem:[%s1 + $0x38] sm:$0xff]
          %vm566 = vcmask 523264
          %v568 = vsel %vm566, %v543, 0
          %v571 = vsel %vm566, %v545, 0
          %v574 = vsel %vm566, %v547, 0
          %v577 = vsel %vm566, %v549, 0
          %v580 = vsel %vm566, %v551, 0
          %v583 = vsel %vm566, %v553, 0
          %v586 = vsel %vm566, %v555, 0
          %v589 = vsel %vm566, %v557, 0
          %v592 = vsel %vm566, %v559, 0
          %v595 = vsel %vm566, %v561, 0
          %v598 = vsel %vm566, %v563, 0
          %v601 = vsel %vm566, %v565, 0
          %603 = vmatprep.subr.mxu0 %v592
          %604 = vmatpush1.xpose.msra.mxu0 %v558
          %605 = vmatprep.subr.mxu0 %v595
          %606 = vmatpush1.xpose.msra.mxu0 %v560
          %607 = vmatprep.subr.mxu0 %v598
          %608 = vmatpush1.xpose.msra.mxu0 %v562
          %609 = vmatprep.subr.mxu0 %v601
          %610 = vmatpush1.xpose.msra.mxu0 %v564
          %611 = vmatprep.subr.mxu0 0.0
          %612 = vmatpush1.xpose.msra.mxu0 0.0
          %613 = vmatprep.subr.mxu0 0.0
          %614 = vmatpush1.xpose.msra.mxu0 0.0
          %615 = vmatprep.subr.mxu0 0.0
          %616 = vmatpush1.xpose.msra.mxu0 0.0
          %617 = vmatprep.subr.mxu0 0.0
          %618 = vmatpush1.xpose.msra.mxu0 0.0
          %619 = vmatprep.subr.mxu0 0.0
          %620 = vmatpush1.xpose.msra.mxu0 0.0
          %621 = vmatprep.subr.mxu0 0.0
          %622 = vmatpush1.xpose.msra.mxu0 0.0
          %623 = vmatprep.subr.mxu0 0.0
          %624 = vmatpush1.xpose.msra.mxu0 0.0
          %625 = vmatprep.subr.mxu0 0.0
          %626 = vmatpush1.xpose.msra.mxu0 0.0
          %627 = vmatprep.subr.mxu0 0.0
          %628 = vmatpush1.xpose.msra.mxu0 0.0
          %629 = vmatprep.subr.mxu0 0.0
          %630 = vmatpush1.xpose.msra.mxu0 0.0
          %631 = vmatprep.subr.mxu0 0.0
          %632 = vmatpush1.xpose.msra.mxu0 0.0
          %633 = vmatprep.subr.mxu0 0.0
          %634 = vmatpush1.xpose.msra.mxu0 0.0
          %635 = vmatprep.subr.mxu0 0.0
          %636 = vmatpush1.xpose.msra.mxu0 0.0
          %637 = vmatprep.subr.mxu0 0.0
          %638 = vmatpush1.xpose.msra.mxu0 0.0
          %639 = vmatprep.subr.mxu0 0.0
          %640 = vmatpush1.xpose.msra.mxu0 0.0
          %641 = vmatprep.subr.mxu0 0.0
          %642 = vmatpush1.xpose.msra.mxu0 0.0
          %643 = vmatprep.subr.mxu0 0.0
          %644 = vmatpush1.xpose.msra.mxu0 0.0
          %645 = vmatprep.subr.mxu0 0.0
          %646 = vmatpush1.xpose.msra.mxu0 0.0
          %647 = vmatprep.subr.mxu0 0.0
          %648 = vmatpush1.xpose.msra.mxu0 0.0
          %649 = vmatprep.subr.mxu0 0.0
          %650 = vmatpush1.xpose.msra.mxu0 0.0
          %651 = vmatprep.subr.mxu0 0.0
          %652 = vmatpush1.xpose.msra.mxu0 0.0
          %653 = vmatprep.subr.mxu0 0.0
          %654 = vmatpush1.xpose.msra.mxu0 0.0
          %655 = vmatprep.subr.mxu0 0.0
          %656 = vmatpush1.xpose.msra.mxu0 0.0
          %657 = vmatprep.subr.mxu0 0.0
          %658 = vmatpush1.xpose.msra.mxu0 0.0
          %659 = vmatprep.subr.mxu0 0.0
          %660 = vmatpush1.xpose.msra.mxu0 0.0
          %661 = vmatprep.subr.mxu0 0.0
          %662 = vmatpush1.xpose.msra.mxu0 0.0
          %663 = vmatprep.subr.mxu0 0.0
          %664 = vmatpush1.xpose.msra.mxu0 0.0
          %665 = vmatprep.subr.mxu0 0.0
          %666 = vmatpush1.xpose.msra.mxu0 0.0
          %667 = vmatprep.mubr.f32.mxu0 %v568
          %668 = vmatmul.mubr.f32.gmra.mrb[0].mxu0 %v542
          %v669 = vpop.f32.mrb[0].mxu0
          %v670 = vadd.f32 0.0, %v669
          %v671 = vpop.f32.mrb[0].mxu0
          %672 = vmatprep.mubr.f32.mxu0 %v571
          %673 = vmatmul.mubr.f32.gmra.mrb[0].mxu0 %v544
          %v674 = vpop.f32.mrb[0].mxu0
          %v675 = vadd.f32 0.0, %v674
          %v676 = vpop.f32.mrb[0].mxu0
          %677 = vmatprep.mubr.f32.mxu0 %v574
          %678 = vmatmul.mubr.f32.gmra.mrb[0].mxu0 %v546
          %v679 = vpop.f32.mrb[0].mxu0
          %v680 = vadd.f32 0.0, %v679
          %v681 = vpop.f32.mrb[0].mxu0
          %682 = vmatprep.mubr.f32.mxu0 %v577
          %683 = vmatmul.mubr.f32.gmra.mrb[0].mxu0 %v548
          %v684 = vpop.f32.mrb[0].mxu0
          %v685 = vadd.f32 0.0, %v684
          %v686 = vpop.f32.mrb[0].mxu0
          %687 = vmatprep.mubr.f32.mxu0 %v580
          %688 = vmatmul.mubr.f32.gmra.mrb[0].mxu0 %v550
          %v689 = vpop.f32.mrb[0].mxu0
          %v690 = vadd.f32 0.0, %v689
          %v691 = vpop.f32.mrb[0].mxu0
          %692 = vmatprep.mubr.f32.mxu0 %v583
          %693 = vmatmul.mubr.f32.gmra.mrb[0].mxu0 %v552
          %v694 = vpop.f32.mrb[0].mxu0
          %v695 = vadd.f32 0.0, %v694
          %v696 = vpop.f32.mrb[0].mxu0
          %697 = vmatprep.mubr.f32.mxu0 %v586
          %698 = vmatmul.mubr.f32.gmra.mrb[0].mxu0 %v554
          %v699 = vpop.f32.mrb[0].mxu0
          %v700 = vadd.f32 0.0, %v699
          %v701 = vpop.f32.mrb[0].mxu0
          %702 = vmatprep.mubr.f32.mxu0 %v589
          %703 = vmatmul.mubr.f32.gmra.mrb[0].mxu0 %v556
          %v704 = vpop.f32.mrb[0].mxu0
          %v705 = vadd.f32 0.0, %v704
          %v706 = vpop.f32.mrb[0].mxu0
          %707 = vdwg.mxu0
          %v708 = vld [vmem:[%s2] sm:$0x1]
          %v710 = vlaneseq
          %v711 = vshrl.u32 %v710, 7
          %v712 = vsub.s32 0, %v711
          %v713 = vrot.slane %v708, %v712
          %v715 = vadd.f32 %v670, %v713
          %v716 = vadd.f32 %v675, %v713
          %v717 = vadd.f32 %v680, %v713
          %v718 = vadd.f32 %v685, %v713
          %v719 = vadd.f32 %v690, %v713
          %v720 = vadd.f32 %v695, %v713
          %v721 = vadd.f32 %v700, %v713
          %v722 = vadd.f32 %v705, %v713
          %vm723 = vcmask 261120
          %724 = vst.msk [vmem:[#allocation2] sm:$0xff] %vm723, %v715
          %725 = vst.msk [vmem:[#allocation2 + $0x8] sm:$0xff] %vm723, %v716
          %726 = vst.msk [vmem:[#allocation2 + $0x10] sm:$0xff] %vm723, %v717
          %727 = vst.msk [vmem:[#allocation2 + $0x18] sm:$0xff] %vm723, %v718
          %728 = vst.msk [vmem:[#allocation2 + $0x20] sm:$0xff] %vm723, %v719
          %729 = vst.msk [vmem:[#allocation2 + $0x28] sm:$0xff] %vm723, %v720
          %730 = vst.msk [vmem:[#allocation2 + $0x30] sm:$0xff] %vm723, %v721
          %731 = vst.msk [vmem:[#allocation2 + $0x38] sm:$0xff] %vm723, %v722
        $region72: #{_lambda_.1} parent=67 // pred_fallthru
          _
        %v732 = vld [vmem:[#allocation2] sm:$0xff]
        %v733 = vld [vmem:[#allocation2 + $0x8] sm:$0xff]
        %v734 = vld [vmem:[#allocation2 + $0x10] sm:$0xff]
        %v735 = vld [vmem:[#allocation2 + $0x18] sm:$0xff]
        %v736 = vld [vmem:[#allocation2 + $0x20] sm:$0xff]
        %v737 = vld [vmem:[#allocation2 + $0x28] sm:$0xff]
        %v738 = vld [vmem:[#allocation2 + $0x30] sm:$0xff]
        %v739 = vld [vmem:[#allocation2 + $0x38] sm:$0xff]
        %vm740 = vcmask 261120
        %v741 = vsel %vm740, %v732, 0.0
        %742 = vadd.xlane.f32.xlu0 %v741
        %v743 = vpop.xlane.xlu0 %742
        %v744 = vsel %vm740, %v733, 0.0
        %745 = vadd.xlane.f32.xlu0 %v744
        %v746 = vpop.xlane.xlu0 %745
        %v747 = vsel %vm740, %v734, 0.0
        %748 = vadd.xlane.f32.xlu0 %v747
        %v749 = vpop.xlane.xlu0 %748
        %v750 = vsel %vm740, %v735, 0.0
        %751 = vadd.xlane.f32.xlu0 %v750
        %v752 = vpop.xlane.xlu0 %751
        %v753 = vsel %vm740, %v736, 0.0
        %754 = vadd.xlane.f32.xlu0 %v753
        %v755 = vpop.xlane.xlu0 %754
        %v756 = vsel %vm740, %v737, 0.0
        %757 = vadd.xlane.f32.xlu0 %v756
        %v758 = vpop.xlane.xlu0 %757
        %v759 = vsel %vm740, %v738, 0.0
        %760 = vadd.xlane.f32.xlu0 %v759
        %v761 = vpop.xlane.xlu0 %760
        %v762 = vsel %vm740, %v739, 0.0
        %763 = vadd.xlane.f32.xlu0 %v762
        %v764 = vpop.xlane.xlu0 %763
        %v765 = vrcp.pop 32.0
        %v766 = vmul.f32 %v743, %v765
        %v767 = vmul.f32 %v746, %v765
        %v768 = vmul.f32 %v749, %v765
        %v769 = vmul.f32 %v752, %v765
        %v770 = vmul.f32 %v755, %v765
        %v771 = vmul.f32 %v758, %v765
        %v772 = vmul.f32 %v761, %v765
        %v773 = vmul.f32 %v764, %v765
        %v774 = vsub.f32 %v732, %v766
        %v775 = vsub.f32 %v733, %v767
        %v776 = vsub.f32 %v734, %v768
        %v777 = vsub.f32 %v735, %v769
        %v778 = vsub.f32 %v736, %v770
        %v779 = vsub.f32 %v737, %v771
        %v780 = vsub.f32 %v738, %v772
        %v781 = vsub.f32 %v739, %v773
        %v782 = vmul.f32 %v774, %v774
        %v783 = vmul.f32 %v775, %v775
        %v784 = vmul.f32 %v776, %v776
        %v785 = vmul.f32 %v777, %v777
        %v786 = vmul.f32 %v778, %v778
        %v787 = vmul.f32 %v779, %v779
        %v788 = vmul.f32 %v780, %v780
        %v789 = vmul.f32 %v781, %v781
        %v790 = vsel %vm740, %v782, 0.0
        %791 = vadd.xlane.f32.xlu0 %v790
        %v792 = vpop.xlane.xlu0 %791
        %v793 = vsel %vm740, %v783, 0.0
        %794 = vadd.xlane.f32.xlu0 %v793
        %v795 = vpop.xlane.xlu0 %794
        %v796 = vsel %vm740, %v784, 0.0
        %797 = vadd.xlane.f32.xlu0 %v796
        %v798 = vpop.xlane.xlu0 %797
        %v799 = vsel %vm740, %v785, 0.0
        %800 = vadd.xlane.f32.xlu0 %v799
        %v801 = vpop.xlane.xlu0 %800
        %v802 = vsel %vm740, %v786, 0.0
        %803 = vadd.xlane.f32.xlu0 %v802
        %v804 = vpop.xlane.xlu0 %803
        %v805 = vsel %vm740, %v787, 0.0
        %806 = vadd.xlane.f32.xlu0 %v805
        %v807 = vpop.xlane.xlu0 %806
        %v808 = vsel %vm740, %v788, 0.0
        %809 = vadd.xlane.f32.xlu0 %v808
        %v810 = vpop.xlane.xlu0 %809
        %v811 = vsel %vm740, %v789, 0.0
        %812 = vadd.xlane.f32.xlu0 %v811
        %v813 = vpop.xlane.xlu0 %812
        %v814 = vmul.f32 %v792, %v765
        %v815 = vmul.f32 %v795, %v765
        %v816 = vmul.f32 %v798, %v765
        %v817 = vmul.f32 %v801, %v765
        %v818 = vmul.f32 %v804, %v765
        %v819 = vmul.f32 %v807, %v765
        %v820 = vmul.f32 %v810, %v765
        %v821 = vmul.f32 %v813, %v765
        %v822 = vadd.f32 %v814, 1e-05
        %v823 = vadd.f32 %v815, 1e-05
        %v824 = vadd.f32 %v816, 1e-05
        %v825 = vadd.f32 %v817, 1e-05
        %v826 = vadd.f32 %v818, 1e-05
        %v827 = vadd.f32 %v819, 1e-05
        %v828 = vadd.f32 %v820, 1e-05
        %v829 = vadd.f32 %v821, 1e-05
        %v830 = vrsqrt.pop %v822
        %v831 = vrsqrt.pop %v823
        %v832 = vrsqrt.pop %v824
        %v833 = vrsqrt.pop %v825
        %v834 = vrsqrt.pop %v826
        %v835 = vrsqrt.pop %v827
        %v836 = vrsqrt.pop %v828
        %v837 = vrsqrt.pop %v829
        %v838 = vmul.f32 %v774, %v830
        %v839 = vmul.f32 %v775, %v831
        %v840 = vmul.f32 %v776, %v832
        %v841 = vmul.f32 %v777, %v833
        %v842 = vmul.f32 %v778, %v834
        %v843 = vmul.f32 %v779, %v835
        %v844 = vmul.f32 %v780, %v836
        %v845 = vmul.f32 %v781, %v837
        %v846 = vpack.c.bf16 %v838, %v838
        %v847 = vpack.c.bf16 %v839, %v839
        %v848 = vpack.c.bf16 %v840, %v840
        %v849 = vpack.c.bf16 %v841, %v841
        %v850 = vpack.c.bf16 %v842, %v842
        %v851 = vpack.c.bf16 %v843, %v843
        %v852 = vpack.c.bf16 %v844, %v844
        %v853 = vpack.c.bf16 %v845, %v845
        %v854 = vld [vmem:[%s514] sm:$0xf]
        %v855 = vld [vmem:[%s518] sm:$0xff]
        %v857 = vsel %vm740, %v854, 0
        %v860 = vsel %vm740, %v846, 0
        %862 = vmatprep.subr.bf16.mxu0 0
        %863 = vmatpush1.bf16.xpose.msra.mxu0 %v860
        %864 = vmatprep.subr.bf16.mxu0 0
        %865 = vmatpush1.bf16.xpose.msra.mxu0 0
        %866 = vmatprep.subr.bf16.mxu0 0
        %867 = vmatpush1.bf16.xpose.msra.mxu0 0
        %868 = vmatprep.subr.bf16.mxu0 0
        %869 = vmatpush1.bf16.xpose.msra.mxu0 0
        %870 = vmatprep.subr.bf16.mxu0 0
        %871 = vmatpush1.bf16.xpose.msra.mxu0 0
        %872 = vmatprep.subr.bf16.mxu0 0
        %873 = vmatpush1.bf16.xpose.msra.mxu0 0
        %874 = vmatprep.subr.bf16.mxu0 0
        %875 = vmatpush1.bf16.xpose.msra.mxu0 0
        %876 = vmatprep.subr.bf16.mxu0 0
        %877 = vmatpush1.bf16.xpose.msra.mxu0 0
        %878 = vmatprep.subr.bf16.mxu0 0
        %879 = vmatpush1.bf16.xpose.msra.mxu0 0
        %880 = vmatprep.subr.bf16.mxu0 0
        %881 = vmatpush1.bf16.xpose.msra.mxu0 0
        %882 = vmatprep.subr.bf16.mxu0 0
        %883 = vmatpush1.bf16.xpose.msra.mxu0 0
        %884 = vmatprep.subr.bf16.mxu0 0
        %885 = vmatpush1.bf16.xpose.msra.mxu0 0
        %886 = vmatprep.subr.bf16.mxu0 0
        %887 = vmatpush1.bf16.xpose.msra.mxu0 0
        %888 = vmatprep.subr.bf16.mxu0 0
        %889 = vmatpush1.bf16.xpose.msra.mxu0 0
        %890 = vmatprep.subr.bf16.mxu0 0
        %891 = vmatpush1.bf16.xpose.msra.mxu0 0
        %892 = vmatprep.subr.bf16.mxu0 0
        %893 = vmatpush1.bf16.xpose.msra.mxu0 0
        %894 = vmatprep.mubr.bf16.mxu0 0
        %895 = vmatmul.mubr.bf16.gmra.mrb[0].mxu0 %v857
        %v896 = vpop.f32.mrb[0].mxu0
        %v897 = vadd.f32 %v855, %v896
        %v898 = vpop.f32.mrb[0].mxu0
        %v899 = vpop.f32.mrb[0].mxu0
        %v900 = vpop.f32.mrb[0].mxu0
        %901 = vdwg.mxu0
        %v903 = vsel %vm740, %v847, 0
        %905 = vmatprep.subr.bf16.mxu0 0
        %906 = vmatpush1.bf16.xpose.msra.mxu0 %v903
        %907 = vmatprep.subr.bf16.mxu0 0
        %908 = vmatpush1.bf16.xpose.msra.mxu0 0
        %909 = vmatprep.subr.bf16.mxu0 0
        %910 = vmatpush1.bf16.xpose.msra.mxu0 0
        %911 = vmatprep.subr.bf16.mxu0 0
        %912 = vmatpush1.bf16.xpose.msra.mxu0 0
        %913 = vmatprep.subr.bf16.mxu0 0
        %914 = vmatpush1.bf16.xpose.msra.mxu0 0
        %915 = vmatprep.subr.bf16.mxu0 0
        %916 = vmatpush1.bf16.xpose.msra.mxu0 0
        %917 = vmatprep.subr.bf16.mxu0 0
        %918 = vmatpush1.bf16.xpose.msra.mxu0 0
        %919 = vmatprep.subr.bf16.mxu0 0
        %920 = vmatpush1.bf16.xpose.msra.mxu0 0
        %921 = vmatprep.subr.bf16.mxu0 0
        %922 = vmatpush1.bf16.xpose.msra.mxu0 0
        %923 = vmatprep.subr.bf16.mxu0 0
        %924 = vmatpush1.bf16.xpose.msra.mxu0 0
        %925 = vmatprep.subr.bf16.mxu0 0
        %926 = vmatpush1.bf16.xpose.msra.mxu0 0
        %927 = vmatprep.subr.bf16.mxu0 0
        %928 = vmatpush1.bf16.xpose.msra.mxu0 0
        %929 = vmatprep.subr.bf16.mxu0 0
        %930 = vmatpush1.bf16.xpose.msra.mxu0 0
        %931 = vmatprep.subr.bf16.mxu0 0
        %932 = vmatpush1.bf16.xpose.msra.mxu0 0
        %933 = vmatprep.subr.bf16.mxu0 0
        %934 = vmatpush1.bf16.xpose.msra.mxu0 0
        %935 = vmatprep.subr.bf16.mxu0 0
        %936 = vmatpush1.bf16.xpose.msra.mxu0 0
        %937 = vmatprep.mubr.bf16.mxu0 0
        %938 = vmatmul.mubr.bf16.gmra.mrb[0].mxu0 %v857
        %v939 = vpop.f32.mrb[0].mxu0
        %v940 = vadd.f32 %v855, %v939
        %v941 = vpop.f32.mrb[0].mxu0
        %v942 = vpop.f32.mrb[0].mxu0
        %v943 = vpop.f32.mrb[0].mxu0
        %944 = vdwg.mxu0
        %v946 = vsel %vm740, %v848, 0
        %948 = vmatprep.subr.bf16.mxu0 0
        %949 = vmatpush1.bf16.xpose.msra.mxu0 %v946
        %950 = vmatprep.subr.bf16.mxu0 0
        %951 = vmatpush1.bf16.xpose.msra.mxu0 0
        %952 = vmatprep.subr.bf16.mxu0 0
        %953 = vmatpush1.bf16.xpose.msra.mxu0 0
        %954 = vmatprep.subr.bf16.mxu0 0
        %955 = vmatpush1.bf16.xpose.msra.mxu0 0
        %956 = vmatprep.subr.bf16.mxu0 0
        %957 = vmatpush1.bf16.xpose.msra.mxu0 0
        %958 = vmatprep.subr.bf16.mxu0 0
        %959 = vmatpush1.bf16.xpose.msra.mxu0 0
        %960 = vmatprep.subr.bf16.mxu0 0
        %961 = vmatpush1.bf16.xpose.msra.mxu0 0
        %962 = vmatprep.subr.bf16.mxu0 0
        %963 = vmatpush1.bf16.xpose.msra.mxu0 0
        %964 = vmatprep.subr.bf16.mxu0 0
        %965 = vmatpush1.bf16.xpose.msra.mxu0 0
        %966 = vmatprep.subr.bf16.mxu0 0
        %967 = vmatpush1.bf16.xpose.msra.mxu0 0
        %968 = vmatprep.subr.bf16.mxu0 0
        %969 = vmatpush1.bf16.xpose.msra.mxu0 0
        %970 = vmatprep.subr.bf16.mxu0 0
        %971 = vmatpush1.bf16.xpose.msra.mxu0 0
        %972 = vmatprep.subr.bf16.mxu0 0
        %973 = vmatpush1.bf16.xpose.msra.mxu0 0
        %974 = vmatprep.subr.bf16.mxu0 0
        %975 = vmatpush1.bf16.xpose.msra.mxu0 0
        %976 = vmatprep.subr.bf16.mxu0 0
        %977 = vmatpush1.bf16.xpose.msra.mxu0 0
        %978 = vmatprep.subr.bf16.mxu0 0
        %979 = vmatpush1.bf16.xpose.msra.mxu0 0
        %980 = vmatprep.mubr.bf16.mxu0 0
        %981 = vmatmul.mubr.bf16.gmra.mrb[0].mxu0 %v857
        %v982 = vpop.f32.mrb[0].mxu0
        %v983 = vadd.f32 %v855, %v982
        %v984 = vpop.f32.mrb[0].mxu0
        %v985 = vpop.f32.mrb[0].mxu0
        %v986 = vpop.f32.mrb[0].mxu0
        %987 = vdwg.mxu0
        %v989 = vsel %vm740, %v849, 0
        %991 = vmatprep.subr.bf16.mxu0 0
        %992 = vmatpush1.bf16.xpose.msra.mxu0 %v989
        %993 = vmatprep.subr.bf16.mxu0 0
        %994 = vmatpush1.bf16.xpose.msra.mxu0 0
        %995 = vmatprep.subr.bf16.mxu0 0
        %996 = vmatpush1.bf16.xpose.msra.mxu0 0
        %997 = vmatprep.subr.bf16.mxu0 0
        %998 = vmatpush1.bf16.xpose.msra.mxu0 0
        %999 = vmatprep.subr.bf16.mxu0 0
        %1000 = vmatpush1.bf16.xpose.msra.mxu0 0
        %1001 = vmatprep.subr.bf16.mxu0 0
        %1002 = vmatpush1.bf16.xpose.msra.mxu0 0
        %1003 = vmatprep.subr.bf16.mxu0 0
        %1004 = vmatpush1.bf16.xpose.msra.mxu0 0
        %1005 = vmatprep.subr.bf16.mxu0 0
        %1006 = vmatpush1.bf16.xpose.msra.mxu0 0
        %1007 = vmatprep.subr.bf16.mxu0 0
        %1008 = vmatpush1.bf16.xpose.msra.mxu0 0
        %1009 = vmatprep.subr.bf16.mxu0 0
        %1010 = vmatpush1.bf16.xpose.msra.mxu0 0
        %1011 = vmatprep.subr.bf16.mxu0 0
        %1012 = vmatpush1.bf16.xpose.msra.mxu0 0
        %1013 = vmatprep.subr.bf16.mxu0 0
        %1014 = vmatpush1.bf16.xpose.msra.mxu0 0
        %1015 = vmatprep.subr.bf16.mxu0 0
        %1016 = vmatpush1.bf16.xpose.msra.mxu0 0
        %1017 = vmatprep.subr.bf16.mxu0 0
        %1018 = vmatpush1.bf16.xpose.msra.mxu0 0
        %1019 = vmatprep.subr.bf16.mxu0 0
        %1020 = vmatpush1.bf16.xpose.msra.mxu0 0
        %1021 = vmatprep.subr.bf16.mxu0 0
        %1022 = vmatpush1.bf16.xpose.msra.mxu0 0
        %1023 = vmatprep.mubr.bf16.mxu0 0
        %1024 = vmatmul.mubr.bf16.gmra.mrb[0].mxu0 %v857
        %v1025 = vpop.f32.mrb[0].mxu0
        %v1026 = vadd.f32 %v855, %v1025
        %v1027 = vpop.f32.mrb[0].mxu0
        %v1028 = vpop.f32.mrb[0].mxu0
        %v1029 = vpop.f32.mrb[0].mxu0
        %1030 = vdwg.mxu0
        %v1032 = vsel %vm740, %v850, 0
        %1034 = vmatprep.subr.bf16.mxu0 0
        %1035 = vmatpush1.bf16.xpose.msra.mxu0 %v1032
        %1036 = vmatprep.subr.bf16.mxu0 0
        %1037 = vmatpush1.bf16.xpose.msra.mxu0 0
        %1038 = vmatprep.subr.bf16.mxu0 0
        %1039 = vmatpush1.bf16.xpose.msra.mxu0 0
        %1040 = vmatprep.subr.bf16.mxu0 0
        %1041 = vmatpush1.bf16.xpose.msra.mxu0 0
        %1042 = vmatprep.subr.bf16.mxu0 0
        %1043 = vmatpush1.bf16.xpose.msra.mxu0 0
        %1044 = vmatprep.subr.bf16.mxu0 0
        %1045 = vmatpush1.bf16.xpose.msra.mxu0 0
        %1046 = vmatprep.subr.bf16.mxu0 0
        %1047 = vmatpush1.bf16.xpose.msra.mxu0 0
        %1048 = vmatprep.subr.bf16.mxu0 0
        %1049 = vmatpush1.bf16.xpose.msra.mxu0 0
        %1050 = vmatprep.subr.bf16.mxu0 0
        %1051 = vmatpush1.bf16.xpose.msra.mxu0 0
        %1052 = vmatprep.subr.bf16.mxu0 0
        %1053 = vmatpush1.bf16.xpose.msra.mxu0 0
        %1054 = vmatprep.subr.bf16.mxu0 0
        %1055 = vmatpush1.bf16.xpose.msra.mxu0 0
        %1056 = vmatprep.subr.bf16.mxu0 0
        %1057 = vmatpush1.bf16.xpose.msra.mxu0 0
        %1058 = vmatprep.subr.bf16.mxu0 0
        %1059 = vmatpush1.bf16.xpose.msra.mxu0 0
        %1060 = vmatprep.subr.bf16.mxu0 0
        %1061 = vmatpush1.bf16.xpose.msra.mxu0 0
        %1062 = vmatprep.subr.bf16.mxu0 0
        %1063 = vmatpush1.bf16.xpose.msra.mxu0 0
        %1064 = vmatprep.subr.bf16.mxu0 0
        %1065 = vmatpush1.bf16.xpose.msra.mxu0 0
        %1066 = vmatprep.mubr.bf16.mxu0 0
        %1067 = vmatmul.mubr.bf16.gmra.mrb[0].mxu0 %v857
        %v1068 = vpop.f32.mrb[0].mxu0
        %v1069 = vadd.f32 %v855, %v1068
        %v1070 = vpop.f32.mrb[0].mxu0
        %v1071 = vpop.f32.mrb[0].mxu0
        %v1072 = vpop.f32.mrb[0].mxu0
        %1073 = vdwg.mxu0
        %v1075 = vsel %vm740, %v851, 0
        %1077 = vmatprep.subr.bf16.mxu0 0
        %1078 = vmatpush1.bf16.xpose.msra.mxu0 %v1075
        %1079 = vmatprep.subr.bf16.mxu0 0
        %1080 = vmatpush1.bf16.xpose.msra.mxu0 0
        %1081 = vmatprep.subr.bf16.mxu0 0
        %1082 = vmatpush1.bf16.xpose.msra.mxu0 0
        %1083 = vmatprep.subr.bf16.mxu0 0
        %1084 = vmatpush1.bf16.xpose.msra.mxu0 0
        %1085 = vmatprep.subr.bf16.mxu0 0
        %1086 = vmatpush1.bf16.xpose.msra.mxu0 0
        %1087 = vmatprep.subr.bf16.mxu0 0
        %1088 = vmatpush1.bf16.xpose.msra.mxu0 0
        %1089 = vmatprep.subr.bf16.mxu0 0
        %1090 = vmatpush1.bf16.xpose.msra.mxu0 0
        %1091 = vmatprep.subr.bf16.mxu0 0
        %1092 = vmatpush1.bf16.xpose.msra.mxu0 0
        %1093 = vmatprep.subr.bf16.mxu0 0
        %1094 = vmatpush1.bf16.xpose.msra.mxu0 0
        %1095 = vmatprep.subr.bf16.mxu0 0
        %1096 = vmatpush1.bf16.xpose.msra.mxu0 0
        %1097 = vmatprep.subr.bf16.mxu0 0
        %1098 = vmatpush1.bf16.xpose.msra.mxu0 0
        %1099 = vmatprep.subr.bf16.mxu0 0
        %1100 = vmatpush1.bf16.xpose.msra.mxu0 0
        %1101 = vmatprep.subr.bf16.mxu0 0
        %1102 = vmatpush1.bf16.xpose.msra.mxu0 0
        %1103 = vmatprep.subr.bf16.mxu0 0
        %1104 = vmatpush1.bf16.xpose.msra.mxu0 0
        %1105 = vmatprep.subr.bf16.mxu0 0
        %1106 = vmatpush1.bf16.xpose.msra.mxu0 0
        %1107 = vmatprep.subr.bf16.mxu0 0
        %1108 = vmatpush1.bf16.xpose.msra.mxu0 0
        %1109 = vmatprep.mubr.bf16.mxu0 0
        %1110 = vmatmul.mubr.bf16.gmra.mrb[0].mxu0 %v857
        %v1111 = vpop.f32.mrb[0].mxu0
        %v1112 = vadd.f32 %v855, %v1111
        %v1113 = vpop.f32.mrb[0].mxu0
        %v1114 = vpop.f32.mrb[0].mxu0
        %v1115 = vpop.f32.mrb[0].mxu0
        %1116 = vdwg.mxu0
        %v1118 = vsel %vm740, %v852, 0
        %1120 = vmatprep.subr.bf16.mxu0 0
        %1121 = vmatpush1.bf16.xpose.msra.mxu0 %v1118
        %1122 = vmatprep.subr.bf16.mxu0 0
        %1123 = vmatpush1.bf16.xpose.msra.mxu0 0
        %1124 = vmatprep.subr.bf16.mxu0 0
        %1125 = vmatpush1.bf16.xpose.msra.mxu0 0
        %1126 = vmatprep.subr.bf16.mxu0 0
        %1127 = vmatpush1.bf16.xpose.msra.mxu0 0
        %1128 = vmatprep.subr.bf16.mxu0 0
        %1129 = vmatpush1.bf16.xpose.msra.mxu0 0
        %1130 = vmatprep.subr.bf16.mxu0 0
        %1131 = vmatpush1.bf16.xpose.msra.mxu0 0
        %1132 = vmatprep.subr.bf16.mxu0 0
        %1133 = vmatpush1.bf16.xpose.msra.mxu0 0
        %1134 = vmatprep.subr.bf16.mxu0 0
        %1135 = vmatpush1.bf16.xpose.msra.mxu0 0
        %1136 = vmatprep.subr.bf16.mxu0 0
        %1137 = vmatpush1.bf16.xpose.msra.mxu0 0
        %1138 = vmatprep.subr.bf16.mxu0 0
        %1139 = vmatpush1.bf16.xpose.msra.mxu0 0
        %1140 = vmatprep.subr.bf16.mxu0 0
        %1141 = vmatpush1.bf16.xpose.msra.mxu0 0
        %1142 = vmatprep.subr.bf16.mxu0 0
        %1143 = vmatpush1.bf16.xpose.msra.mxu0 0
        %1144 = vmatprep.subr.bf16.mxu0 0
        %1145 = vmatpush1.bf16.xpose.msra.mxu0 0
        %1146 = vmatprep.subr.bf16.mxu0 0
        %1147 = vmatpush1.bf16.xpose.msra.mxu0 0
        %1148 = vmatprep.subr.bf16.mxu0 0
        %1149 = vmatpush1.bf16.xpose.msra.mxu0 0
        %1150 = vmatprep.subr.bf16.mxu0 0
        %1151 = vmatpush1.bf16.xpose.msra.mxu0 0
        %1152 = vmatprep.mubr.bf16.mxu0 0
        %1153 = vmatmul.mubr.bf16.gmra.mrb[0].mxu0 %v857
        %v1154 = vpop.f32.mrb[0].mxu0
        %v1155 = vadd.f32 %v855, %v1154
        %v1156 = vpop.f32.mrb[0].mxu0
        %v1157 = vpop.f32.mrb[0].mxu0
        %v1158 = vpop.f32.mrb[0].mxu0
        %1159 = vdwg.mxu0
        %v1161 = vsel %vm740, %v853, 0
        %1163 = vmatprep.subr.bf16.mxu0 0
        %1164 = vmatpush1.bf16.xpose.msra.mxu0 %v1161
        %1165 = vmatprep.subr.bf16.mxu0 0
        %1166 = vmatpush1.bf16.xpose.msra.mxu0 0
        %1167 = vmatprep.subr.bf16.mxu0 0
        %1168 = vmatpush1.bf16.xpose.msra.mxu0 0
        %1169 = vmatprep.subr.bf16.mxu0 0
        %1170 = vmatpush1.bf16.xpose.msra.mxu0 0
        %1171 = vmatprep.subr.bf16.mxu0 0
        %1172 = vmatpush1.bf16.xpose.msra.mxu0 0
        %1173 = vmatprep.subr.bf16.mxu0 0
        %1174 = vmatpush1.bf16.xpose.msra.mxu0 0
        %1175 = vmatprep.subr.bf16.mxu0 0
        %1176 = vmatpush1.bf16.xpose.msra.mxu0 0
        %1177 = vmatprep.subr.bf16.mxu0 0
        %1178 = vmatpush1.bf16.xpose.msra.mxu0 0
        %1179 = vmatprep.subr.bf16.mxu0 0
        %1180 = vmatpush1.bf16.xpose.msra.mxu0 0
        %1181 = vmatprep.subr.bf16.mxu0 0
        %1182 = vmatpush1.bf16.xpose.msra.mxu0 0
        %1183 = vmatprep.subr.bf16.mxu0 0
        %1184 = vmatpush1.bf16.xpose.msra.mxu0 0
        %1185 = vmatprep.subr.bf16.mxu0 0
        %1186 = vmatpush1.bf16.xpose.msra.mxu0 0
        %1187 = vmatprep.subr.bf16.mxu0 0
        %1188 = vmatpush1.bf16.xpose.msra.mxu0 0
        %1189 = vmatprep.subr.bf16.mxu0 0
        %1190 = vmatpush1.bf16.xpose.msra.mxu0 0
        %1191 = vmatprep.subr.bf16.mxu0 0
        %1192 = vmatpush1.bf16.xpose.msra.mxu0 0
        %1193 = vmatprep.subr.bf16.mxu0 0
        %1194 = vmatpush1.bf16.xpose.msra.mxu0 0
        %1195 = vmatprep.mubr.bf16.mxu0 0
        %1196 = vmatmul.mubr.bf16.gmra.mrb[0].mxu0 %v857
        %v1197 = vpop.f32.mrb[0].mxu0
        %v1198 = vadd.f32 %v855, %v1197
        %v1199 = vpop.f32.mrb[0].mxu0
        %v1200 = vpop.f32.mrb[0].mxu0
        %v1201 = vpop.f32.mrb[0].mxu0
        %1202 = vdwg.mxu0
        %vm1203 = vcmask 64512
        %v1204 = vsel %vm1203, %v897, -inf
        %1205 = vmax.xlane.f32.xlu0 %v1204
        %v1206 = vpop.xlane.xlu0 %1205
        %v1207 = vsel %vm1203, %v940, -inf
        %1208 = vmax.xlane.f32.xlu0 %v1207
        %v1209 = vpop.xlane.xlu0 %1208
        %v1210 = vsel %vm1203, %v983, -inf
        %1211 = vmax.xlane.f32.xlu0 %v1210
        %v1212 = vpop.xlane.xlu0 %1211
        %v1213 = vsel %vm1203, %v1026, -inf
        %1214 = vmax.xlane.f32.xlu0 %v1213
        %v1215 = vpop.xlane.xlu0 %1214
        %v1216 = vsel %vm1203, %v1069, -inf
        %1217 = vmax.xlane.f32.xlu0 %v1216
        %v1218 = vpop.xlane.xlu0 %1217
        %v1219 = vsel %vm1203, %v1112, -inf
        %1220 = vmax.xlane.f32.xlu0 %v1219
        %v1221 = vpop.xlane.xlu0 %1220
        %v1222 = vsel %vm1203, %v1155, -inf
        %1223 = vmax.xlane.f32.xlu0 %v1222
        %v1224 = vpop.xlane.xlu0 %1223
        %v1225 = vsel %vm1203, %v1198, -inf
        %1226 = vmax.xlane.f32.xlu0 %v1225
        %v1227 = vpop.xlane.xlu0 %1226
        %v1228 = vsub.f32 %v897, %v1206
        %v1229 = vsub.f32 %v940, %v1209
        %v1230 = vsub.f32 %v983, %v1212
        %v1231 = vsub.f32 %v1026, %v1215
        %v1232 = vsub.f32 %v1069, %v1218
        %v1233 = vsub.f32 %v1112, %v1221
        %v1234 = vsub.f32 %v1155, %v1224
        %v1235 = vsub.f32 %v1198, %v1227
        %v1236 = vmul.f32 %v1228, 1.442695
        %v1237 = vpow.pop %v1236
        %v1238 = vmul.f32 %v1229, 1.442695
        %v1239 = vpow.pop %v1238
        %v1240 = vmul.f32 %v1230, 1.442695
        %v1241 = vpow.pop %v1240
        %v1242 = vmul.f32 %v1231, 1.442695
        %v1243 = vpow.pop %v1242
        %v1244 = vmul.f32 %v1232, 1.442695
        %v1245 = vpow.pop %v1244
        %v1246 = vmul.f32 %v1233, 1.442695
        %v1247 = vpow.pop %v1246
        %v1248 = vmul.f32 %v1234, 1.442695
        %v1249 = vpow.pop %v1248
        %v1250 = vmul.f32 %v1235, 1.442695
        %v1251 = vpow.pop %v1250
        %v1252 = vsel %vm1203, %v1237, 0.0
        %1253 = vadd.xlane.f32.xlu0 %v1252
        %v1254 = vpop.xlane.xlu0 %1253
        %v1255 = vsel %vm1203, %v1239, 0.0
        %1256 = vadd.xlane.f32.xlu0 %v1255
        %v1257 = vpop.xlane.xlu0 %1256
        %v1258 = vsel %vm1203, %v1241, 0.0
        %1259 = vadd.xlane.f32.xlu0 %v1258
        %v1260 = vpop.xlane.xlu0 %1259
        %v1261 = vsel %vm1203, %v1243, 0.0
        %1262 = vadd.xlane.f32.xlu0 %v1261
        %v1263 = vpop.xlane.xlu0 %1262
        %v1264 = vsel %vm1203, %v1245, 0.0
        %1265 = vadd.xlane.f32.xlu0 %v1264
        %v1266 = vpop.xlane.xlu0 %1265
        %v1267 = vsel %vm1203, %v1247, 0.0
        %1268 = vadd.xlane.f32.xlu0 %v1267
        %v1269 = vpop.xlane.xlu0 %1268
        %v1270 = vsel %vm1203, %v1249, 0.0
        %1271 = vadd.xlane.f32.xlu0 %v1270
        %v1272 = vpop.xlane.xlu0 %1271
        %v1273 = vsel %vm1203, %v1251, 0.0
        %1274 = vadd.xlane.f32.xlu0 %v1273
        %v1275 = vpop.xlane.xlu0 %1274
        %v1276 = vpack.c.bf16 %v1237, %v1237
        %v1277 = vpack.c.bf16 %v1239, %v1239
        %v1278 = vpack.c.bf16 %v1241, %v1241
        %v1279 = vpack.c.bf16 %v1243, %v1243
        %v1280 = vpack.c.bf16 %v1245, %v1245
        %v1281 = vpack.c.bf16 %v1247, %v1247
        %v1282 = vpack.c.bf16 %v1249, %v1249
        %v1283 = vpack.c.bf16 %v1251, %v1251
        %v1285 = vsel %vm1203, %v1276, 0
        %vm1287 = vcmask 1043456
        %v1288 = vsel %vm1287, %v846, 0
        %1290 = vmatprep.subr.bf16.mxu0 0
        %1291 = vmatpush1.bf16.msra.mxu0 %v1288
        %1292 = vmatprep.subr.bf16.mxu0 0
        %1293 = vmatpush1.bf16.msra.mxu0 0
        %1294 = vmatprep.subr.bf16.mxu0 0
        %1295 = vmatpush1.bf16.msra.mxu0 0
        %1296 = vmatprep.subr.bf16.mxu0 0
        %1297 = vmatpush1.bf16.msra.mxu0 0
        %1298 = vmatprep.subr.bf16.mxu0 0
        %1299 = vmatpush1.bf16.msra.mxu0 0
        %1300 = vmatprep.subr.bf16.mxu0 0
        %1301 = vmatpush1.bf16.msra.mxu0 0
        %1302 = vmatprep.subr.bf16.mxu0 0
        %1303 = vmatpush1.bf16.msra.mxu0 0
        %1304 = vmatprep.subr.bf16.mxu0 0
        %1305 = vmatpush1.bf16.msra.mxu0 0
        %1306 = vmatprep.subr.bf16.mxu0 0
        %1307 = vmatpush1.bf16.msra.mxu0 0
        %1308 = vmatprep.subr.bf16.mxu0 0
        %1309 = vmatpush1.bf16.msra.mxu0 0
        %1310 = vmatprep.subr.bf16.mxu0 0
        %1311 = vmatpush1.bf16.msra.mxu0 0
        %1312 = vmatprep.subr.bf16.mxu0 0
        %1313 = vmatpush1.bf16.msra.mxu0 0
        %1314 = vmatprep.subr.bf16.mxu0 0
        %1315 = vmatpush1.bf16.msra.mxu0 0
        %1316 = vmatprep.subr.bf16.mxu0 0
        %1317 = vmatpush1.bf16.msra.mxu0 0
        %1318 = vmatprep.subr.bf16.mxu0 0
        %1319 = vmatpush1.bf16.msra.mxu0 0
        %1320 = vmatprep.subr.bf16.mxu0 0
        %1321 = vmatpush1.bf16.msra.mxu0 0
        %1322 = vmatprep.mubr.bf16.mxu0 0
        %1323 = vmatmul.mubr.bf16.gmra.mrb[0].mxu0 %v1285
        %v1324 = vpop.f32.mrb[0].mxu0
        %v1325 = vadd.f32 0.0, %v1324
        %v1326 = vpop.f32.mrb[0].mxu0
        %v1327 = vpop.f32.mrb[0].mxu0
        %v1328 = vpop.f32.mrb[0].mxu0
        %1329 = vdwg.mxu0
        %v1331 = vsel %vm1203, %v1277, 0
        %v1333 = vsel %vm1287, %v847, 0
        %1335 = vmatprep.subr.bf16.mxu0 0
        %1336 = vmatpush1.bf16.msra.mxu0 %v1333
        %1337 = vmatprep.subr.bf16.mxu0 0
        %1338 = vmatpush1.bf16.msra.mxu0 0
        %1339 = vmatprep.subr.bf16.mxu0 0
        %1340 = vmatpush1.bf16.msra.mxu0 0
        %1341 = vmatprep.subr.bf16.mxu0 0
        %1342 = vmatpush1.bf16.msra.mxu0 0
        %1343 = vmatprep.subr.bf16.mxu0 0
        %1344 = vmatpush1.bf16.msra.mxu0 0
        %1345 = vmatprep.subr.bf16.mxu0 0
        %1346 = vmatpush1.bf16.msra.mxu0 0
        %1347 = vmatprep.subr.bf16.mxu0 0
        %1348 = vmatpush1.bf16.msra.mxu0 0
        %1349 = vmatprep.subr.bf16.mxu0 0
        %1350 = vmatpush1.bf16.msra.mxu0 0
        %1351 = vmatprep.subr.bf16.mxu0 0
        %1352 = vmatpush1.bf16.msra.mxu0 0
        %1353 = vmatprep.subr.bf16.mxu0 0
        %1354 = vmatpush1.bf16.msra.mxu0 0
        %1355 = vmatprep.subr.bf16.mxu0 0
        %1356 = vmatpush1.bf16.msra.mxu0 0
        %1357 = vmatprep.subr.bf16.mxu0 0
        %1358 = vmatpush1.bf16.msra.mxu0 0
        %1359 = vmatprep.subr.bf16.mxu0 0
        %1360 = vmatpush1.bf16.msra.mxu0 0
        %1361 = vmatprep.subr.bf16.mxu0 0
        %1362 = vmatpush1.bf16.msra.mxu0 0
        %1363 = vmatprep.subr.bf16.mxu0 0
        %1364 = vmatpush1.bf16.msra.mxu0 0
        %1365 = vmatprep.subr.bf16.mxu0 0
        %1366 = vmatpush1.bf16.msra.mxu0 0
        %1367 = vmatprep.mubr.bf16.mxu0 0
        %1368 = vmatmul.mubr.bf16.gmra.mrb[0].mxu0 %v1331
        %v1369 = vpop.f32.mrb[0].mxu0
        %v1370 = vadd.f32 0.0, %v1369
        %v1371 = vpop.f32.mrb[0].mxu0
        %v1372 = vpop.f32.mrb[0].mxu0
        %v1373 = vpop.f32.mrb[0].mxu0
        %1374 = vdwg.mxu0
        %v1376 = vsel %vm1203, %v1278, 0
        %v1378 = vsel %vm1287, %v848, 0
        %1380 = vmatprep.subr.bf16.mxu0 0
        %1381 = vmatpush1.bf16.msra.mxu0 %v1378
        %1382 = vmatprep.subr.bf16.mxu0 0
        %1383 = vmatpush1.bf16.msra.mxu0 0
        %1384 = vmatprep.subr.bf16.mxu0 0
        %1385 = vmatpush1.bf16.msra.mxu0 0
        %1386 = vmatprep.subr.bf16.mxu0 0
        %1387 = vmatpush1.bf16.msra.mxu0 0
        %1388 = vmatprep.subr.bf16.mxu0 0
        %1389 = vmatpush1.bf16.msra.mxu0 0
        %1390 = vmatprep.subr.bf16.mxu0 0
        %1391 = vmatpush1.bf16.msra.mxu0 0
        %1392 = vmatprep.subr.bf16.mxu0 0
        %1393 = vmatpush1.bf16.msra.mxu0 0
        %1394 = vmatprep.subr.bf16.mxu0 0
        %1395 = vmatpush1.bf16.msra.mxu0 0
        %1396 = vmatprep.subr.bf16.mxu0 0
        %1397 = vmatpush1.bf16.msra.mxu0 0
        %1398 = vmatprep.subr.bf16.mxu0 0
        %1399 = vmatpush1.bf16.msra.mxu0 0
        %1400 = vmatprep.subr.bf16.mxu0 0
        %1401 = vmatpush1.bf16.msra.mxu0 0
        %1402 = vmatprep.subr.bf16.mxu0 0
        %1403 = vmatpush1.bf16.msra.mxu0 0
        %1404 = vmatprep.subr.bf16.mxu0 0
        %1405 = vmatpush1.bf16.msra.mxu0 0
        %1406 = vmatprep.subr.bf16.mxu0 0
        %1407 = vmatpush1.bf16.msra.mxu0 0
        %1408 = vmatprep.subr.bf16.mxu0 0
        %1409 = vmatpush1.bf16.msra.mxu0 0
        %1410 = vmatprep.subr.bf16.mxu0 0
        %1411 = vmatpush1.bf16.msra.mxu0 0
        %1412 = vmatprep.mubr.bf16.mxu0 0
        %1413 = vmatmul.mubr.bf16.gmra.mrb[0].mxu0 %v1376
        %v1414 = vpop.f32.mrb[0].mxu0
        %v1415 = vadd.f32 0.0, %v1414
        %v1416 = vpop.f32.mrb[0].mxu0
        %v1417 = vpop.f32.mrb[0].mxu0
        %v1418 = vpop.f32.mrb[0].mxu0
        %1419 = vdwg.mxu0
        %v1421 = vsel %vm1203, %v1279, 0
        %v1423 = vsel %vm1287, %v849, 0
        %1425 = vmatprep.subr.bf16.mxu0 0
        %1426 = vmatpush1.bf16.msra.mxu0 %v1423
        %1427 = vmatprep.subr.bf16.mxu0 0
        %1428 = vmatpush1.bf16.msra.mxu0 0
        %1429 = vmatprep.subr.bf16.mxu0 0
        %1430 = vmatpush1.bf16.msra.mxu0 0
        %1431 = vmatprep.subr.bf16.mxu0 0
        %1432 = vmatpush1.bf16.msra.mxu0 0
        %1433 = vmatprep.subr.bf16.mxu0 0
        %1434 = vmatpush1.bf16.msra.mxu0 0
        %1435 = vmatprep.subr.bf16.mxu0 0
        %1436 = vmatpush1.bf16.msra.mxu0 0
        %1437 = vmatprep.subr.bf16.mxu0 0
        %1438 = vmatpush1.bf16.msra.mxu0 0
        %1439 = vmatprep.subr.bf16.mxu0 0
        %1440 = vmatpush1.bf16.msra.mxu0 0
        %1441 = vmatprep.subr.bf16.mxu0 0
        %1442 = vmatpush1.bf16.msra.mxu0 0
        %1443 = vmatprep.subr.bf16.mxu0 0
        %1444 = vmatpush1.bf16.msra.mxu0 0
        %1445 = vmatprep.subr.bf16.mxu0 0
        %1446 = vmatpush1.bf16.msra.mxu0 0
        %1447 = vmatprep.subr.bf16.mxu0 0
        %1448 = vmatpush1.bf16.msra.mxu0 0
        %1449 = vmatprep.subr.bf16.mxu0 0
        %1450 = vmatpush1.bf16.msra.mxu0 0
        %1451 = vmatprep.subr.bf16.mxu0 0
        %1452 = vmatpush1.bf16.msra.mxu0 0
        %1453 = vmatprep.subr.bf16.mxu0 0
        %1454 = vmatpush1.bf16.msra.mxu0 0
        %1455 = vmatprep.subr.bf16.mxu0 0
        %1456 = vmatpush1.bf16.msra.mxu0 0
        %1457 = vmatprep.mubr.bf16.mxu0 0
        %1458 = vmatmul.mubr.bf16.gmra.mrb[0].mxu0 %v1421
        %v1459 = vpop.f32.mrb[0].mxu0
        %v1460 = vadd.f32 0.0, %v1459
        %v1461 = vpop.f32.mrb[0].mxu0
        %v1462 = vpop.f32.mrb[0].mxu0
        %v1463 = vpop.f32.mrb[0].mxu0
        %1464 = vdwg.mxu0
        %v1466 = vsel %vm1203, %v1280, 0
        %v1468 = vsel %vm1287, %v850, 0
        %1470 = vmatprep.subr.bf16.mxu0 0
        %1471 = vmatpush1.bf16.msra.mxu0 %v1468
        %1472 = vmatprep.subr.bf16.mxu0 0
        %1473 = vmatpush1.bf16.msra.mxu0 0
        %1474 = vmatprep.subr.bf16.mxu0 0
        %1475 = vmatpush1.bf16.msra.mxu0 0
        %1476 = vmatprep.subr.bf16.mxu0 0
        %1477 = vmatpush1.bf16.msra.mxu0 0
        %1478 = vmatprep.subr.bf16.mxu0 0
        %1479 = vmatpush1.bf16.msra.mxu0 0
        %1480 = vmatprep.subr.bf16.mxu0 0
        %1481 = vmatpush1.bf16.msra.mxu0 0
        %1482 = vmatprep.subr.bf16.mxu0 0
        %1483 = vmatpush1.bf16.msra.mxu0 0
        %1484 = vmatprep.subr.bf16.mxu0 0
        %1485 = vmatpush1.bf16.msra.mxu0 0
        %1486 = vmatprep.subr.bf16.mxu0 0
        %1487 = vmatpush1.bf16.msra.mxu0 0
        %1488 = vmatprep.subr.bf16.mxu0 0
        %1489 = vmatpush1.bf16.msra.mxu0 0
        %1490 = vmatprep.subr.bf16.mxu0 0
        %1491 = vmatpush1.bf16.msra.mxu0 0
        %1492 = vmatprep.subr.bf16.mxu0 0
        %1493 = vmatpush1.bf16.msra.mxu0 0
        %1494 = vmatprep.subr.bf16.mxu0 0
        %1495 = vmatpush1.bf16.msra.mxu0 0
        %1496 = vmatprep.subr.bf16.mxu0 0
        %1497 = vmatpush1.bf16.msra.mxu0 0
        %1498 = vmatprep.subr.bf16.mxu0 0
        %1499 = vmatpush1.bf16.msra.mxu0 0
        %1500 = vmatprep.subr.bf16.mxu0 0
        %1501 = vmatpush1.bf16.msra.mxu0 0
        %1502 = vmatprep.mubr.bf16.mxu0 0
        %1503 = vmatmul.mubr.bf16.gmra.mrb[0].mxu0 %v1466
        %v1504 = vpop.f32.mrb[0].mxu0
        %v1505 = vadd.f32 0.0, %v1504
        %v1506 = vpop.f32.mrb[0].mxu0
        %v1507 = vpop.f32.mrb[0].mxu0
        %v1508 = vpop.f32.mrb[0].mxu0
        %1509 = vdwg.mxu0
        %v1511 = vsel %vm1203, %v1281, 0
        %v1513 = vsel %vm1287, %v851, 0
        %1515 = vmatprep.subr.bf16.mxu0 0
        %1516 = vmatpush1.bf16.msra.mxu0 %v1513
        %1517 = vmatprep.subr.bf16.mxu0 0
        %1518 = vmatpush1.bf16.msra.mxu0 0
        %1519 = vmatprep.subr.bf16.mxu0 0
        %1520 = vmatpush1.bf16.msra.mxu0 0
        %1521 = vmatprep.subr.bf16.mxu0 0
        %1522 = vmatpush1.bf16.msra.mxu0 0
        %1523 = vmatprep.subr.bf16.mxu0 0
        %1524 = vmatpush1.bf16.msra.mxu0 0
        %1525 = vmatprep.subr.bf16.mxu0 0
        %1526 = vmatpush1.bf16.msra.mxu0 0
        %1527 = vmatprep.subr.bf16.mxu0 0
        %1528 = vmatpush1.bf16.msra.mxu0 0
        %1529 = vmatprep.subr.bf16.mxu0 0
        %1530 = vmatpush1.bf16.msra.mxu0 0
        %1531 = vmatprep.subr.bf16.mxu0 0
        %1532 = vmatpush1.bf16.msra.mxu0 0
        %1533 = vmatprep.subr.bf16.mxu0 0
        %1534 = vmatpush1.bf16.msra.mxu0 0
        %1535 = vmatprep.subr.bf16.mxu0 0
        %1536 = vmatpush1.bf16.msra.mxu0 0
        %1537 = vmatprep.subr.bf16.mxu0 0
        %1538 = vmatpush1.bf16.msra.mxu0 0
        %1539 = vmatprep.subr.bf16.mxu0 0
        %1540 = vmatpush1.bf16.msra.mxu0 0
        %1541 = vmatprep.subr.bf16.mxu0 0
        %1542 = vmatpush1.bf16.msra.mxu0 0
        %1543 = vmatprep.subr.bf16.mxu0 0
        %1544 = vmatpush1.bf16.msra.mxu0 0
        %1545 = vmatprep.subr.bf16.mxu0 0
        %1546 = vmatpush1.bf16.msra.mxu0 0
        %1547 = vmatprep.mubr.bf16.mxu0 0
        %1548 = vmatmul.mubr.bf16.gmra.mrb[0].mxu0 %v1511
        %v1549 = vpop.f32.mrb[0].mxu0
        %v1550 = vadd.f32 0.0, %v1549
        %v1551 = vpop.f32.mrb[0].mxu0
        %v1552 = vpop.f32.mrb[0].mxu0
        %v1553 = vpop.f32.mrb[0].mxu0
        %1554 = vdwg.mxu0
        %v1556 = vsel %vm1203, %v1282, 0
        %v1558 = vsel %vm1287, %v852, 0
        %1560 = vmatprep.subr.bf16.mxu0 0
        %1561 = vmatpush1.bf16.msra.mxu0 %v1558
        %1562 = vmatprep.subr.bf16.mxu0 0
        %1563 = vmatpush1.bf16.msra.mxu0 0
        %1564 = vmatprep.subr.bf16.mxu0 0
        %1565 = vmatpush1.bf16.msra.mxu0 0
        %1566 = vmatprep.subr.bf16.mxu0 0
        %1567 = vmatpush1.bf16.msra.mxu0 0
        %1568 = vmatprep.subr.bf16.mxu0 0
        %1569 = vmatpush1.bf16.msra.mxu0 0
        %1570 = vmatprep.subr.bf16.mxu0 0
        %1571 = vmatpush1.bf16.msra.mxu0 0
        %1572 = vmatprep.subr.bf16.mxu0 0
        %1573 = vmatpush1.bf16.msra.mxu0 0
        %1574 = vmatprep.subr.bf16.mxu0 0
        %1575 = vmatpush1.bf16.msra.mxu0 0
        %1576 = vmatprep.subr.bf16.mxu0 0
        %1577 = vmatpush1.bf16.msra.mxu0 0
        %1578 = vmatprep.subr.bf16.mxu0 0
        %1579 = vmatpush1.bf16.msra.mxu0 0
        %1580 = vmatprep.subr.bf16.mxu0 0
        %1581 = vmatpush1.bf16.msra.mxu0 0
        %1582 = vmatprep.subr.bf16.mxu0 0
        %1583 = vmatpush1.bf16.msra.mxu0 0
        %1584 = vmatprep.subr.bf16.mxu0 0
        %1585 = vmatpush1.bf16.msra.mxu0 0
        %1586 = vmatprep.subr.bf16.mxu0 0
        %1587 = vmatpush1.bf16.msra.mxu0 0
        %1588 = vmatprep.subr.bf16.mxu0 0
        %1589 = vmatpush1.bf16.msra.mxu0 0
        %1590 = vmatprep.subr.bf16.mxu0 0
        %1591 = vmatpush1.bf16.msra.mxu0 0
        %1592 = vmatprep.mubr.bf16.mxu0 0
        %1593 = vmatmul.mubr.bf16.gmra.mrb[0].mxu0 %v1556
        %v1594 = vpop.f32.mrb[0].mxu0
        %v1595 = vadd.f32 0.0, %v1594
        %v1596 = vpop.f32.mrb[0].mxu0
        %v1597 = vpop.f32.mrb[0].mxu0
        %v1598 = vpop.f32.mrb[0].mxu0
        %1599 = vdwg.mxu0
        %v1601 = vsel %vm1203, %v1283, 0
        %v1603 = vsel %vm1287, %v853, 0
        %1605 = vmatprep.subr.bf16.mxu0 0
        %1606 = vmatpush1.bf16.msra.mxu0 %v1603
        %1607 = vmatprep.subr.bf16.mxu0 0
        %1608 = vmatpush1.bf16.msra.mxu0 0
        %1609 = vmatprep.subr.bf16.mxu0 0
        %1610 = vmatpush1.bf16.msra.mxu0 0
        %1611 = vmatprep.subr.bf16.mxu0 0
        %1612 = vmatpush1.bf16.msra.mxu0 0
        %1613 = vmatprep.subr.bf16.mxu0 0
        %1614 = vmatpush1.bf16.msra.mxu0 0
        %1615 = vmatprep.subr.bf16.mxu0 0
        %1616 = vmatpush1.bf16.msra.mxu0 0
        %1617 = vmatprep.subr.bf16.mxu0 0
        %1618 = vmatpush1.bf16.msra.mxu0 0
        %1619 = vmatprep.subr.bf16.mxu0 0
        %1620 = vmatpush1.bf16.msra.mxu0 0
        %1621 = vmatprep.subr.bf16.mxu0 0
        %1622 = vmatpush1.bf16.msra.mxu0 0
        %1623 = vmatprep.subr.bf16.mxu0 0
        %1624 = vmatpush1.bf16.msra.mxu0 0
        %1625 = vmatprep.subr.bf16.mxu0 0
        %1626 = vmatpush1.bf16.msra.mxu0 0
        %1627 = vmatprep.subr.bf16.mxu0 0
        %1628 = vmatpush1.bf16.msra.mxu0 0
        %1629 = vmatprep.subr.bf16.mxu0 0
        %1630 = vmatpush1.bf16.msra.mxu0 0
        %1631 = vmatprep.subr.bf16.mxu0 0
        %1632 = vmatpush1.bf16.msra.mxu0 0
        %1633 = vmatprep.subr.bf16.mxu0 0
        %1634 = vmatpush1.bf16.msra.mxu0 0
        %1635 = vmatprep.subr.bf16.mxu0 0
        %1636 = vmatpush1.bf16.msra.mxu0 0
        %1637 = vmatprep.mubr.bf16.mxu0 0
        %1638 = vmatmul.mubr.bf16.gmra.mrb[0].mxu0 %v1601
        %v1639 = vpop.f32.mrb[0].mxu0
        %v1640 = vadd.f32 0.0, %v1639
        %v1641 = vpop.f32.mrb[0].mxu0
        %v1642 = vpop.f32.mrb[0].mxu0
        %v1643 = vpop.f32.mrb[0].mxu0
        %1644 = vdwg.mxu0
        %v1645 = vrcp.pop %v1254
        %v1646 = vmul.f32 1.0, %v1645
        %v1647 = vrcp.pop %v1257
        %v1648 = vmul.f32 1.0, %v1647
        %v1649 = vrcp.pop %v1260
        %v1650 = vmul.f32 1.0, %v1649
        %v1651 = vrcp.pop %v1263
        %v1652 = vmul.f32 1.0, %v1651
        %v1653 = vrcp.pop %v1266
        %v1654 = vmul.f32 1.0, %v1653
        %v1655 = vrcp.pop %v1269
        %v1656 = vmul.f32 1.0, %v1655
        %v1657 = vrcp.pop %v1272
        %v1658 = vmul.f32 1.0, %v1657
        %v1659 = vrcp.pop %v1275
        %v1660 = vmul.f32 1.0, %v1659
        %v1661 = vmul.f32 %v1325, %v1646
        %v1662 = vmul.f32 %v1370, %v1648
        %v1663 = vmul.f32 %v1415, %v1650
        %v1664 = vmul.f32 %v1460, %v1652
        %v1665 = vmul.f32 %v1505, %v1654
        %v1666 = vmul.f32 %v1550, %v1656
        %v1667 = vmul.f32 %v1595, %v1658
        %v1668 = vmul.f32 %v1640, %v1660
        %v1669 = vadd.f32 %v732, %v1661
        %v1670 = vadd.f32 %v733, %v1662
        %v1671 = vadd.f32 %v734, %v1663
        %v1672 = vadd.f32 %v735, %v1664
        %v1673 = vadd.f32 %v736, %v1665
        %v1674 = vadd.f32 %v737, %v1666
        %v1675 = vadd.f32 %v738, %v1667
        %v1676 = vadd.f32 %v739, %v1668
        %v1677 = vsel %vm740, %v1669, 0.0
        %1678 = vadd.xlane.f32.xlu0 %v1677
        %v1679 = vpop.xlane.xlu0 %1678
        %v1680 = vsel %vm740, %v1670, 0.0
        %1681 = vadd.xlane.f32.xlu0 %v1680
        %v1682 = vpop.xlane.xlu0 %1681
        %v1683 = vsel %vm740, %v1671, 0.0
        %1684 = vadd.xlane.f32.xlu0 %v1683
        %v1685 = vpop.xlane.xlu0 %1684
        %v1686 = vsel %vm740, %v1672, 0.0
        %1687 = vadd.xlane.f32.xlu0 %v1686
        %v1688 = vpop.xlane.xlu0 %1687
        %v1689 = vsel %vm740, %v1673, 0.0
        %1690 = vadd.xlane.f32.xlu0 %v1689
        %v1691 = vpop.xlane.xlu0 %1690
        %v1692 = vsel %vm740, %v1674, 0.0
        %1693 = vadd.xlane.f32.xlu0 %v1692
        %v1694 = vpop.xlane.xlu0 %1693
        %v1695 = vsel %vm740, %v1675, 0.0
        %1696 = vadd.xlane.f32.xlu0 %v1695
        %v1697 = vpop.xlane.xlu0 %1696
        %v1698 = vsel %vm740, %v1676, 0.0
        %1699 = vadd.xlane.f32.xlu0 %v1698
        %v1700 = vpop.xlane.xlu0 %1699
        %v1701 = vmul.f32 %v1679, %v765
        %v1702 = vmul.f32 %v1682, %v765
        %v1703 = vmul.f32 %v1685, %v765
        %v1704 = vmul.f32 %v1688, %v765
        %v1705 = vmul.f32 %v1691, %v765
        %v1706 = vmul.f32 %v1694, %v765
        %v1707 = vmul.f32 %v1697, %v765
        %v1708 = vmul.f32 %v1700, %v765
        %v1709 = vsub.f32 %v1669, %v1701
        %v1710 = vsub.f32 %v1670, %v1702
        %v1711 = vsub.f32 %v1671, %v1703
        %v1712 = vsub.f32 %v1672, %v1704
        %v1713 = vsub.f32 %v1673, %v1705
        %v1714 = vsub.f32 %v1674, %v1706
        %v1715 = vsub.f32 %v1675, %v1707
        %v1716 = vsub.f32 %v1676, %v1708
        %v1717 = vmul.f32 %v1709, %v1709
        %v1718 = vmul.f32 %v1710, %v1710
        %v1719 = vmul.f32 %v1711, %v1711
        %v1720 = vmul.f32 %v1712, %v1712
        %v1721 = vmul.f32 %v1713, %v1713
        %v1722 = vmul.f32 %v1714, %v1714
        %v1723 = vmul.f32 %v1715, %v1715
        %v1724 = vmul.f32 %v1716, %v1716
        %v1725 = vsel %vm740, %v1717, 0.0
        %1726 = vadd.xlane.f32.xlu0 %v1725
        %v1727 = vpop.xlane.xlu0 %1726
        %v1728 = vsel %vm740, %v1718, 0.0
        %1729 = vadd.xlane.f32.xlu0 %v1728
        %v1730 = vpop.xlane.xlu0 %1729
        %v1731 = vsel %vm740, %v1719, 0.0
        %1732 = vadd.xlane.f32.xlu0 %v1731
        %v1733 = vpop.xlane.xlu0 %1732
        %v1734 = vsel %vm740, %v1720, 0.0
        %1735 = vadd.xlane.f32.xlu0 %v1734
        %v1736 = vpop.xlane.xlu0 %1735
        %v1737 = vsel %vm740, %v1721, 0.0
        %1738 = vadd.xlane.f32.xlu0 %v1737
        %v1739 = vpop.xlane.xlu0 %1738
        %v1740 = vsel %vm740, %v1722, 0.0
        %1741 = vadd.xlane.f32.xlu0 %v1740
        %v1742 = vpop.xlane.xlu0 %1741
        %v1743 = vsel %vm740, %v1723, 0.0
        %1744 = vadd.xlane.f32.xlu0 %v1743
        %v1745 = vpop.xlane.xlu0 %1744
        %v1746 = vsel %vm740, %v1724, 0.0
        %1747 = vadd.xlane.f32.xlu0 %v1746
        %v1748 = vpop.xlane.xlu0 %1747
        %v1749 = vmul.f32 %v1727, %v765
        %v1750 = vmul.f32 %v1730, %v765
        %v1751 = vmul.f32 %v1733, %v765
        %v1752 = vmul.f32 %v1736, %v765
        %v1753 = vmul.f32 %v1739, %v765
        %v1754 = vmul.f32 %v1742, %v765
        %v1755 = vmul.f32 %v1745, %v765
        %v1756 = vmul.f32 %v1748, %v765
        %v1757 = vadd.f32 %v1749, 1e-05
        %v1758 = vadd.f32 %v1750, 1e-05
        %v1759 = vadd.f32 %v1751, 1e-05
        %v1760 = vadd.f32 %v1752, 1e-05
        %v1761 = vadd.f32 %v1753, 1e-05
        %v1762 = vadd.f32 %v1754, 1e-05
        %v1763 = vadd.f32 %v1755, 1e-05
        %v1764 = vadd.f32 %v1756, 1e-05
        %v1765 = vrsqrt.pop %v1757
        %v1766 = vrsqrt.pop %v1758
        %v1767 = vrsqrt.pop %v1759
        %v1768 = vrsqrt.pop %v1760
        %v1769 = vrsqrt.pop %v1761
        %v1770 = vrsqrt.pop %v1762
        %v1771 = vrsqrt.pop %v1763
        %v1772 = vrsqrt.pop %v1764
        %v1773 = vmul.f32 %v1709, %v1765
        %v1774 = vmul.f32 %v1710, %v1766
        %v1775 = vmul.f32 %v1711, %v1767
        %v1776 = vmul.f32 %v1712, %v1768
        %v1777 = vmul.f32 %v1713, %v1769
        %v1778 = vmul.f32 %v1714, %v1770
        %v1779 = vmul.f32 %v1715, %v1771
        %v1780 = vmul.f32 %v1716, %v1772
        %v1782 = vcombine.high %v1773, %v1773
        %v1784 = vunpack.c.l.s4 1966171168
        %v1785 = vunpack.c.0.s8 %v1784
        %v1786 = vlaneseq
        %v1787 = vshrl.u32 %v1786, 7
        %v1788 = vsub.s32 %v1785, %v1787
        %v1789 = vrot.slane %v1773, %v1788
        %v1791 = vunpack.c.l.s4 1966171168
        %v1792 = vunpack.c.0.s8 %v1791
        %v1793 = vlaneseq
        %v1794 = vshrl.u32 %v1793, 7
        %v1795 = vsub.s32 %v1792, %v1794
        %v1796 = vrot.slane %v1782, %v1795
        %v1797 = vcombine.high %v1789, %v1789
        %v1798 = vcombine.high %v1796, %v1796
        %v1800 = vunpack.c.l.s4 1966171168
        %v1801 = vunpack.c.0.s8 %v1800
        %v1802 = vlaneseq
        %v1803 = vshrl.u32 %v1802, 7
        %v1804 = vsub.s32 %v1801, %v1803
        %v1805 = vrot.slane %v1789, %v1804
        %v1807 = vunpack.c.l.s4 1966171168
        %v1808 = vunpack.c.0.s8 %v1807
        %v1809 = vlaneseq
        %v1810 = vshrl.u32 %v1809, 7
        %v1811 = vsub.s32 %v1808, %v1810
        %v1812 = vrot.slane %v1796, %v1811
        %v1814 = vunpack.c.l.s4 1966171168
        %v1815 = vunpack.c.0.s8 %v1814
        %v1816 = vlaneseq
        %v1817 = vshrl.u32 %v1816, 7
        %v1818 = vsub.s32 %v1815, %v1817
        %v1819 = vrot.slane %v1797, %v1818
        %v1821 = vunpack.c.l.s4 1966171168
        %v1822 = vunpack.c.0.s8 %v1821
        %v1823 = vlaneseq
        %v1824 = vshrl.u32 %v1823, 7
        %v1825 = vsub.s32 %v1822, %v1824
        %v1826 = vrot.slane %v1798, %v1825
        %v1827 = vcombine.high %v1805, %v1805
        %v1828 = vcombine.high %v1812, %v1812
        %v1829 = vcombine.high %v1819, %v1819
        %v1830 = vcombine.high %v1826, %v1826
        %vm1839 = vcmask 253952
        %1840 = vst.msk [vmem:[#allocation3] sm:$0x1] %vm1839, %v1805
        %1841 = vst.msk [vmem:[#allocation3 + $0x8] sm:$0x1] %vm1839, %v1819
        %1842 = vst.msk [vmem:[#allocation3 + $0x10] sm:$0x1] %vm1839, %v1827
        %1843 = vst.msk [vmem:[#allocation3 + $0x18] sm:$0x1] %vm1839, %v1829
        %1844 = vst.msk [vmem:[#allocation3 + $0x20] sm:$0x1] %vm1839, %v1812
        %1845 = vst.msk [vmem:[#allocation3 + $0x28] sm:$0x1] %vm1839, %v1826
        %1846 = vst.msk [vmem:[#allocation3 + $0x30] sm:$0x1] %vm1839, %v1828
        %1847 = vst.msk [vmem:[#allocation3 + $0x38] sm:$0x1] %vm1839, %v1830
        %v1849 = vcombine.high %v1774, %v1774
        %v1851 = vunpack.c.l.s4 1966171168
        %v1852 = vunpack.c.0.s8 %v1851
        %v1853 = vlaneseq
        %v1854 = vshrl.u32 %v1853, 7
        %v1855 = vsub.s32 %v1852, %v1854
        %v1856 = vrot.slane %v1774, %v1855
        %v1858 = vunpack.c.l.s4 1966171168
        %v1859 = vunpack.c.0.s8 %v1858
        %v1860 = vlaneseq
        %v1861 = vshrl.u32 %v1860, 7
        %v1862 = vsub.s32 %v1859, %v1861
        %v1863 = vrot.slane %v1849, %v1862
        %v1864 = vcombine.high %v1856, %v1856
        %v1865 = vcombine.high %v1863, %v1863
        %v1867 = vunpack.c.l.s4 1966171168
        %v1868 = vunpack.c.0.s8 %v1867
        %v1869 = vlaneseq
        %v1870 = vshrl.u32 %v1869, 7
        %v1871 = vsub.s32 %v1868, %v1870
        %v1872 = vrot.slane %v1856, %v1871
        %v1874 = vunpack.c.l.s4 1966171168
        %v1875 = vunpack.c.0.s8 %v1874
        %v1876 = vlaneseq
        %v1877 = vshrl.u32 %v1876, 7
        %v1878 = vsub.s32 %v1875, %v1877
        %v1879 = vrot.slane %v1863, %v1878
        %v1881 = vunpack.c.l.s4 1966171168
        %v1882 = vunpack.c.0.s8 %v1881
        %v1883 = vlaneseq
        %v1884 = vshrl.u32 %v1883, 7
        %v1885 = vsub.s32 %v1882, %v1884
        %v1886 = vrot.slane %v1864, %v1885
        %v1888 = vunpack.c.l.s4 1966171168
        %v1889 = vunpack.c.0.s8 %v1888
        %v1890 = vlaneseq
        %v1891 = vshrl.u32 %v1890, 7
        %v1892 = vsub.s32 %v1889, %v1891
        %v1893 = vrot.slane %v1865, %v1892
        %v1894 = vcombine.high %v1872, %v1872
        %v1895 = vcombine.high %v1879, %v1879
        %v1896 = vcombine.high %v1886, %v1886
        %v1897 = vcombine.high %v1893, %v1893
        %1906 = vst.msk [vmem:[#allocation3 + $0x1] sm:$0x1] %vm1839, %v1872
        %1907 = vst.msk [vmem:[#allocation3 + $0x9] sm:$0x1] %vm1839, %v1886
        %1908 = vst.msk [vmem:[#allocation3 + $0x11] sm:$0x1] %vm1839, %v1894
        %1909 = vst.msk [vmem:[#allocation3 + $0x19] sm:$0x1] %vm1839, %v1896
        %1910 = vst.msk [vmem:[#allocation3 + $0x21] sm:$0x1] %vm1839, %v1879
        %1911 = vst.msk [vmem:[#allocation3 + $0x29] sm:$0x1] %vm1839, %v1893
        %1912 = vst.msk [vmem:[#allocation3 + $0x31] sm:$0x1] %vm1839, %v1895
        %1913 = vst.msk [vmem:[#allocation3 + $0x39] sm:$0x1] %vm1839, %v1897
        %v1915 = vcombine.high %v1775, %v1775
        %v1917 = vunpack.c.l.s4 1966171168
        %v1918 = vunpack.c.0.s8 %v1917
        %v1919 = vlaneseq
        %v1920 = vshrl.u32 %v1919, 7
        %v1921 = vsub.s32 %v1918, %v1920
        %v1922 = vrot.slane %v1775, %v1921
        %v1924 = vunpack.c.l.s4 1966171168
        %v1925 = vunpack.c.0.s8 %v1924
        %v1926 = vlaneseq
        %v1927 = vshrl.u32 %v1926, 7
        %v1928 = vsub.s32 %v1925, %v1927
        %v1929 = vrot.slane %v1915, %v1928
        %v1930 = vcombine.high %v1922, %v1922
        %v1931 = vcombine.high %v1929, %v1929
        %v1933 = vunpack.c.l.s4 1966171168
        %v1934 = vunpack.c.0.s8 %v1933
        %v1935 = vlaneseq
        %v1936 = vshrl.u32 %v1935, 7
        %v1937 = vsub.s32 %v1934, %v1936
        %v1938 = vrot.slane %v1922, %v1937
        %v1940 = vunpack.c.l.s4 1966171168
        %v1941 = vunpack.c.0.s8 %v1940
        %v1942 = vlaneseq
        %v1943 = vshrl.u32 %v1942, 7
        %v1944 = vsub.s32 %v1941, %v1943
        %v1945 = vrot.slane %v1929, %v1944
        %v1947 = vunpack.c.l.s4 1966171168
        %v1948 = vunpack.c.0.s8 %v1947
        %v1949 = vlaneseq
        %v1950 = vshrl.u32 %v1949, 7
        %v1951 = vsub.s32 %v1948, %v1950
        %v1952 = vrot.slane %v1930, %v1951
        %v1954 = vunpack.c.l.s4 1966171168
        %v1955 = vunpack.c.0.s8 %v1954
        %v1956 = vlaneseq
        %v1957 = vshrl.u32 %v1956, 7
        %v1958 = vsub.s32 %v1955, %v1957
        %v1959 = vrot.slane %v1931, %v1958
        %v1960 = vcombine.high %v1938, %v1938
        %v1961 = vcombine.high %v1945, %v1945
        %v1962 = vcombine.high %v1952, %v1952
        %v1963 = vcombine.high %v1959, %v1959
        %1972 = vst.msk [vmem:[#allocation3 + $0x2] sm:$0x1] %vm1839, %v1938
        %1973 = vst.msk [vmem:[#allocation3 + $0xa] sm:$0x1] %vm1839, %v1952
        %1974 = vst.msk [vmem:[#allocation3 + $0x12] sm:$0x1] %vm1839, %v1960
        %1975 = vst.msk [vmem:[#allocation3 + $0x1a] sm:$0x1] %vm1839, %v1962
        %1976 = vst.msk [vmem:[#allocation3 + $0x22] sm:$0x1] %vm1839, %v1945
        %1977 = vst.msk [vmem:[#allocation3 + $0x2a] sm:$0x1] %vm1839, %v1959
        %1978 = vst.msk [vmem:[#allocation3 + $0x32] sm:$0x1] %vm1839, %v1961
        %1979 = vst.msk [vmem:[#allocation3 + $0x3a] sm:$0x1] %vm1839, %v1963
        %v1981 = vcombine.high %v1776, %v1776
        %v1983 = vunpack.c.l.s4 1966171168
        %v1984 = vunpack.c.0.s8 %v1983
        %v1985 = vlaneseq
        %v1986 = vshrl.u32 %v1985, 7
        %v1987 = vsub.s32 %v1984, %v1986
        %v1988 = vrot.slane %v1776, %v1987
        %v1990 = vunpack.c.l.s4 1966171168
        %v1991 = vunpack.c.0.s8 %v1990
        %v1992 = vlaneseq
        %v1993 = vshrl.u32 %v1992, 7
        %v1994 = vsub.s32 %v1991, %v1993
        %v1995 = vrot.slane %v1981, %v1994
        %v1996 = vcombine.high %v1988, %v1988
        %v1997 = vcombine.high %v1995, %v1995
        %v1999 = vunpack.c.l.s4 1966171168
        %v2000 = vunpack.c.0.s8 %v1999
        %v2001 = vlaneseq
        %v2002 = vshrl.u32 %v2001, 7
        %v2003 = vsub.s32 %v2000, %v2002
        %v2004 = vrot.slane %v1988, %v2003
        %v2006 = vunpack.c.l.s4 1966171168
        %v2007 = vunpack.c.0.s8 %v2006
        %v2008 = vlaneseq
        %v2009 = vshrl.u32 %v2008, 7
        %v2010 = vsub.s32 %v2007, %v2009
        %v2011 = vrot.slane %v1995, %v2010
        %v2013 = vunpack.c.l.s4 1966171168
        %v2014 = vunpack.c.0.s8 %v2013
        %v2015 = vlaneseq
        %v2016 = vshrl.u32 %v2015, 7
        %v2017 = vsub.s32 %v2014, %v2016
        %v2018 = vrot.slane %v1996, %v2017
        %v2020 = vunpack.c.l.s4 1966171168
        %v2021 = vunpack.c.0.s8 %v2020
        %v2022 = vlaneseq
        %v2023 = vshrl.u32 %v2022, 7
        %v2024 = vsub.s32 %v2021, %v2023
        %v2025 = vrot.slane %v1997, %v2024
        %v2026 = vcombine.high %v2004, %v2004
        %v2027 = vcombine.high %v2011, %v2011
        %v2028 = vcombine.high %v2018, %v2018
        %v2029 = vcombine.high %v2025, %v2025
        %2038 = vst.msk [vmem:[#allocation3 + $0x3] sm:$0x1] %vm1839, %v2004
        %2039 = vst.msk [vmem:[#allocation3 + $0xb] sm:$0x1] %vm1839, %v2018
        %2040 = vst.msk [vmem:[#allocation3 + $0x13] sm:$0x1] %vm1839, %v2026
        %2041 = vst.msk [vmem:[#allocation3 + $0x1b] sm:$0x1] %vm1839, %v2028
        %2042 = vst.msk [vmem:[#allocation3 + $0x23] sm:$0x1] %vm1839, %v2011
        %2043 = vst.msk [vmem:[#allocation3 + $0x2b] sm:$0x1] %vm1839, %v2025
        %2044 = vst.msk [vmem:[#allocation3 + $0x33] sm:$0x1] %vm1839, %v2027
        %2045 = vst.msk [vmem:[#allocation3 + $0x3b] sm:$0x1] %vm1839, %v2029
        %v2047 = vcombine.high %v1777, %v1777
        %v2049 = vunpack.c.l.s4 1966171168
        %v2050 = vunpack.c.0.s8 %v2049
        %v2051 = vlaneseq
        %v2052 = vshrl.u32 %v2051, 7
        %v2053 = vsub.s32 %v2050, %v2052
        %v2054 = vrot.slane %v1777, %v2053
        %v2056 = vunpack.c.l.s4 1966171168
        %v2057 = vunpack.c.0.s8 %v2056
        %v2058 = vlaneseq
        %v2059 = vshrl.u32 %v2058, 7
        %v2060 = vsub.s32 %v2057, %v2059
        %v2061 = vrot.slane %v2047, %v2060
        %v2062 = vcombine.high %v2054, %v2054
        %v2063 = vcombine.high %v2061, %v2061
        %v2065 = vunpack.c.l.s4 1966171168
        %v2066 = vunpack.c.0.s8 %v2065
        %v2067 = vlaneseq
        %v2068 = vshrl.u32 %v2067, 7
        %v2069 = vsub.s32 %v2066, %v2068
        %v2070 = vrot.slane %v2054, %v2069
        %v2072 = vunpack.c.l.s4 1966171168
        %v2073 = vunpack.c.0.s8 %v2072
        %v2074 = vlaneseq
        %v2075 = vshrl.u32 %v2074, 7
        %v2076 = vsub.s32 %v2073, %v2075
        %v2077 = vrot.slane %v2061, %v2076
        %v2079 = vunpack.c.l.s4 1966171168
        %v2080 = vunpack.c.0.s8 %v2079
        %v2081 = vlaneseq
        %v2082 = vshrl.u32 %v2081, 7
        %v2083 = vsub.s32 %v2080, %v2082
        %v2084 = vrot.slane %v2062, %v2083
        %v2086 = vunpack.c.l.s4 1966171168
        %v2087 = vunpack.c.0.s8 %v2086
        %v2088 = vlaneseq
        %v2089 = vshrl.u32 %v2088, 7
        %v2090 = vsub.s32 %v2087, %v2089
        %v2091 = vrot.slane %v2063, %v2090
        %v2092 = vcombine.high %v2070, %v2070
        %v2093 = vcombine.high %v2077, %v2077
        %v2094 = vcombine.high %v2084, %v2084
        %v2095 = vcombine.high %v2091, %v2091
        %2104 = vst.msk [vmem:[#allocation3 + $0x4] sm:$0x1] %vm1839, %v2070
        %2105 = vst.msk [vmem:[#allocation3 + $0xc] sm:$0x1] %vm1839, %v2084
        %2106 = vst.msk [vmem:[#allocation3 + $0x14] sm:$0x1] %vm1839, %v2092
        %2107 = vst.msk [vmem:[#allocation3 + $0x1c] sm:$0x1] %vm1839, %v2094
        %2108 = vst.msk [vmem:[#allocation3 + $0x24] sm:$0x1] %vm1839, %v2077
        %2109 = vst.msk [vmem:[#allocation3 + $0x2c] sm:$0x1] %vm1839, %v2091
        %2110 = vst.msk [vmem:[#allocation3 + $0x34] sm:$0x1] %vm1839, %v2093
        %2111 = vst.msk [vmem:[#allocation3 + $0x3c] sm:$0x1] %vm1839, %v2095
        %v2113 = vcombine.high %v1778, %v1778
        %v2115 = vunpack.c.l.s4 1966171168
        %v2116 = vunpack.c.0.s8 %v2115
        %v2117 = vlaneseq
        %v2118 = vshrl.u32 %v2117, 7
        %v2119 = vsub.s32 %v2116, %v2118
        %v2120 = vrot.slane %v1778, %v2119
        %v2122 = vunpack.c.l.s4 1966171168
        %v2123 = vunpack.c.0.s8 %v2122
        %v2124 = vlaneseq
        %v2125 = vshrl.u32 %v2124, 7
        %v2126 = vsub.s32 %v2123, %v2125
        %v2127 = vrot.slane %v2113, %v2126
        %v2128 = vcombine.high %v2120, %v2120
        %v2129 = vcombine.high %v2127, %v2127
        %v2131 = vunpack.c.l.s4 1966171168
        %v2132 = vunpack.c.0.s8 %v2131
        %v2133 = vlaneseq
        %v2134 = vshrl.u32 %v2133, 7
        %v2135 = vsub.s32 %v2132, %v2134
        %v2136 = vrot.slane %v2120, %v2135
        %v2138 = vunpack.c.l.s4 1966171168
        %v2139 = vunpack.c.0.s8 %v2138
        %v2140 = vlaneseq
        %v2141 = vshrl.u32 %v2140, 7
        %v2142 = vsub.s32 %v2139, %v2141
        %v2143 = vrot.slane %v2127, %v2142
        %v2145 = vunpack.c.l.s4 1966171168
        %v2146 = vunpack.c.0.s8 %v2145
        %v2147 = vlaneseq
        %v2148 = vshrl.u32 %v2147, 7
        %v2149 = vsub.s32 %v2146, %v2148
        %v2150 = vrot.slane %v2128, %v2149
        %v2152 = vunpack.c.l.s4 1966171168
        %v2153 = vunpack.c.0.s8 %v2152
        %v2154 = vlaneseq
        %v2155 = vshrl.u32 %v2154, 7
        %v2156 = vsub.s32 %v2153, %v2155
        %v2157 = vrot.slane %v2129, %v2156
        %v2158 = vcombine.high %v2136, %v2136
        %v2159 = vcombine.high %v2143, %v2143
        %v2160 = vcombine.high %v2150, %v2150
        %v2161 = vcombine.high %v2157, %v2157
        %2170 = vst.msk [vmem:[#allocation3 + $0x5] sm:$0x1] %vm1839, %v2136
        %2171 = vst.msk [vmem:[#allocation3 + $0xd] sm:$0x1] %vm1839, %v2150
        %2172 = vst.msk [vmem:[#allocation3 + $0x15] sm:$0x1] %vm1839, %v2158
        %2173 = vst.msk [vmem:[#allocation3 + $0x1d] sm:$0x1] %vm1839, %v2160
        %2174 = vst.msk [vmem:[#allocation3 + $0x25] sm:$0x1] %vm1839, %v2143
        %2175 = vst.msk [vmem:[#allocation3 + $0x2d] sm:$0x1] %vm1839, %v2157
        %2176 = vst.msk [vmem:[#allocation3 + $0x35] sm:$0x1] %vm1839, %v2159
        %2177 = vst.msk [vmem:[#allocation3 + $0x3d] sm:$0x1] %vm1839, %v2161
        %v2179 = vcombine.high %v1779, %v1779
        %v2181 = vunpack.c.l.s4 1966171168
        %v2182 = vunpack.c.0.s8 %v2181
        %v2183 = vlaneseq
        %v2184 = vshrl.u32 %v2183, 7
        %v2185 = vsub.s32 %v2182, %v2184
        %v2186 = vrot.slane %v1779, %v2185
        %v2188 = vunpack.c.l.s4 1966171168
        %v2189 = vunpack.c.0.s8 %v2188
        %v2190 = vlaneseq
        %v2191 = vshrl.u32 %v2190, 7
        %v2192 = vsub.s32 %v2189, %v2191
        %v2193 = vrot.slane %v2179, %v2192
        %v2194 = vcombine.high %v2186, %v2186
        %v2195 = vcombine.high %v2193, %v2193
        %v2197 = vunpack.c.l.s4 1966171168
        %v2198 = vunpack.c.0.s8 %v2197
        %v2199 = vlaneseq
        %v2200 = vshrl.u32 %v2199, 7
        %v2201 = vsub.s32 %v2198, %v2200
        %v2202 = vrot.slane %v2186, %v2201
        %v2204 = vunpack.c.l.s4 1966171168
        %v2205 = vunpack.c.0.s8 %v2204
        %v2206 = vlaneseq
        %v2207 = vshrl.u32 %v2206, 7
        %v2208 = vsub.s32 %v2205, %v2207
        %v2209 = vrot.slane %v2193, %v2208
        %v2211 = vunpack.c.l.s4 1966171168
        %v2212 = vunpack.c.0.s8 %v2211
        %v2213 = vlaneseq
        %v2214 = vshrl.u32 %v2213, 7
        %v2215 = vsub.s32 %v2212, %v2214
        %v2216 = vrot.slane %v2194, %v2215
        %v2218 = vunpack.c.l.s4 1966171168
        %v2219 = vunpack.c.0.s8 %v2218
        %v2220 = vlaneseq
        %v2221 = vshrl.u32 %v2220, 7
        %v2222 = vsub.s32 %v2219, %v2221
        %v2223 = vrot.slane %v2195, %v2222
        %v2224 = vcombine.high %v2202, %v2202
        %v2225 = vcombine.high %v2209, %v2209
        %v2226 = vcombine.high %v2216, %v2216
        %v2227 = vcombine.high %v2223, %v2223
        %2236 = vst.msk [vmem:[#allocation3 + $0x6] sm:$0x1] %vm1839, %v2202
        %2237 = vst.msk [vmem:[#allocation3 + $0xe] sm:$0x1] %vm1839, %v2216
        %2238 = vst.msk [vmem:[#allocation3 + $0x16] sm:$0x1] %vm1839, %v2224
        %2239 = vst.msk [vmem:[#allocation3 + $0x1e] sm:$0x1] %vm1839, %v2226
        %2240 = vst.msk [vmem:[#allocation3 + $0x26] sm:$0x1] %vm1839, %v2209
        %2241 = vst.msk [vmem:[#allocation3 + $0x2e] sm:$0x1] %vm1839, %v2223
        %2242 = vst.msk [vmem:[#allocation3 + $0x36] sm:$0x1] %vm1839, %v2225
        %2243 = vst.msk [vmem:[#allocation3 + $0x3e] sm:$0x1] %vm1839, %v2227
        %v2245 = vcombine.high %v1780, %v1780
        %v2247 = vunpack.c.l.s4 1966171168
        %v2248 = vunpack.c.0.s8 %v2247
        %v2249 = vlaneseq
        %v2250 = vshrl.u32 %v2249, 7
        %v2251 = vsub.s32 %v2248, %v2250
        %v2252 = vrot.slane %v1780, %v2251
        %v2254 = vunpack.c.l.s4 1966171168
        %v2255 = vunpack.c.0.s8 %v2254
        %v2256 = vlaneseq
        %v2257 = vshrl.u32 %v2256, 7
        %v2258 = vsub.s32 %v2255, %v2257
        %v2259 = vrot.slane %v2245, %v2258
        %v2260 = vcombine.high %v2252, %v2252
        %v2261 = vcombine.high %v2259, %v2259
        %v2263 = vunpack.c.l.s4 1966171168
        %v2264 = vunpack.c.0.s8 %v2263
        %v2265 = vlaneseq
        %v2266 = vshrl.u32 %v2265, 7
        %v2267 = vsub.s32 %v2264, %v2266
        %v2268 = vrot.slane %v2252, %v2267
        %v2270 = vunpack.c.l.s4 1966171168
        %v2271 = vunpack.c.0.s8 %v2270
        %v2272 = vlaneseq
        %v2273 = vshrl.u32 %v2272, 7
        %v2274 = vsub.s32 %v2271, %v2273
        %v2275 = vrot.slane %v2259, %v2274
        %v2277 = vunpack.c.l.s4 1966171168
        %v2278 = vunpack.c.0.s8 %v2277
        %v2279 = vlaneseq
        %v2280 = vshrl.u32 %v2279, 7
        %v2281 = vsub.s32 %v2278, %v2280
        %v2282 = vrot.slane %v2260, %v2281
        %v2284 = vunpack.c.l.s4 1966171168
        %v2285 = vunpack.c.0.s8 %v2284
        %v2286 = vlaneseq
        %v2287 = vshrl.u32 %v2286, 7
        %v2288 = vsub.s32 %v2285, %v2287
        %v2289 = vrot.slane %v2261, %v2288
        %v2290 = vcombine.high %v2268, %v2268
        %v2291 = vcombine.high %v2275, %v2275
        %v2292 = vcombine.high %v2282, %v2282
        %v2293 = vcombine.high %v2289, %v2289
        %2302 = vst.msk [vmem:[#allocation3 + $0x7] sm:$0x1] %vm1839, %v2268
        %2303 = vst.msk [vmem:[#allocation3 + $0xf] sm:$0x1] %vm1839, %v2282
        %2304 = vst.msk [vmem:[#allocation3 + $0x17] sm:$0x1] %vm1839, %v2290
        %2305 = vst.msk [vmem:[#allocation3 + $0x1f] sm:$0x1] %vm1839, %v2292
        %2306 = vst.msk [vmem:[#allocation3 + $0x27] sm:$0x1] %vm1839, %v2275
        %2307 = vst.msk [vmem:[#allocation3 + $0x2f] sm:$0x1] %vm1839, %v2289
        %2308 = vst.msk [vmem:[#allocation3 + $0x37] sm:$0x1] %vm1839, %v2291
        %2309 = vst.msk [vmem:[#allocation3 + $0x3f] sm:$0x1] %vm1839, %v2293
        %v2310 = vld [vmem:[#allocation3] sm:$0xff]
        %v2311 = vld [vmem:[#allocation3 + $0x8] sm:$0xff]
        %v2312 = vld [vmem:[#allocation3 + $0x10] sm:$0xff]
        %v2313 = vld [vmem:[#allocation3 + $0x18] sm:$0xff]
        %v2314 = vld [vmem:[#allocation3 + $0x20] sm:$0xff]
        %v2315 = vld [vmem:[#allocation3 + $0x28] sm:$0xff]
        %v2316 = vld [vmem:[#allocation3 + $0x30] sm:$0xff]
        %v2317 = vld [vmem:[#allocation3 + $0x38] sm:$0xff]
        %v2318 = vpack.c.bf16 %v2310, %v2310
        %v2319 = vpack.c.bf16 %v2311, %v2311
        %v2320 = vpack.c.bf16 %v2312, %v2312
        %v2321 = vpack.c.bf16 %v2313, %v2313
        %v2322 = vpack.c.bf16 %v2314, %v2314
        %v2323 = vpack.c.bf16 %v2315, %v2315
        %v2324 = vpack.c.bf16 %v2316, %v2316
        %v2325 = vpack.c.bf16 %v2317, %v2317
        %v2326 = vld [vmem:[%s523] sm:$0x3]
        %v2327 = vld [vmem:[%s523 + $0x2] sm:$0x3]
        %v2328 = vld [vmem:[%s523 + $0x4] sm:$0x3]
        %v2329 = vld [vmem:[%s523 + $0x6] sm:$0x3]
        %v2330 = vld [vmem:[%s523 + $0x8] sm:$0x3]
        %v2331 = vld [vmem:[%s523 + $0xa] sm:$0x3]
        %v2332 = vld [vmem:[%s523 + $0xc] sm:$0x3]
        %v2333 = vld [vmem:[%s523 + $0xe] sm:$0x3]
        %v2334 = vld [vmem:[%s527] sm:$0x1]
        %v2335 = vld [vmem:[%s527 + $0x1] sm:$0x1]
        %v2336 = vld [vmem:[%s527 + $0x2] sm:$0x1]
        %v2337 = vld [vmem:[%s527 + $0x3] sm:$0x1]
        %v2338 = vld [vmem:[%s527 + $0x4] sm:$0x1]
        %v2339 = vld [vmem:[%s527 + $0x5] sm:$0x1]
        %v2340 = vld [vmem:[%s527 + $0x6] sm:$0x1]
        %v2341 = vld [vmem:[%s527 + $0x7] sm:$0x1]
        %v2350 = vlaneseq
        %v2351 = vshrl.u32 %v2350, 7
        %v2352 = vsub.s32 0, %v2351
        %v2353 = vrot.slane %v2334, %v2352
        %v2354 = vlaneseq
        %v2355 = vshrl.u32 %v2354, 7
        %v2356 = vsub.s32 0, %v2355
        %v2357 = vrot.slane %v2335, %v2356
        %v2358 = vlaneseq
        %v2359 = vshrl.u32 %v2358, 7
        %v2360 = vsub.s32 0, %v2359
        %v2361 = vrot.slane %v2336, %v2360
        %v2362 = vlaneseq
        %v2363 = vshrl.u32 %v2362, 7
        %v2364 = vsub.s32 0, %v2363
        %v2365 = vrot.slane %v2337, %v2364
        %v2366 = vlaneseq
        %v2367 = vshrl.u32 %v2366, 7
        %v2368 = vsub.s32 0, %v2367
        %v2369 = vrot.slane %v2338, %v2368
        %v2370 = vlaneseq
        %v2371 = vshrl.u32 %v2370, 7
        %v2372 = vsub.s32 0, %v2371
        %v2373 = vrot.slane %v2339, %v2372
        %v2374 = vlaneseq
        %v2375 = vshrl.u32 %v2374, 7
        %v2376 = vsub.s32 0, %v2375
        %v2377 = vrot.slane %v2340, %v2376
        %v2378 = vlaneseq
        %v2379 = vshrl.u32 %v2378, 7
        %v2380 = vsub.s32 0, %v2379
        %v2381 = vrot.slane %v2341, %v2380
        %v2391 = vsel %vm740, %v2318, 0
        %v2394 = vsel %vm740, %v2326, 0
        %2396 = vmatprep.subr.bf16.mxu0 0
        %2397 = vmatpush1.bf16.xpose.msra.mxu0 %v2394
        %2398 = vmatprep.subr.bf16.mxu0 0
        %2399 = vmatpush1.bf16.xpose.msra.mxu0 0
        %2400 = vmatprep.subr.bf16.mxu0 0
        %2401 = vmatpush1.bf16.xpose.msra.mxu0 0
        %2402 = vmatprep.subr.bf16.mxu0 0
        %2403 = vmatpush1.bf16.xpose.msra.mxu0 0
        %2404 = vmatprep.subr.bf16.mxu0 0
        %2405 = vmatpush1.bf16.xpose.msra.mxu0 0
        %2406 = vmatprep.subr.bf16.mxu0 0
        %2407 = vmatpush1.bf16.xpose.msra.mxu0 0
        %2408 = vmatprep.subr.bf16.mxu0 0
        %2409 = vmatpush1.bf16.xpose.msra.mxu0 0
        %2410 = vmatprep.subr.bf16.mxu0 0
        %2411 = vmatpush1.bf16.xpose.msra.mxu0 0
        %2412 = vmatprep.subr.bf16.mxu0 0
        %2413 = vmatpush1.bf16.xpose.msra.mxu0 0
        %2414 = vmatprep.subr.bf16.mxu0 0
        %2415 = vmatpush1.bf16.xpose.msra.mxu0 0
        %2416 = vmatprep.subr.bf16.mxu0 0
        %2417 = vmatpush1.bf16.xpose.msra.mxu0 0
        %2418 = vmatprep.subr.bf16.mxu0 0
        %2419 = vmatpush1.bf16.xpose.msra.mxu0 0
        %2420 = vmatprep.subr.bf16.mxu0 0
        %2421 = vmatpush1.bf16.xpose.msra.mxu0 0
        %2422 = vmatprep.subr.bf16.mxu0 0
        %2423 = vmatpush1.bf16.xpose.msra.mxu0 0
        %2424 = vmatprep.subr.bf16.mxu0 0
        %2425 = vmatpush1.bf16.xpose.msra.mxu0 0
        %2426 = vmatprep.subr.bf16.mxu0 0
        %2427 = vmatpush1.bf16.xpose.msra.mxu0 0
        %2428 = vmatprep.mubr.bf16.mxu0 0
        %2429 = vmatmul.mubr.bf16.gmra.mrb[0].mxu0 %v2391
        %v2430 = vpop.f32.mrb[0].mxu0
        %v2431 = vadd.f32 %v2353, %v2430
        %v2432 = vpop.f32.mrb[0].mxu0
        %v2433 = vpop.f32.mrb[0].mxu0
        %v2434 = vpop.f32.mrb[0].mxu0
        %2435 = vdwg.mxu0
        %v2437 = vsel %vm740, %v2319, 0
        %v2440 = vsel %vm740, %v2327, 0
        %2442 = vmatprep.subr.bf16.mxu0 0
        %2443 = vmatpush1.bf16.xpose.msra.mxu0 %v2440
        %2444 = vmatprep.subr.bf16.mxu0 0
        %2445 = vmatpush1.bf16.xpose.msra.mxu0 0
        %2446 = vmatprep.subr.bf16.mxu0 0
        %2447 = vmatpush1.bf16.xpose.msra.mxu0 0
        %2448 = vmatprep.subr.bf16.mxu0 0
        %2449 = vmatpush1.bf16.xpose.msra.mxu0 0
        %2450 = vmatprep.subr.bf16.mxu0 0
        %2451 = vmatpush1.bf16.xpose.msra.mxu0 0
        %2452 = vmatprep.subr.bf16.mxu0 0
        %2453 = vmatpush1.bf16.xpose.msra.mxu0 0
        %2454 = vmatprep.subr.bf16.mxu0 0
        %2455 = vmatpush1.bf16.xpose.msra.mxu0 0
        %2456 = vmatprep.subr.bf16.mxu0 0
        %2457 = vmatpush1.bf16.xpose.msra.mxu0 0
        %2458 = vmatprep.subr.bf16.mxu0 0
        %2459 = vmatpush1.bf16.xpose.msra.mxu0 0
        %2460 = vmatprep.subr.bf16.mxu0 0
        %2461 = vmatpush1.bf16.xpose.msra.mxu0 0
        %2462 = vmatprep.subr.bf16.mxu0 0
        %2463 = vmatpush1.bf16.xpose.msra.mxu0 0
        %2464 = vmatprep.subr.bf16.mxu0 0
        %2465 = vmatpush1.bf16.xpose.msra.mxu0 0
        %2466 = vmatprep.subr.bf16.mxu0 0
        %2467 = vmatpush1.bf16.xpose.msra.mxu0 0
        %2468 = vmatprep.subr.bf16.mxu0 0
        %2469 = vmatpush1.bf16.xpose.msra.mxu0 0
        %2470 = vmatprep.subr.bf16.mxu0 0
        %2471 = vmatpush1.bf16.xpose.msra.mxu0 0
        %2472 = vmatprep.subr.bf16.mxu0 0
        %2473 = vmatpush1.bf16.xpose.msra.mxu0 0
        %2474 = vmatprep.mubr.bf16.mxu0 0
        %2475 = vmatmul.mubr.bf16.gmra.mrb[0].mxu0 %v2437
        %v2476 = vpop.f32.mrb[0].mxu0
        %v2477 = vadd.f32 %v2357, %v2476
        %v2478 = vpop.f32.mrb[0].mxu0
        %v2479 = vpop.f32.mrb[0].mxu0
        %v2480 = vpop.f32.mrb[0].mxu0
        %2481 = vdwg.mxu0
        %v2483 = vsel %vm740, %v2320, 0
        %v2486 = vsel %vm740, %v2328, 0
        %2488 = vmatprep.subr.bf16.mxu0 0
        %2489 = vmatpush1.bf16.xpose.msra.mxu0 %v2486
        %2490 = vmatprep.subr.bf16.mxu0 0
        %2491 = vmatpush1.bf16.xpose.msra.mxu0 0
        %2492 = vmatprep.subr.bf16.mxu0 0
        %2493 = vmatpush1.bf16.xpose.msra.mxu0 0
        %2494 = vmatprep.subr.bf16.mxu0 0
        %2495 = vmatpush1.bf16.xpose.msra.mxu0 0
        %2496 = vmatprep.subr.bf16.mxu0 0
        %2497 = vmatpush1.bf16.xpose.msra.mxu0 0
        %2498 = vmatprep.subr.bf16.mxu0 0
        %2499 = vmatpush1.bf16.xpose.msra.mxu0 0
        %2500 = vmatprep.subr.bf16.mxu0 0
        %2501 = vmatpush1.bf16.xpose.msra.mxu0 0
        %2502 = vmatprep.subr.bf16.mxu0 0
        %2503 = vmatpush1.bf16.xpose.msra.mxu0 0
        %2504 = vmatprep.subr.bf16.mxu0 0
        %2505 = vmatpush1.bf16.xpose.msra.mxu0 0
        %2506 = vmatprep.subr.bf16.mxu0 0
        %2507 = vmatpush1.bf16.xpose.msra.mxu0 0
        %2508 = vmatprep.subr.bf16.mxu0 0
        %2509 = vmatpush1.bf16.xpose.msra.mxu0 0
        %2510 = vmatprep.subr.bf16.mxu0 0
        %2511 = vmatpush1.bf16.xpose.msra.mxu0 0
        %2512 = vmatprep.subr.bf16.mxu0 0
        %2513 = vmatpush1.bf16.xpose.msra.mxu0 0
        %2514 = vmatprep.subr.bf16.mxu0 0
        %2515 = vmatpush1.bf16.xpose.msra.mxu0 0
        %2516 = vmatprep.subr.bf16.mxu0 0
        %2517 = vmatpush1.bf16.xpose.msra.mxu0 0
        %2518 = vmatprep.subr.bf16.mxu0 0
        %2519 = vmatpush1.bf16.xpose.msra.mxu0 0
        %2520 = vmatprep.mubr.bf16.mxu0 0
        %2521 = vmatmul.mubr.bf16.gmra.mrb[0].mxu0 %v2483
        %v2522 = vpop.f32.mrb[0].mxu0
        %v2523 = vadd.f32 %v2361, %v2522
        %v2524 = vpop.f32.mrb[0].mxu0
        %v2525 = vpop.f32.mrb[0].mxu0
        %v2526 = vpop.f32.mrb[0].mxu0
        %2527 = vdwg.mxu0
        %v2529 = vsel %vm740, %v2321, 0
        %v2532 = vsel %vm740, %v2329, 0
        %2534 = vmatprep.subr.bf16.mxu0 0
        %2535 = vmatpush1.bf16.xpose.msra.mxu0 %v2532
        %2536 = vmatprep.subr.bf16.mxu0 0
        %2537 = vmatpush1.bf16.xpose.msra.mxu0 0
        %2538 = vmatprep.subr.bf16.mxu0 0
        %2539 = vmatpush1.bf16.xpose.msra.mxu0 0
        %2540 = vmatprep.subr.bf16.mxu0 0
        %2541 = vmatpush1.bf16.xpose.msra.mxu0 0
        %2542 = vmatprep.subr.bf16.mxu0 0
        %2543 = vmatpush1.bf16.xpose.msra.mxu0 0
        %2544 = vmatprep.subr.bf16.mxu0 0
        %2545 = vmatpush1.bf16.xpose.msra.mxu0 0
        %2546 = vmatprep.subr.bf16.mxu0 0
        %2547 = vmatpush1.bf16.xpose.msra.mxu0 0
        %2548 = vmatprep.subr.bf16.mxu0 0
        %2549 = vmatpush1.bf16.xpose.msra.mxu0 0
        %2550 = vmatprep.subr.bf16.mxu0 0
        %2551 = vmatpush1.bf16.xpose.msra.mxu0 0
        %2552 = vmatprep.subr.bf16.mxu0 0
        %2553 = vmatpush1.bf16.xpose.msra.mxu0 0
        %2554 = vmatprep.subr.bf16.mxu0 0
        %2555 = vmatpush1.bf16.xpose.msra.mxu0 0
        %2556 = vmatprep.subr.bf16.mxu0 0
        %2557 = vmatpush1.bf16.xpose.msra.mxu0 0
        %2558 = vmatprep.subr.bf16.mxu0 0
        %2559 = vmatpush1.bf16.xpose.msra.mxu0 0
        %2560 = vmatprep.subr.bf16.mxu0 0
        %2561 = vmatpush1.bf16.xpose.msra.mxu0 0
        %2562 = vmatprep.subr.bf16.mxu0 0
        %2563 = vmatpush1.bf16.xpose.msra.mxu0 0
        %2564 = vmatprep.subr.bf16.mxu0 0
        %2565 = vmatpush1.bf16.xpose.msra.mxu0 0
        %2566 = vmatprep.mubr.bf16.mxu0 0
        %2567 = vmatmul.mubr.bf16.gmra.mrb[0].mxu0 %v2529
        %v2568 = vpop.f32.mrb[0].mxu0
        %v2569 = vadd.f32 %v2365, %v2568
        %v2570 = vpop.f32.mrb[0].mxu0
        %v2571 = vpop.f32.mrb[0].mxu0
        %v2572 = vpop.f32.mrb[0].mxu0
        %2573 = vdwg.mxu0
        %v2575 = vsel %vm740, %v2322, 0
        %v2578 = vsel %vm740, %v2330, 0
        %2580 = vmatprep.subr.bf16.mxu0 0
        %2581 = vmatpush1.bf16.xpose.msra.mxu0 %v2578
        %2582 = vmatprep.subr.bf16.mxu0 0
        %2583 = vmatpush1.bf16.xpose.msra.mxu0 0
        %2584 = vmatprep.subr.bf16.mxu0 0
        %2585 = vmatpush1.bf16.xpose.msra.mxu0 0
        %2586 = vmatprep.subr.bf16.mxu0 0
        %2587 = vmatpush1.bf16.xpose.msra.mxu0 0
        %2588 = vmatprep.subr.bf16.mxu0 0
        %2589 = vmatpush1.bf16.xpose.msra.mxu0 0
        %2590 = vmatprep.subr.bf16.mxu0 0
        %2591 = vmatpush1.bf16.xpose.msra.mxu0 0
        %2592 = vmatprep.subr.bf16.mxu0 0
        %2593 = vmatpush1.bf16.xpose.msra.mxu0 0
        %2594 = vmatprep.subr.bf16.mxu0 0
        %2595 = vmatpush1.bf16.xpose.msra.mxu0 0
        %2596 = vmatprep.subr.bf16.mxu0 0
        %2597 = vmatpush1.bf16.xpose.msra.mxu0 0
        %2598 = vmatprep.subr.bf16.mxu0 0
        %2599 = vmatpush1.bf16.xpose.msra.mxu0 0
        %2600 = vmatprep.subr.bf16.mxu0 0
        %2601 = vmatpush1.bf16.xpose.msra.mxu0 0
        %2602 = vmatprep.subr.bf16.mxu0 0
        %2603 = vmatpush1.bf16.xpose.msra.mxu0 0
        %2604 = vmatprep.subr.bf16.mxu0 0
        %2605 = vmatpush1.bf16.xpose.msra.mxu0 0
        %2606 = vmatprep.subr.bf16.mxu0 0
        %2607 = vmatpush1.bf16.xpose.msra.mxu0 0
        %2608 = vmatprep.subr.bf16.mxu0 0
        %2609 = vmatpush1.bf16.xpose.msra.mxu0 0
        %2610 = vmatprep.subr.bf16.mxu0 0
        %2611 = vmatpush1.bf16.xpose.msra.mxu0 0
        %2612 = vmatprep.mubr.bf16.mxu0 0
        %2613 = vmatmul.mubr.bf16.gmra.mrb[0].mxu0 %v2575
        %v2614 = vpop.f32.mrb[0].mxu0
        %v2615 = vadd.f32 %v2369, %v2614
        %v2616 = vpop.f32.mrb[0].mxu0
        %v2617 = vpop.f32.mrb[0].mxu0
        %v2618 = vpop.f32.mrb[0].mxu0
        %2619 = vdwg.mxu0
        %v2621 = vsel %vm740, %v2323, 0
        %v2624 = vsel %vm740, %v2331, 0
        %2626 = vmatprep.subr.bf16.mxu0 0
        %2627 = vmatpush1.bf16.xpose.msra.mxu0 %v2624
        %2628 = vmatprep.subr.bf16.mxu0 0
        %2629 = vmatpush1.bf16.xpose.msra.mxu0 0
        %2630 = vmatprep.subr.bf16.mxu0 0
        %2631 = vmatpush1.bf16.xpose.msra.mxu0 0
        %2632 = vmatprep.subr.bf16.mxu0 0
        %2633 = vmatpush1.bf16.xpose.msra.mxu0 0
        %2634 = vmatprep.subr.bf16.mxu0 0
        %2635 = vmatpush1.bf16.xpose.msra.mxu0 0
        %2636 = vmatprep.subr.bf16.mxu0 0
        %2637 = vmatpush1.bf16.xpose.msra.mxu0 0
        %2638 = vmatprep.subr.bf16.mxu0 0
        %2639 = vmatpush1.bf16.xpose.msra.mxu0 0
        %2640 = vmatprep.subr.bf16.mxu0 0
        %2641 = vmatpush1.bf16.xpose.msra.mxu0 0
        %2642 = vmatprep.subr.bf16.mxu0 0
        %2643 = vmatpush1.bf16.xpose.msra.mxu0 0
        %2644 = vmatprep.subr.bf16.mxu0 0
        %2645 = vmatpush1.bf16.xpose.msra.mxu0 0
        %2646 = vmatprep.subr.bf16.mxu0 0
        %2647 = vmatpush1.bf16.xpose.msra.mxu0 0
        %2648 = vmatprep.subr.bf16.mxu0 0
        %2649 = vmatpush1.bf16.xpose.msra.mxu0 0
        %2650 = vmatprep.subr.bf16.mxu0 0
        %2651 = vmatpush1.bf16.xpose.msra.mxu0 0
        %2652 = vmatprep.subr.bf16.mxu0 0
        %2653 = vmatpush1.bf16.xpose.msra.mxu0 0
        %2654 = vmatprep.subr.bf16.mxu0 0
        %2655 = vmatpush1.bf16.xpose.msra.mxu0 0
        %2656 = vmatprep.subr.bf16.mxu0 0
        %2657 = vmatpush1.bf16.xpose.msra.mxu0 0
        %2658 = vmatprep.mubr.bf16.mxu0 0
        %2659 = vmatmul.mubr.bf16.gmra.mrb[0].mxu0 %v2621
        %v2660 = vpop.f32.mrb[0].mxu0
        %v2661 = vadd.f32 %v2373, %v2660
        %v2662 = vpop.f32.mrb[0].mxu0
        %v2663 = vpop.f32.mrb[0].mxu0
        %v2664 = vpop.f32.mrb[0].mxu0
        %2665 = vdwg.mxu0
        %v2667 = vsel %vm740, %v2324, 0
        %v2670 = vsel %vm740, %v2332, 0
        %2672 = vmatprep.subr.bf16.mxu0 0
        %2673 = vmatpush1.bf16.xpose.msra.mxu0 %v2670
        %2674 = vmatprep.subr.bf16.mxu0 0
        %2675 = vmatpush1.bf16.xpose.msra.mxu0 0
        %2676 = vmatprep.subr.bf16.mxu0 0
        %2677 = vmatpush1.bf16.xpose.msra.mxu0 0
        %2678 = vmatprep.subr.bf16.mxu0 0
        %2679 = vmatpush1.bf16.xpose.msra.mxu0 0
        %2680 = vmatprep.subr.bf16.mxu0 0
        %2681 = vmatpush1.bf16.xpose.msra.mxu0 0
        %2682 = vmatprep.subr.bf16.mxu0 0
        %2683 = vmatpush1.bf16.xpose.msra.mxu0 0
        %2684 = vmatprep.subr.bf16.mxu0 0
        %2685 = vmatpush1.bf16.xpose.msra.mxu0 0
        %2686 = vmatprep.subr.bf16.mxu0 0
        %2687 = vmatpush1.bf16.xpose.msra.mxu0 0
        %2688 = vmatprep.subr.bf16.mxu0 0
        %2689 = vmatpush1.bf16.xpose.msra.mxu0 0
        %2690 = vmatprep.subr.bf16.mxu0 0
        %2691 = vmatpush1.bf16.xpose.msra.mxu0 0
        %2692 = vmatprep.subr.bf16.mxu0 0
        %2693 = vmatpush1.bf16.xpose.msra.mxu0 0
        %2694 = vmatprep.subr.bf16.mxu0 0
        %2695 = vmatpush1.bf16.xpose.msra.mxu0 0
        %2696 = vmatprep.subr.bf16.mxu0 0
        %2697 = vmatpush1.bf16.xpose.msra.mxu0 0
        %2698 = vmatprep.subr.bf16.mxu0 0
        %2699 = vmatpush1.bf16.xpose.msra.mxu0 0
        %2700 = vmatprep.subr.bf16.mxu0 0
        %2701 = vmatpush1.bf16.xpose.msra.mxu0 0
        %2702 = vmatprep.subr.bf16.mxu0 0
        %2703 = vmatpush1.bf16.xpose.msra.mxu0 0
        %2704 = vmatprep.mubr.bf16.mxu0 0
        %2705 = vmatmul.mubr.bf16.gmra.mrb[0].mxu0 %v2667
        %v2706 = vpop.f32.mrb[0].mxu0
        %v2707 = vadd.f32 %v2377, %v2706
        %v2708 = vpop.f32.mrb[0].mxu0
        %v2709 = vpop.f32.mrb[0].mxu0
        %v2710 = vpop.f32.mrb[0].mxu0
        %2711 = vdwg.mxu0
        %v2713 = vsel %vm740, %v2325, 0
        %v2716 = vsel %vm740, %v2333, 0
        %2718 = vmatprep.subr.bf16.mxu0 0
        %2719 = vmatpush1.bf16.xpose.msra.mxu0 %v2716
        %2720 = vmatprep.subr.bf16.mxu0 0
        %2721 = vmatpush1.bf16.xpose.msra.mxu0 0
        %2722 = vmatprep.subr.bf16.mxu0 0
        %2723 = vmatpush1.bf16.xpose.msra.mxu0 0
        %2724 = vmatprep.subr.bf16.mxu0 0
        %2725 = vmatpush1.bf16.xpose.msra.mxu0 0
        %2726 = vmatprep.subr.bf16.mxu0 0
        %2727 = vmatpush1.bf16.xpose.msra.mxu0 0
        %2728 = vmatprep.subr.bf16.mxu0 0
        %2729 = vmatpush1.bf16.xpose.msra.mxu0 0
        %2730 = vmatprep.subr.bf16.mxu0 0
        %2731 = vmatpush1.bf16.xpose.msra.mxu0 0
        %2732 = vmatprep.subr.bf16.mxu0 0
        %2733 = vmatpush1.bf16.xpose.msra.mxu0 0
        %2734 = vmatprep.subr.bf16.mxu0 0
        %2735 = vmatpush1.bf16.xpose.msra.mxu0 0
        %2736 = vmatprep.subr.bf16.mxu0 0
        %2737 = vmatpush1.bf16.xpose.msra.mxu0 0
        %2738 = vmatprep.subr.bf16.mxu0 0
        %2739 = vmatpush1.bf16.xpose.msra.mxu0 0
        %2740 = vmatprep.subr.bf16.mxu0 0
        %2741 = vmatpush1.bf16.xpose.msra.mxu0 0
        %2742 = vmatprep.subr.bf16.mxu0 0
        %2743 = vmatpush1.bf16.xpose.msra.mxu0 0
        %2744 = vmatprep.subr.bf16.mxu0 0
        %2745 = vmatpush1.bf16.xpose.msra.mxu0 0
        %2746 = vmatprep.subr.bf16.mxu0 0
        %2747 = vmatpush1.bf16.xpose.msra.mxu0 0
        %2748 = vmatprep.subr.bf16.mxu0 0
        %2749 = vmatpush1.bf16.xpose.msra.mxu0 0
        %2750 = vmatprep.mubr.bf16.mxu0 0
        %2751 = vmatmul.mubr.bf16.gmra.mrb[0].mxu0 %v2713
        %v2752 = vpop.f32.mrb[0].mxu0
        %v2753 = vadd.f32 %v2381, %v2752
        %v2754 = vpop.f32.mrb[0].mxu0
        %v2755 = vpop.f32.mrb[0].mxu0
        %v2756 = vpop.f32.mrb[0].mxu0
        %2757 = vdwg.mxu0
        %v2758 = vmul.f32 %v2431, 0.5
        %v2759 = vmul.f32 %v2477, 0.5
        %v2760 = vmul.f32 %v2523, 0.5
        %v2761 = vmul.f32 %v2569, 0.5
        %v2762 = vmul.f32 %v2615, 0.5
        %v2763 = vmul.f32 %v2661, 0.5
        %v2764 = vmul.f32 %v2707, 0.5
        %v2765 = vmul.f32 %v2753, 0.5
        %v2766 = vmul.f32 %v2431, 0.70710677
        %v2767 = vmul.f32 %v2477, 0.70710677
        %v2768 = vmul.f32 %v2523, 0.70710677
        %v2769 = vmul.f32 %v2569, 0.70710677
        %v2770 = vmul.f32 %v2615, 0.70710677
        %v2771 = vmul.f32 %v2661, 0.70710677
        %v2772 = vmul.f32 %v2707, 0.70710677
        %v2773 = vmul.f32 %v2753, 0.70710677
        %v2774 = verf.f32.pop %v2766
        %v2775 = verf.f32.pop %v2767
        %v2776 = verf.f32.pop %v2768
        %v2777 = verf.f32.pop %v2769
        %v2778 = verf.f32.pop %v2770
        %v2779 = verf.f32.pop %v2771
        %v2780 = verf.f32.pop %v2772
        %v2781 = verf.f32.pop %v2773
        %v2782 = vadd.f32 %v2774, 1.0
        %v2783 = vadd.f32 %v2775, 1.0
        %v2784 = vadd.f32 %v2776, 1.0
        %v2785 = vadd.f32 %v2777, 1.0
        %v2786 = vadd.f32 %v2778, 1.0
        %v2787 = vadd.f32 %v2779, 1.0
        %v2788 = vadd.f32 %v2780, 1.0
        %v2789 = vadd.f32 %v2781, 1.0
        %v2790 = vmul.f32 %v2758, %v2782
        %v2791 = vmul.f32 %v2759, %v2783
        %v2792 = vmul.f32 %v2760, %v2784
        %v2793 = vmul.f32 %v2761, %v2785
        %v2794 = vmul.f32 %v2762, %v2786
        %v2795 = vmul.f32 %v2763, %v2787
        %v2796 = vmul.f32 %v2764, %v2788
        %v2797 = vmul.f32 %v2765, %v2789
        %v2798 = vpack.c.bf16 %v2790, %v2790
        %v2799 = vpack.c.bf16 %v2791, %v2791
        %v2800 = vpack.c.bf16 %v2792, %v2792
        %v2801 = vpack.c.bf16 %v2793, %v2793
        %v2802 = vpack.c.bf16 %v2794, %v2794
        %v2803 = vpack.c.bf16 %v2795, %v2795
        %v2804 = vpack.c.bf16 %v2796, %v2796
        %v2805 = vpack.c.bf16 %v2797, %v2797
        %v2806 = vld [vmem:[%s532] sm:$0xf]
        %v2807 = vld [vmem:[%s532 + $0x4] sm:$0xf]
        %v2808 = vld [vmem:[%s532 + $0x8] sm:$0xf]
        %v2809 = vld [vmem:[%s532 + $0xc] sm:$0xf]
        %v2810 = vld [vmem:[%s532 + $0x10] sm:$0xf]
        %v2811 = vld [vmem:[%s532 + $0x14] sm:$0xf]
        %v2812 = vld [vmem:[%s532 + $0x18] sm:$0xf]
        %v2813 = vld [vmem:[%s532 + $0x1c] sm:$0xf]
        %v2814 = vld [vmem:[%s532 + $0x20] sm:$0xf]
        %v2815 = vld [vmem:[%s532 + $0x24] sm:$0xf]
        %v2816 = vld [vmem:[%s532 + $0x28] sm:$0xf]
        %v2817 = vld [vmem:[%s532 + $0x2c] sm:$0xf]
        %v2818 = vld [vmem:[%s532 + $0x30] sm:$0xf]
        %v2819 = vld [vmem:[%s532 + $0x34] sm:$0xf]
        %v2820 = vld [vmem:[%s532 + $0x38] sm:$0xf]
        %v2821 = vld [vmem:[%s532 + $0x3c] sm:$0xf]
        %v2822 = vld [vmem:[%s532 + $0x40] sm:$0xf]
        %v2823 = vld [vmem:[%s532 + $0x44] sm:$0xf]
        %v2824 = vld [vmem:[%s532 + $0x48] sm:$0xf]
        %v2825 = vld [vmem:[%s532 + $0x4c] sm:$0xf]
        %v2826 = vld [vmem:[%s532 + $0x50] sm:$0xf]
        %v2827 = vld [vmem:[%s532 + $0x54] sm:$0xf]
        %v2828 = vld [vmem:[%s532 + $0x58] sm:$0xf]
        %v2829 = vld [vmem:[%s532 + $0x5c] sm:$0xf]
        %v2830 = vld [vmem:[%s532 + $0x60] sm:$0xf]
        %v2831 = vld [vmem:[%s532 + $0x64] sm:$0xf]
        %v2832 = vld [vmem:[%s532 + $0x68] sm:$0xf]
        %v2833 = vld [vmem:[%s532 + $0x6c] sm:$0xf]
        %v2834 = vld [vmem:[%s532 + $0x70] sm:$0xf]
        %v2835 = vld [vmem:[%s532 + $0x74] sm:$0xf]
        %v2836 = vld [vmem:[%s532 + $0x78] sm:$0xf]
        %v2837 = vld [vmem:[%s532 + $0x7c] sm:$0xf]
        %v2838 = vld [vmem:[%s536] sm:$0x1]
        %v2839 = vld [vmem:[%s536 + $0x1] sm:$0x1]
        %v2840 = vld [vmem:[%s536 + $0x2] sm:$0x1]
        %v2841 = vld [vmem:[%s536 + $0x3] sm:$0x1]
        %v2842 = vld [vmem:[%s536 + $0x4] sm:$0x1]
        %v2843 = vld [vmem:[%s536 + $0x5] sm:$0x1]
        %v2844 = vld [vmem:[%s536 + $0x6] sm:$0x1]
        %v2845 = vld [vmem:[%s536 + $0x7] sm:$0x1]
        %v2854 = vlaneseq
        %v2855 = vshrl.u32 %v2854, 7
        %v2856 = vsub.s32 0, %v2855
        %v2857 = vrot.slane %v2838, %v2856
        %v2858 = vlaneseq
        %v2859 = vshrl.u32 %v2858, 7
        %v2860 = vsub.s32 0, %v2859
        %v2861 = vrot.slane %v2839, %v2860
        %v2862 = vlaneseq
        %v2863 = vshrl.u32 %v2862, 7
        %v2864 = vsub.s32 0, %v2863
        %v2865 = vrot.slane %v2840, %v2864
        %v2866 = vlaneseq
        %v2867 = vshrl.u32 %v2866, 7
        %v2868 = vsub.s32 0, %v2867
        %v2869 = vrot.slane %v2841, %v2868
        %v2870 = vlaneseq
        %v2871 = vshrl.u32 %v2870, 7
        %v2872 = vsub.s32 0, %v2871
        %v2873 = vrot.slane %v2842, %v2872
        %v2874 = vlaneseq
        %v2875 = vshrl.u32 %v2874, 7
        %v2876 = vsub.s32 0, %v2875
        %v2877 = vrot.slane %v2843, %v2876
        %v2878 = vlaneseq
        %v2879 = vshrl.u32 %v2878, 7
        %v2880 = vsub.s32 0, %v2879
        %v2881 = vrot.slane %v2844, %v2880
        %v2882 = vlaneseq
        %v2883 = vshrl.u32 %v2882, 7
        %v2884 = vsub.s32 0, %v2883
        %v2885 = vrot.slane %v2845, %v2884
        %v2898 = vunpack.c.l.b16 %v2806
        %v2899 = vunpack.c.l.b16 %v2807
        %v2900 = vunpack.c.l.b16 %v2808
        %v2901 = vunpack.c.l.b16 %v2809
        %v2902 = vpack.c.b16 %v2899, %v2898
        %v2903 = vpack.c.b16 %v2901, %v2900
        %vm2904 = vcmask 31744
        %v2906 = vsel %vm2904, %v2798, 0
        %v2909 = vsel %vm2904, %v2902, 0
        %v2912 = vsel %vm2904, %v2903, 0
        %2914 = vmatprep.subr.bf16.mxu0 0
        %2915 = vmatpush1.bf16.xpose.msra.mxu0 %v2909
        %2916 = vmatprep.subr.bf16.mxu0 0
        %2917 = vmatpush1.bf16.xpose.msra.mxu0 %v2912
        %2918 = vmatprep.subr.bf16.mxu0 0
        %2919 = vmatpush1.bf16.xpose.msra.mxu0 0
        %2920 = vmatprep.subr.bf16.mxu0 0
        %2921 = vmatpush1.bf16.xpose.msra.mxu0 0
        %2922 = vmatprep.subr.bf16.mxu0 0
        %2923 = vmatpush1.bf16.xpose.msra.mxu0 0
        %2924 = vmatprep.subr.bf16.mxu0 0
        %2925 = vmatpush1.bf16.xpose.msra.mxu0 0
        %2926 = vmatprep.subr.bf16.mxu0 0
        %2927 = vmatpush1.bf16.xpose.msra.mxu0 0
        %2928 = vmatprep.subr.bf16.mxu0 0
        %2929 = vmatpush1.bf16.xpose.msra.mxu0 0
        %2930 = vmatprep.subr.bf16.mxu0 0
        %2931 = vmatpush1.bf16.xpose.msra.mxu0 0
        %2932 = vmatprep.subr.bf16.mxu0 0
        %2933 = vmatpush1.bf16.xpose.msra.mxu0 0
        %2934 = vmatprep.subr.bf16.mxu0 0
        %2935 = vmatpush1.bf16.xpose.msra.mxu0 0
        %2936 = vmatprep.subr.bf16.mxu0 0
        %2937 = vmatpush1.bf16.xpose.msra.mxu0 0
        %2938 = vmatprep.subr.bf16.mxu0 0
        %2939 = vmatpush1.bf16.xpose.msra.mxu0 0
        %2940 = vmatprep.subr.bf16.mxu0 0
        %2941 = vmatpush1.bf16.xpose.msra.mxu0 0
        %2942 = vmatprep.subr.bf16.mxu0 0
        %2943 = vmatpush1.bf16.xpose.msra.mxu0 0
        %2944 = vmatprep.subr.bf16.mxu0 0
        %2945 = vmatpush1.bf16.xpose.msra.mxu0 0
        %2946 = vmatprep.mubr.bf16.mxu0 0
        %2947 = vmatmul.mubr.bf16.gmra.mrb[0].mxu0 %v2906
        %v2948 = vpop.f32.mrb[0].mxu0
        %v2949 = vadd.f32 %v2857, %v2948
        %v2950 = vpop.f32.mrb[0].mxu0
        %v2951 = vpop.f32.mrb[0].mxu0
        %v2952 = vpop.f32.mrb[0].mxu0
        %2953 = vdwg.mxu0
        %v2958 = vunpack.c.l.b16 %v2810
        %v2959 = vunpack.c.l.b16 %v2811
        %v2960 = vunpack.c.l.b16 %v2812
        %v2961 = vunpack.c.l.b16 %v2813
        %v2962 = vpack.c.b16 %v2959, %v2958
        %v2963 = vpack.c.b16 %v2961, %v2960
        %v2965 = vsel %vm2904, %v2799, 0
        %v2968 = vsel %vm2904, %v2962, 0
        %v2971 = vsel %vm2904, %v2963, 0
        %2973 = vmatprep.subr.bf16.mxu0 0
        %2974 = vmatpush1.bf16.xpose.msra.mxu0 %v2968
        %2975 = vmatprep.subr.bf16.mxu0 0
        %2976 = vmatpush1.bf16.xpose.msra.mxu0 %v2971
        %2977 = vmatprep.subr.bf16.mxu0 0
        %2978 = vmatpush1.bf16.xpose.msra.mxu0 0
        %2979 = vmatprep.subr.bf16.mxu0 0
        %2980 = vmatpush1.bf16.xpose.msra.mxu0 0
        %2981 = vmatprep.subr.bf16.mxu0 0
        %2982 = vmatpush1.bf16.xpose.msra.mxu0 0
        %2983 = vmatprep.subr.bf16.mxu0 0
        %2984 = vmatpush1.bf16.xpose.msra.mxu0 0
        %2985 = vmatprep.subr.bf16.mxu0 0
        %2986 = vmatpush1.bf16.xpose.msra.mxu0 0
        %2987 = vmatprep.subr.bf16.mxu0 0
        %2988 = vmatpush1.bf16.xpose.msra.mxu0 0
        %2989 = vmatprep.subr.bf16.mxu0 0
        %2990 = vmatpush1.bf16.xpose.msra.mxu0 0
        %2991 = vmatprep.subr.bf16.mxu0 0
        %2992 = vmatpush1.bf16.xpose.msra.mxu0 0
        %2993 = vmatprep.subr.bf16.mxu0 0
        %2994 = vmatpush1.bf16.xpose.msra.mxu0 0
        %2995 = vmatprep.subr.bf16.mxu0 0
        %2996 = vmatpush1.bf16.xpose.msra.mxu0 0
        %2997 = vmatprep.subr.bf16.mxu0 0
        %2998 = vmatpush1.bf16.xpose.msra.mxu0 0
        %2999 = vmatprep.subr.bf16.mxu0 0
        %3000 = vmatpush1.bf16.xpose.msra.mxu0 0
        %3001 = vmatprep.subr.bf16.mxu0 0
        %3002 = vmatpush1.bf16.xpose.msra.mxu0 0
        %3003 = vmatprep.subr.bf16.mxu0 0
        %3004 = vmatpush1.bf16.xpose.msra.mxu0 0
        %3005 = vmatprep.mubr.bf16.mxu0 0
        %3006 = vmatmul.mubr.bf16.gmra.mrb[0].mxu0 %v2965
        %v3007 = vpop.f32.mrb[0].mxu0
        %v3008 = vadd.f32 %v2861, %v3007
        %v3009 = vpop.f32.mrb[0].mxu0
        %v3010 = vpop.f32.mrb[0].mxu0
        %v3011 = vpop.f32.mrb[0].mxu0
        %3012 = vdwg.mxu0
        %v3017 = vunpack.c.l.b16 %v2814
        %v3018 = vunpack.c.l.b16 %v2815
        %v3019 = vunpack.c.l.b16 %v2816
        %v3020 = vunpack.c.l.b16 %v2817
        %v3021 = vpack.c.b16 %v3018, %v3017
        %v3022 = vpack.c.b16 %v3020, %v3019
        %v3024 = vsel %vm2904, %v2800, 0
        %v3027 = vsel %vm2904, %v3021, 0
        %v3030 = vsel %vm2904, %v3022, 0
        %3032 = vmatprep.subr.bf16.mxu0 0
        %3033 = vmatpush1.bf16.xpose.msra.mxu0 %v3027
        %3034 = vmatprep.subr.bf16.mxu0 0
        %3035 = vmatpush1.bf16.xpose.msra.mxu0 %v3030
        %3036 = vmatprep.subr.bf16.mxu0 0
        %3037 = vmatpush1.bf16.xpose.msra.mxu0 0
        %3038 = vmatprep.subr.bf16.mxu0 0
        %3039 = vmatpush1.bf16.xpose.msra.mxu0 0
        %3040 = vmatprep.subr.bf16.mxu0 0
        %3041 = vmatpush1.bf16.xpose.msra.mxu0 0
        %3042 = vmatprep.subr.bf16.mxu0 0
        %3043 = vmatpush1.bf16.xpose.msra.mxu0 0
        %3044 = vmatprep.subr.bf16.mxu0 0
        %3045 = vmatpush1.bf16.xpose.msra.mxu0 0
        %3046 = vmatprep.subr.bf16.mxu0 0
        %3047 = vmatpush1.bf16.xpose.msra.mxu0 0
        %3048 = vmatprep.subr.bf16.mxu0 0
        %3049 = vmatpush1.bf16.xpose.msra.mxu0 0
        %3050 = vmatprep.subr.bf16.mxu0 0
        %3051 = vmatpush1.bf16.xpose.msra.mxu0 0
        %3052 = vmatprep.subr.bf16.mxu0 0
        %3053 = vmatpush1.bf16.xpose.msra.mxu0 0
        %3054 = vmatprep.subr.bf16.mxu0 0
        %3055 = vmatpush1.bf16.xpose.msra.mxu0 0
        %3056 = vmatprep.subr.bf16.mxu0 0
        %3057 = vmatpush1.bf16.xpose.msra.mxu0 0
        %3058 = vmatprep.subr.bf16.mxu0 0
        %3059 = vmatpush1.bf16.xpose.msra.mxu0 0
        %3060 = vmatprep.subr.bf16.mxu0 0
        %3061 = vmatpush1.bf16.xpose.msra.mxu0 0
        %3062 = vmatprep.subr.bf16.mxu0 0
        %3063 = vmatpush1.bf16.xpose.msra.mxu0 0
        %3064 = vmatprep.mubr.bf16.mxu0 0
        %3065 = vmatmul.mubr.bf16.gmra.mrb[0].mxu0 %v3024
        %v3066 = vpop.f32.mrb[0].mxu0
        %v3067 = vadd.f32 %v2865, %v3066
        %v3068 = vpop.f32.mrb[0].mxu0
        %v3069 = vpop.f32.mrb[0].mxu0
        %v3070 = vpop.f32.mrb[0].mxu0
        %3071 = vdwg.mxu0
        %v3076 = vunpack.c.l.b16 %v2818
        %v3077 = vunpack.c.l.b16 %v2819
        %v3078 = vunpack.c.l.b16 %v2820
        %v3079 = vunpack.c.l.b16 %v2821
        %v3080 = vpack.c.b16 %v3077, %v3076
        %v3081 = vpack.c.b16 %v3079, %v3078
        %v3083 = vsel %vm2904, %v2801, 0
        %v3086 = vsel %vm2904, %v3080, 0
        %v3089 = vsel %vm2904, %v3081, 0
        %3091 = vmatprep.subr.bf16.mxu0 0
        %3092 = vmatpush1.bf16.xpose.msra.mxu0 %v3086
        %3093 = vmatprep.subr.bf16.mxu0 0
        %3094 = vmatpush1.bf16.xpose.msra.mxu0 %v3089
        %3095 = vmatprep.subr.bf16.mxu0 0
        %3096 = vmatpush1.bf16.xpose.msra.mxu0 0
        %3097 = vmatprep.subr.bf16.mxu0 0
        %3098 = vmatpush1.bf16.xpose.msra.mxu0 0
        %3099 = vmatprep.subr.bf16.mxu0 0
        %3100 = vmatpush1.bf16.xpose.msra.mxu0 0
        %3101 = vmatprep.subr.bf16.mxu0 0
        %3102 = vmatpush1.bf16.xpose.msra.mxu0 0
        %3103 = vmatprep.subr.bf16.mxu0 0
        %3104 = vmatpush1.bf16.xpose.msra.mxu0 0
        %3105 = vmatprep.subr.bf16.mxu0 0
        %3106 = vmatpush1.bf16.xpose.msra.mxu0 0
        %3107 = vmatprep.subr.bf16.mxu0 0
        %3108 = vmatpush1.bf16.xpose.msra.mxu0 0
        %3109 = vmatprep.subr.bf16.mxu0 0
        %3110 = vmatpush1.bf16.xpose.msra.mxu0 0
        %3111 = vmatprep.subr.bf16.mxu0 0
        %3112 = vmatpush1.bf16.xpose.msra.mxu0 0
        %3113 = vmatprep.subr.bf16.mxu0 0
        %3114 = vmatpush1.bf16.xpose.msra.mxu0 0
        %3115 = vmatprep.subr.bf16.mxu0 0
        %3116 = vmatpush1.bf16.xpose.msra.mxu0 0
        %3117 = vmatprep.subr.bf16.mxu0 0
        %3118 = vmatpush1.bf16.xpose.msra.mxu0 0
        %3119 = vmatprep.subr.bf16.mxu0 0
        %3120 = vmatpush1.bf16.xpose.msra.mxu0 0
        %3121 = vmatprep.subr.bf16.mxu0 0
        %3122 = vmatpush1.bf16.xpose.msra.mxu0 0
        %3123 = vmatprep.mubr.bf16.mxu0 0
        %3124 = vmatmul.mubr.bf16.gmra.mrb[0].mxu0 %v3083
        %v3125 = vpop.f32.mrb[0].mxu0
        %v3126 = vadd.f32 %v2869, %v3125
        %v3127 = vpop.f32.mrb[0].mxu0
        %v3128 = vpop.f32.mrb[0].mxu0
        %v3129 = vpop.f32.mrb[0].mxu0
        %3130 = vdwg.mxu0
        %v3135 = vunpack.c.l.b16 %v2822
        %v3136 = vunpack.c.l.b16 %v2823
        %v3137 = vunpack.c.l.b16 %v2824
        %v3138 = vunpack.c.l.b16 %v2825
        %v3139 = vpack.c.b16 %v3136, %v3135
        %v3140 = vpack.c.b16 %v3138, %v3137
        %v3142 = vsel %vm2904, %v2802, 0
        %v3145 = vsel %vm2904, %v3139, 0
        %v3148 = vsel %vm2904, %v3140, 0
        %3150 = vmatprep.subr.bf16.mxu0 0
        %3151 = vmatpush1.bf16.xpose.msra.mxu0 %v3145
        %3152 = vmatprep.subr.bf16.mxu0 0
        %3153 = vmatpush1.bf16.xpose.msra.mxu0 %v3148
        %3154 = vmatprep.subr.bf16.mxu0 0
        %3155 = vmatpush1.bf16.xpose.msra.mxu0 0
        %3156 = vmatprep.subr.bf16.mxu0 0
        %3157 = vmatpush1.bf16.xpose.msra.mxu0 0
        %3158 = vmatprep.subr.bf16.mxu0 0
        %3159 = vmatpush1.bf16.xpose.msra.mxu0 0
        %3160 = vmatprep.subr.bf16.mxu0 0
        %3161 = vmatpush1.bf16.xpose.msra.mxu0 0
        %3162 = vmatprep.subr.bf16.mxu0 0
        %3163 = vmatpush1.bf16.xpose.msra.mxu0 0
        %3164 = vmatprep.subr.bf16.mxu0 0
        %3165 = vmatpush1.bf16.xpose.msra.mxu0 0
        %3166 = vmatprep.subr.bf16.mxu0 0
        %3167 = vmatpush1.bf16.xpose.msra.mxu0 0
        %3168 = vmatprep.subr.bf16.mxu0 0
        %3169 = vmatpush1.bf16.xpose.msra.mxu0 0
        %3170 = vmatprep.subr.bf16.mxu0 0
        %3171 = vmatpush1.bf16.xpose.msra.mxu0 0
        %3172 = vmatprep.subr.bf16.mxu0 0
        %3173 = vmatpush1.bf16.xpose.msra.mxu0 0
        %3174 = vmatprep.subr.bf16.mxu0 0
        %3175 = vmatpush1.bf16.xpose.msra.mxu0 0
        %3176 = vmatprep.subr.bf16.mxu0 0
        %3177 = vmatpush1.bf16.xpose.msra.mxu0 0
        %3178 = vmatprep.subr.bf16.mxu0 0
        %3179 = vmatpush1.bf16.xpose.msra.mxu0 0
        %3180 = vmatprep.subr.bf16.mxu0 0
        %3181 = vmatpush1.bf16.xpose.msra.mxu0 0
        %3182 = vmatprep.mubr.bf16.mxu0 0
        %3183 = vmatmul.mubr.bf16.gmra.mrb[0].mxu0 %v3142
        %v3184 = vpop.f32.mrb[0].mxu0
        %v3185 = vadd.f32 %v2873, %v3184
        %v3186 = vpop.f32.mrb[0].mxu0
        %v3187 = vpop.f32.mrb[0].mxu0
        %v3188 = vpop.f32.mrb[0].mxu0
        %3189 = vdwg.mxu0
        %v3194 = vunpack.c.l.b16 %v2826
        %v3195 = vunpack.c.l.b16 %v2827
        %v3196 = vunpack.c.l.b16 %v2828
        %v3197 = vunpack.c.l.b16 %v2829
        %v3198 = vpack.c.b16 %v3195, %v3194
        %v3199 = vpack.c.b16 %v3197, %v3196
        %v3201 = vsel %vm2904, %v2803, 0
        %v3204 = vsel %vm2904, %v3198, 0
        %v3207 = vsel %vm2904, %v3199, 0
        %3209 = vmatprep.subr.bf16.mxu0 0
        %3210 = vmatpush1.bf16.xpose.msra.mxu0 %v3204
        %3211 = vmatprep.subr.bf16.mxu0 0
        %3212 = vmatpush1.bf16.xpose.msra.mxu0 %v3207
        %3213 = vmatprep.subr.bf16.mxu0 0
        %3214 = vmatpush1.bf16.xpose.msra.mxu0 0
        %3215 = vmatprep.subr.bf16.mxu0 0
        %3216 = vmatpush1.bf16.xpose.msra.mxu0 0
        %3217 = vmatprep.subr.bf16.mxu0 0
        %3218 = vmatpush1.bf16.xpose.msra.mxu0 0
        %3219 = vmatprep.subr.bf16.mxu0 0
        %3220 = vmatpush1.bf16.xpose.msra.mxu0 0
        %3221 = vmatprep.subr.bf16.mxu0 0
        %3222 = vmatpush1.bf16.xpose.msra.mxu0 0
        %3223 = vmatprep.subr.bf16.mxu0 0
        %3224 = vmatpush1.bf16.xpose.msra.mxu0 0
        %3225 = vmatprep.subr.bf16.mxu0 0
        %3226 = vmatpush1.bf16.xpose.msra.mxu0 0
        %3227 = vmatprep.subr.bf16.mxu0 0
        %3228 = vmatpush1.bf16.xpose.msra.mxu0 0
        %3229 = vmatprep.subr.bf16.mxu0 0
        %3230 = vmatpush1.bf16.xpose.msra.mxu0 0
        %3231 = vmatprep.subr.bf16.mxu0 0
        %3232 = vmatpush1.bf16.xpose.msra.mxu0 0
        %3233 = vmatprep.subr.bf16.mxu0 0
        %3234 = vmatpush1.bf16.xpose.msra.mxu0 0
        %3235 = vmatprep.subr.bf16.mxu0 0
        %3236 = vmatpush1.bf16.xpose.msra.mxu0 0
        %3237 = vmatprep.subr.bf16.mxu0 0
        %3238 = vmatpush1.bf16.xpose.msra.mxu0 0
        %3239 = vmatprep.subr.bf16.mxu0 0
        %3240 = vmatpush1.bf16.xpose.msra.mxu0 0
        %3241 = vmatprep.mubr.bf16.mxu0 0
        %3242 = vmatmul.mubr.bf16.gmra.mrb[0].mxu0 %v3201
        %v3243 = vpop.f32.mrb[0].mxu0
        %v3244 = vadd.f32 %v2877, %v3243
        %v3245 = vpop.f32.mrb[0].mxu0
        %v3246 = vpop.f32.mrb[0].mxu0
        %v3247 = vpop.f32.mrb[0].mxu0
        %3248 = vdwg.mxu0
        %v3253 = vunpack.c.l.b16 %v2830
        %v3254 = vunpack.c.l.b16 %v2831
        %v3255 = vunpack.c.l.b16 %v2832
        %v3256 = vunpack.c.l.b16 %v2833
        %v3257 = vpack.c.b16 %v3254, %v3253
        %v3258 = vpack.c.b16 %v3256, %v3255
        %v3260 = vsel %vm2904, %v2804, 0
        %v3263 = vsel %vm2904, %v3257, 0
        %v3266 = vsel %vm2904, %v3258, 0
        %3268 = vmatprep.subr.bf16.mxu0 0
        %3269 = vmatpush1.bf16.xpose.msra.mxu0 %v3263
        %3270 = vmatprep.subr.bf16.mxu0 0
        %3271 = vmatpush1.bf16.xpose.msra.mxu0 %v3266
        %3272 = vmatprep.subr.bf16.mxu0 0
        %3273 = vmatpush1.bf16.xpose.msra.mxu0 0
        %3274 = vmatprep.subr.bf16.mxu0 0
        %3275 = vmatpush1.bf16.xpose.msra.mxu0 0
        %3276 = vmatprep.subr.bf16.mxu0 0
        %3277 = vmatpush1.bf16.xpose.msra.mxu0 0
        %3278 = vmatprep.subr.bf16.mxu0 0
        %3279 = vmatpush1.bf16.xpose.msra.mxu0 0
        %3280 = vmatprep.subr.bf16.mxu0 0
        %3281 = vmatpush1.bf16.xpose.msra.mxu0 0
        %3282 = vmatprep.subr.bf16.mxu0 0
        %3283 = vmatpush1.bf16.xpose.msra.mxu0 0
        %3284 = vmatprep.subr.bf16.mxu0 0
        %3285 = vmatpush1.bf16.xpose.msra.mxu0 0
        %3286 = vmatprep.subr.bf16.mxu0 0
        %3287 = vmatpush1.bf16.xpose.msra.mxu0 0
        %3288 = vmatprep.subr.bf16.mxu0 0
        %3289 = vmatpush1.bf16.xpose.msra.mxu0 0
        %3290 = vmatprep.subr.bf16.mxu0 0
        %3291 = vmatpush1.bf16.xpose.msra.mxu0 0
        %3292 = vmatprep.subr.bf16.mxu0 0
        %3293 = vmatpush1.bf16.xpose.msra.mxu0 0
        %3294 = vmatprep.subr.bf16.mxu0 0
        %3295 = vmatpush1.bf16.xpose.msra.mxu0 0
        %3296 = vmatprep.subr.bf16.mxu0 0
        %3297 = vmatpush1.bf16.xpose.msra.mxu0 0
        %3298 = vmatprep.subr.bf16.mxu0 0
        %3299 = vmatpush1.bf16.xpose.msra.mxu0 0
        %3300 = vmatprep.mubr.bf16.mxu0 0
        %3301 = vmatmul.mubr.bf16.gmra.mrb[0].mxu0 %v3260
        %v3302 = vpop.f32.mrb[0].mxu0
        %v3303 = vadd.f32 %v2881, %v3302
        %v3304 = vpop.f32.mrb[0].mxu0
        %v3305 = vpop.f32.mrb[0].mxu0
        %v3306 = vpop.f32.mrb[0].mxu0
        %3307 = vdwg.mxu0
        %v3312 = vunpack.c.l.b16 %v2834
        %v3313 = vunpack.c.l.b16 %v2835
        %v3314 = vunpack.c.l.b16 %v2836
        %v3315 = vunpack.c.l.b16 %v2837
        %v3316 = vpack.c.b16 %v3313, %v3312
        %v3317 = vpack.c.b16 %v3315, %v3314
        %v3319 = vsel %vm2904, %v2805, 0
        %v3322 = vsel %vm2904, %v3316, 0
        %v3325 = vsel %vm2904, %v3317, 0
        %3327 = vmatprep.subr.bf16.mxu0 0
        %3328 = vmatpush1.bf16.xpose.msra.mxu0 %v3322
        %3329 = vmatprep.subr.bf16.mxu0 0
        %3330 = vmatpush1.bf16.xpose.msra.mxu0 %v3325
        %3331 = vmatprep.subr.bf16.mxu0 0
        %3332 = vmatpush1.bf16.xpose.msra.mxu0 0
        %3333 = vmatprep.subr.bf16.mxu0 0
        %3334 = vmatpush1.bf16.xpose.msra.mxu0 0
        %3335 = vmatprep.subr.bf16.mxu0 0
        %3336 = vmatpush1.bf16.xpose.msra.mxu0 0
        %3337 = vmatprep.subr.bf16.mxu0 0
        %3338 = vmatpush1.bf16.xpose.msra.mxu0 0
        %3339 = vmatprep.subr.bf16.mxu0 0
        %3340 = vmatpush1.bf16.xpose.msra.mxu0 0
        %3341 = vmatprep.subr.bf16.mxu0 0
        %3342 = vmatpush1.bf16.xpose.msra.mxu0 0
        %3343 = vmatprep.subr.bf16.mxu0 0
        %3344 = vmatpush1.bf16.xpose.msra.mxu0 0
        %3345 = vmatprep.subr.bf16.mxu0 0
        %3346 = vmatpush1.bf16.xpose.msra.mxu0 0
        %3347 = vmatprep.subr.bf16.mxu0 0
        %3348 = vmatpush1.bf16.xpose.msra.mxu0 0
        %3349 = vmatprep.subr.bf16.mxu0 0
        %3350 = vmatpush1.bf16.xpose.msra.mxu0 0
        %3351 = vmatprep.subr.bf16.mxu0 0
        %3352 = vmatpush1.bf16.xpose.msra.mxu0 0
        %3353 = vmatprep.subr.bf16.mxu0 0
        %3354 = vmatpush1.bf16.xpose.msra.mxu0 0
        %3355 = vmatprep.subr.bf16.mxu0 0
        %3356 = vmatpush1.bf16.xpose.msra.mxu0 0
        %3357 = vmatprep.subr.bf16.mxu0 0
        %3358 = vmatpush1.bf16.xpose.msra.mxu0 0
        %3359 = vmatprep.mubr.bf16.mxu0 0
        %3360 = vmatmul.mubr.bf16.gmra.mrb[0].mxu0 %v3319
        %v3361 = vpop.f32.mrb[0].mxu0
        %v3362 = vadd.f32 %v2885, %v3361
        %v3363 = vpop.f32.mrb[0].mxu0
        %v3364 = vpop.f32.mrb[0].mxu0
        %v3365 = vpop.f32.mrb[0].mxu0
        %3366 = vdwg.mxu0
        %3367 = vst.msk [vmem:[#allocation4] sm:$0xff] %vm740, %v2949
        %3368 = vst.msk [vmem:[#allocation4 + $0x8] sm:$0xff] %vm740, %v3008
        %3369 = vst.msk [vmem:[#allocation4 + $0x10] sm:$0xff] %vm740, %v3067
        %3370 = vst.msk [vmem:[#allocation4 + $0x18] sm:$0xff] %vm740, %v3126
        %3371 = vst.msk [vmem:[#allocation4 + $0x20] sm:$0xff] %vm740, %v3185
        %3372 = vst.msk [vmem:[#allocation4 + $0x28] sm:$0xff] %vm740, %v3244
        %3373 = vst.msk [vmem:[#allocation4 + $0x30] sm:$0xff] %vm740, %v3303
        %3374 = vst.msk [vmem:[#allocation4 + $0x38] sm:$0xff] %vm740, %v3362
        %v3375 = vld [vmem:[#allocation4] sm:$0x1]
        %v3376 = vld [vmem:[#allocation4 + $0x8] sm:$0x1]
        %v3377 = vld [vmem:[#allocation4 + $0x10] sm:$0x1]
        %v3378 = vld [vmem:[#allocation4 + $0x18] sm:$0x1]
        %v3379 = vld [vmem:[#allocation4 + $0x20] sm:$0x1]
        %v3380 = vld [vmem:[#allocation4 + $0x28] sm:$0x1]
        %v3381 = vld [vmem:[#allocation4 + $0x30] sm:$0x1]
        %v3382 = vld [vmem:[#allocation4 + $0x38] sm:$0x1]
        %v3391 = vrot.slane %v3376, 7
        %vm3392 = vcmask 1041409
        %v3393 = vsel %vm3392, %v3391, %v3375
        %v3394 = vrot.slane %v3377, 6
        %vm3395 = vcmask 1042434
        %v3396 = vsel %vm3395, %v3394, %v3393
        %v3397 = vrot.slane %v3378, 5
        %vm3398 = vcmask 1043459
        %v3399 = vsel %vm3398, %v3397, %v3396
        %v3400 = vrot.slane %v3379, 4
        %vm3401 = vcmask 1044484
        %v3402 = vsel %vm3401, %v3400, %v3399
        %v3403 = vrot.slane %v3380, 3
        %vm3404 = vcmask 1045509
        %v3405 = vsel %vm3404, %v3403, %v3402
        %v3406 = vrot.slane %v3381, 2
        %vm3407 = vcmask 1046534
        %v3408 = vsel %vm3407, %v3406, %v3405
        %v3409 = vrot.slane %v3382, 1
        %vm3410 = vcmask 1047559
        %v3411 = vsel %vm3410, %v3409, %v3408
        %v3413 = vadd.f32 %v1669, %v3411
        %3414 = vst.msk [vmem:[#allocation2] sm:$0xff] %vm740, %v3413
        %v3415 = vld [vmem:[#allocation4 + $0x1] sm:$0x1]
        %v3416 = vld [vmem:[#allocation4 + $0x9] sm:$0x1]
        %v3417 = vld [vmem:[#allocation4 + $0x11] sm:$0x1]
        %v3418 = vld [vmem:[#allocation4 + $0x19] sm:$0x1]
        %v3419 = vld [vmem:[#allocation4 + $0x21] sm:$0x1]
        %v3420 = vld [vmem:[#allocation4 + $0x29] sm:$0x1]
        %v3421 = vld [vmem:[#allocation4 + $0x31] sm:$0x1]
        %v3422 = vld [vmem:[#allocation4 + $0x39] sm:$0x1]
        %v3431 = vrot.slane %v3416, 7
        %v3432 = vsel %vm3392, %v3431, %v3415
        %v3433 = vrot.slane %v3417, 6
        %v3434 = vsel %vm3395, %v3433, %v3432
        %v3435 = vrot.slane %v3418, 5
        %v3436 = vsel %vm3398, %v3435, %v3434
        %v3437 = vrot.slane %v3419, 4
        %v3438 = vsel %vm3401, %v3437, %v3436
        %v3439 = vrot.slane %v3420, 3
        %v3440 = vsel %vm3404, %v3439, %v3438
        %v3441 = vrot.slane %v3421, 2
        %v3442 = vsel %vm3407, %v3441, %v3440
        %v3443 = vrot.slane %v3422, 1
        %v3444 = vsel %vm3410, %v3443, %v3442
        %v3446 = vadd.f32 %v1670, %v3444
        %s3447 = scalar_lea.vmem [#allocation2], 8
        %3448 = vst.msk [vmem:[%s3447] sm:$0xff] %vm740, %v3446
        %v3449 = vld [vmem:[#allocation4 + $0x2] sm:$0x1]
        %v3450 = vld [vmem:[#allocation4 + $0xa] sm:$0x1]
        %v3451 = vld [vmem:[#allocation4 + $0x12] sm:$0x1]
        %v3452 = vld [vmem:[#allocation4 + $0x1a] sm:$0x1]
        %v3453 = vld [vmem:[#allocation4 + $0x22] sm:$0x1]
        %v3454 = vld [vmem:[#allocation4 + $0x2a] sm:$0x1]
        %v3455 = vld [vmem:[#allocation4 + $0x32] sm:$0x1]
        %v3456 = vld [vmem:[#allocation4 + $0x3a] sm:$0x1]
        %v3465 = vrot.slane %v3450, 7
        %v3466 = vsel %vm3392, %v3465, %v3449
        %v3467 = vrot.slane %v3451, 6
        %v3468 = vsel %vm3395, %v3467, %v3466
        %v3469 = vrot.slane %v3452, 5
        %v3470 = vsel %vm3398, %v3469, %v3468
        %v3471 = vrot.slane %v3453, 4
        %v3472 = vsel %vm3401, %v3471, %v3470
        %v3473 = vrot.slane %v3454, 3
        %v3474 = vsel %vm3404, %v3473, %v3472
        %v3475 = vrot.slane %v3455, 2
        %v3476 = vsel %vm3407, %v3475, %v3474
        %v3477 = vrot.slane %v3456, 1
        %v3478 = vsel %vm3410, %v3477, %v3476
        %v3480 = vadd.f32 %v1671, %v3478
        %s3481 = scalar_lea.vmem [#allocation2], 16
        %3482 = vst.msk [vmem:[%s3481] sm:$0xff] %vm740, %v3480
        %v3483 = vld [vmem:[#allocation4 + $0x3] sm:$0x1]
        %v3484 = vld [vmem:[#allocation4 + $0xb] sm:$0x1]
        %v3485 = vld [vmem:[#allocation4 + $0x13] sm:$0x1]
        %v3486 = vld [vmem:[#allocation4 + $0x1b] sm:$0x1]
        %v3487 = vld [vmem:[#allocation4 + $0x23] sm:$0x1]
        %v3488 = vld [vmem:[#allocation4 + $0x2b] sm:$0x1]
        %v3489 = vld [vmem:[#allocation4 + $0x33] sm:$0x1]
        %v3490 = vld [vmem:[#allocation4 + $0x3b] sm:$0x1]
        %v3499 = vrot.slane %v3484, 7
        %v3500 = vsel %vm3392, %v3499, %v3483
        %v3501 = vrot.slane %v3485, 6
        %v3502 = vsel %vm3395, %v3501, %v3500
        %v3503 = vrot.slane %v3486, 5
        %v3504 = vsel %vm3398, %v3503, %v3502
        %v3505 = vrot.slane %v3487, 4
        %v3506 = vsel %vm3401, %v3505, %v3504
        %v3507 = vrot.slane %v3488, 3
        %v3508 = vsel %vm3404, %v3507, %v3506
        %v3509 = vrot.slane %v3489, 2
        %v3510 = vsel %vm3407, %v3509, %v3508
        %v3511 = vrot.slane %v3490, 1
        %v3512 = vsel %vm3410, %v3511, %v3510
        %v3514 = vadd.f32 %v1672, %v3512
        %s3515 = scalar_lea.vmem [#allocation2], 24
        %3516 = vst.msk [vmem:[%s3515] sm:$0xff] %vm740, %v3514
        %v3517 = vld [vmem:[#allocation4 + $0x4] sm:$0x1]
        %v3518 = vld [vmem:[#allocation4 + $0xc] sm:$0x1]
        %v3519 = vld [vmem:[#allocation4 + $0x14] sm:$0x1]
        %v3520 = vld [vmem:[#allocation4 + $0x1c] sm:$0x1]
        %v3521 = vld [vmem:[#allocation4 + $0x24] sm:$0x1]
        %v3522 = vld [vmem:[#allocation4 + $0x2c] sm:$0x1]
        %v3523 = vld [vmem:[#allocation4 + $0x34] sm:$0x1]
        %v3524 = vld [vmem:[#allocation4 + $0x3c] sm:$0x1]
        %v3533 = vrot.slane %v3518, 7
        %v3534 = vsel %vm3392, %v3533, %v3517
        %v3535 = vrot.slane %v3519, 6
        %v3536 = vsel %vm3395, %v3535, %v3534
        %v3537 = vrot.slane %v3520, 5
        %v3538 = vsel %vm3398, %v3537, %v3536
        %v3539 = vrot.slane %v3521, 4
        %v3540 = vsel %vm3401, %v3539, %v3538
        %v3541 = vrot.slane %v3522, 3
        %v3542 = vsel %vm3404, %v3541, %v3540
        %v3543 = vrot.slane %v3523, 2
        %v3544 = vsel %vm3407, %v3543, %v3542
        %v3545 = vrot.slane %v3524, 1
        %v3546 = vsel %vm3410, %v3545, %v3544
        %v3548 = vadd.f32 %v1673, %v3546
        %s3549 = scalar_lea.vmem [#allocation2], 32
        %3550 = vst.msk [vmem:[%s3549] sm:$0xff] %vm740, %v3548
        %v3551 = vld [vmem:[#allocation4 + $0x5] sm:$0x1]
        %v3552 = vld [vmem:[#allocation4 + $0xd] sm:$0x1]
        %v3553 = vld [vmem:[#allocation4 + $0x15] sm:$0x1]
        %v3554 = vld [vmem:[#allocation4 + $0x1d] sm:$0x1]
        %v3555 = vld [vmem:[#allocation4 + $0x25] sm:$0x1]
        %v3556 = vld [vmem:[#allocation4 + $0x2d] sm:$0x1]
        %v3557 = vld [vmem:[#allocation4 + $0x35] sm:$0x1]
        %v3558 = vld [vmem:[#allocation4 + $0x3d] sm:$0x1]
        %v3567 = vrot.slane %v3552, 7
        %v3568 = vsel %vm3392, %v3567, %v3551
        %v3569 = vrot.slane %v3553, 6
        %v3570 = vsel %vm3395, %v3569, %v3568
        %v3571 = vrot.slane %v3554, 5
        %v3572 = vsel %vm3398, %v3571, %v3570
        %v3573 = vrot.slane %v3555, 4
        %v3574 = vsel %vm3401, %v3573, %v3572
        %v3575 = vrot.slane %v3556, 3
        %v3576 = vsel %vm3404, %v3575, %v3574
        %v3577 = vrot.slane %v3557, 2
        %v3578 = vsel %vm3407, %v3577, %v3576
        %v3579 = vrot.slane %v3558, 1
        %v3580 = vsel %vm3410, %v3579, %v3578
        %v3582 = vadd.f32 %v1674, %v3580
        %s3583 = scalar_lea.vmem [#allocation2], 40
        %3584 = vst.msk [vmem:[%s3583] sm:$0xff] %vm740, %v3582
        %v3585 = vld [vmem:[#allocation4 + $0x6] sm:$0x1]
        %v3586 = vld [vmem:[#allocation4 + $0xe] sm:$0x1]
        %v3587 = vld [vmem:[#allocation4 + $0x16] sm:$0x1]
        %v3588 = vld [vmem:[#allocation4 + $0x1e] sm:$0x1]
        %v3589 = vld [vmem:[#allocation4 + $0x26] sm:$0x1]
        %v3590 = vld [vmem:[#allocation4 + $0x2e] sm:$0x1]
        %v3591 = vld [vmem:[#allocation4 + $0x36] sm:$0x1]
        %v3592 = vld [vmem:[#allocation4 + $0x3e] sm:$0x1]
        %v3601 = vrot.slane %v3586, 7
        %v3602 = vsel %vm3392, %v3601, %v3585
        %v3603 = vrot.slane %v3587, 6
        %v3604 = vsel %vm3395, %v3603, %v3602
        %v3605 = vrot.slane %v3588, 5
        %v3606 = vsel %vm3398, %v3605, %v3604
        %v3607 = vrot.slane %v3589, 4
        %v3608 = vsel %vm3401, %v3607, %v3606
        %v3609 = vrot.slane %v3590, 3
        %v3610 = vsel %vm3404, %v3609, %v3608
        %v3611 = vrot.slane %v3591, 2
        %v3612 = vsel %vm3407, %v3611, %v3610
        %v3613 = vrot.slane %v3592, 1
        %v3614 = vsel %vm3410, %v3613, %v3612
        %v3616 = vadd.f32 %v1675, %v3614
        %s3617 = scalar_lea.vmem [#allocation2], 48
        %3618 = vst.msk [vmem:[%s3617] sm:$0xff] %vm740, %v3616
        %v3619 = vld [vmem:[#allocation4 + $0x7] sm:$0x1]
        %v3620 = vld [vmem:[#allocation4 + $0xf] sm:$0x1]
        %v3621 = vld [vmem:[#allocation4 + $0x17] sm:$0x1]
        %v3622 = vld [vmem:[#allocation4 + $0x1f] sm:$0x1]
        %v3623 = vld [vmem:[#allocation4 + $0x27] sm:$0x1]
        %v3624 = vld [vmem:[#allocation4 + $0x2f] sm:$0x1]
        %v3625 = vld [vmem:[#allocation4 + $0x37] sm:$0x1]
        %v3626 = vld [vmem:[#allocation4 + $0x3f] sm:$0x1]
        %v3635 = vrot.slane %v3620, 7
        %v3636 = vsel %vm3392, %v3635, %v3619
        %v3637 = vrot.slane %v3621, 6
        %v3638 = vsel %vm3395, %v3637, %v3636
        %v3639 = vrot.slane %v3622, 5
        %v3640 = vsel %vm3398, %v3639, %v3638
        %v3641 = vrot.slane %v3623, 4
        %v3642 = vsel %vm3401, %v3641, %v3640
        %v3643 = vrot.slane %v3624, 3
        %v3644 = vsel %vm3404, %v3643, %v3642
        %v3645 = vrot.slane %v3625, 2
        %v3646 = vsel %vm3407, %v3645, %v3644
        %v3647 = vrot.slane %v3626, 1
        %v3648 = vsel %vm3410, %v3647, %v3646
        %v3650 = vadd.f32 %v1676, %v3648
        %s3651 = scalar_lea.vmem [#allocation2], 56
        %3652 = vst.msk [vmem:[%s3651] sm:$0xff] %vm740, %v3650
        %p3653 = scmp.eq.s32.totalorder %s31, 1
        // Predicated region
        $region73: #{_lambda_.1} parent=67 // pred_check
          %p3654 = pneg %p3653
        $region74: #{_lambda_.1} parent=67 // pred_check_branch
          %3656 = sbr.rel (%p3654) target = $region76
        $region75: #{_lambda_.1} parent=67 // pred_region
          %v3657 = vld [vmem:[#allocation2] sm:$0xff]
          %v3658 = vld [vmem:[#allocation2 + $0x8] sm:$0xff]
          %v3659 = vld [vmem:[#allocation2 + $0x10] sm:$0xff]
          %v3660 = vld [vmem:[#allocation2 + $0x18] sm:$0xff]
          %v3661 = vld [vmem:[#allocation2 + $0x20] sm:$0xff]
          %v3662 = vld [vmem:[#allocation2 + $0x28] sm:$0xff]
          %v3663 = vld [vmem:[#allocation2 + $0x30] sm:$0xff]
          %v3664 = vld [vmem:[#allocation2 + $0x38] sm:$0xff]
          %v3665 = vpack.c.bf16 %v3658, %v3657
          %v3666 = vpack.c.bf16 %v3660, %v3659
          %v3667 = vpack.c.bf16 %v3662, %v3661
          %v3668 = vpack.c.bf16 %v3664, %v3663
          %v3669 = vld [vmem:[%s9] sm:$0xf]
          %v3670 = vld [vmem:[%s9 + $0x4] sm:$0xf]
          %v3671 = vld [vmem:[%s9 + $0x8] sm:$0xf]
          %v3672 = vld [vmem:[%s9 + $0xc] sm:$0xf]
          %v3673 = vld [vmem:[%s9 + $0x10] sm:$0xf]
          %v3674 = vld [vmem:[%s9 + $0x14] sm:$0xf]
          %v3675 = vld [vmem:[%s9 + $0x18] sm:$0xf]
          %v3676 = vld [vmem:[%s9 + $0x1c] sm:$0xf]
          %v3677 = vld [vmem:[%s9 + $0x20] sm:$0xf]
          %v3678 = vld [vmem:[%s9 + $0x24] sm:$0xf]
          %v3679 = vld [vmem:[%s9 + $0x28] sm:$0xf]
          %v3680 = vld [vmem:[%s9 + $0x2c] sm:$0xf]
          %v3681 = vld [vmem:[%s9 + $0x30] sm:$0xf]
          %v3682 = vld [vmem:[%s9 + $0x34] sm:$0xf]
          %v3683 = vld [vmem:[%s9 + $0x38] sm:$0xf]
          %v3684 = vld [vmem:[%s9 + $0x3c] sm:$0xf]
          %v3701 = vunpack.c.l.b16 %v3669
          %v3702 = vunpack.c.l.b16 %v3670
          %v3703 = vunpack.c.l.b16 %v3671
          %v3704 = vunpack.c.l.b16 %v3672
          %v3705 = vunpack.c.l.b16 %v3673
          %v3706 = vunpack.c.l.b16 %v3674
          %v3707 = vunpack.c.l.b16 %v3675
          %v3708 = vunpack.c.l.b16 %v3676
          %v3709 = vunpack.c.l.b16 %v3677
          %v3710 = vunpack.c.l.b16 %v3678
          %v3711 = vunpack.c.l.b16 %v3679
          %v3712 = vunpack.c.l.b16 %v3680
          %v3713 = vunpack.c.l.b16 %v3681
          %v3714 = vunpack.c.l.b16 %v3682
          %v3715 = vunpack.c.l.b16 %v3683
          %v3716 = vunpack.c.l.b16 %v3684
          %v3717 = vpack.c.b16 %v3702, %v3701
          %v3718 = vpack.c.b16 %v3704, %v3703
          %v3719 = vpack.c.b16 %v3706, %v3705
          %v3720 = vpack.c.b16 %v3708, %v3707
          %v3721 = vpack.c.b16 %v3710, %v3709
          %v3722 = vpack.c.b16 %v3712, %v3711
          %v3723 = vpack.c.b16 %v3714, %v3713
          %v3724 = vpack.c.b16 %v3716, %v3715
          %v3726 = vsel %vm740, %v3665, 0
          %v3729 = vsel %vm740, %v3666, 0
          %v3732 = vsel %vm740, %v3667, 0
          %v3735 = vsel %vm740, %v3668, 0
          %v3738 = vsel %vm740, %v3717, 0
          %v3741 = vsel %vm740, %v3718, 0
          %v3744 = vsel %vm740, %v3719, 0
          %v3747 = vsel %vm740, %v3720, 0
          %v3750 = vsel %vm740, %v3721, 0
          %v3753 = vsel %vm740, %v3722, 0
          %v3756 = vsel %vm740, %v3723, 0
          %v3759 = vsel %vm740, %v3724, 0
          %3761 = vmatprep.subr.bf16.mxu0 0
          %3762 = vmatpush1.bf16.xpose.msra.mxu0 %v3738
          %3763 = vmatprep.subr.bf16.mxu0 0
          %3764 = vmatpush1.bf16.xpose.msra.mxu0 %v3741
          %3765 = vmatprep.subr.bf16.mxu0 0
          %3766 = vmatpush1.bf16.xpose.msra.mxu0 %v3744
          %3767 = vmatprep.subr.bf16.mxu0 0
          %3768 = vmatpush1.bf16.xpose.msra.mxu0 %v3747
          %3769 = vmatprep.subr.bf16.mxu0 0
          %3770 = vmatpush1.bf16.xpose.msra.mxu0 %v3750
          %3771 = vmatprep.subr.bf16.mxu0 0
          %3772 = vmatpush1.bf16.xpose.msra.mxu0 %v3753
          %3773 = vmatprep.subr.bf16.mxu0 0
          %3774 = vmatpush1.bf16.xpose.msra.mxu0 %v3756
          %3775 = vmatprep.subr.bf16.mxu0 0
          %3776 = vmatpush1.bf16.xpose.msra.mxu0 %v3759
          %3777 = vmatprep.subr.bf16.mxu0 0
          %3778 = vmatpush1.bf16.xpose.msra.mxu0 0
          %3779 = vmatprep.subr.bf16.mxu0 0
          %3780 = vmatpush1.bf16.xpose.msra.mxu0 0
          %3781 = vmatprep.subr.bf16.mxu0 0
          %3782 = vmatpush1.bf16.xpose.msra.mxu0 0
          %3783 = vmatprep.subr.bf16.mxu0 0
          %3784 = vmatpush1.bf16.xpose.msra.mxu0 0
          %3785 = vmatprep.subr.bf16.mxu0 0
          %3786 = vmatpush1.bf16.xpose.msra.mxu0 0
          %3787 = vmatprep.subr.bf16.mxu0 0
          %3788 = vmatpush1.bf16.xpose.msra.mxu0 0
          %3789 = vmatprep.subr.bf16.mxu0 0
          %3790 = vmatpush1.bf16.xpose.msra.mxu0 0
          %3791 = vmatprep.subr.bf16.mxu0 0
          %3792 = vmatpush1.bf16.xpose.msra.mxu0 0
          %3793 = vmatprep.mubr.bf16.mxu0 0
          %3794 = vmatmul.mubr.bf16.gmra.mrb[0].mxu0 %v3726
          %v3795 = vpop.f32.mrb[0].mxu0
          %v3796 = vadd.f32 0.0, %v3795
          %v3797 = vpop.f32.mrb[0].mxu0
          %v3798 = vpop.f32.mrb[0].mxu0
          %v3799 = vadd.f32 0.0, %v3798
          %v3800 = vpop.f32.mrb[0].mxu0
          %3801 = vmatprep.mubr.bf16.mxu0 0
          %3802 = vmatmul.mubr.bf16.gmra.mrb[0].mxu0 %v3729
          %v3803 = vpop.f32.mrb[0].mxu0
          %v3804 = vadd.f32 0.0, %v3803
          %v3805 = vpop.f32.mrb[0].mxu0
          %v3806 = vpop.f32.mrb[0].mxu0
          %v3807 = vadd.f32 0.0, %v3806
          %v3808 = vpop.f32.mrb[0].mxu0
          %3809 = vmatprep.mubr.bf16.mxu0 0
          %3810 = vmatmul.mubr.bf16.gmra.mrb[0].mxu0 %v3732
          %v3811 = vpop.f32.mrb[0].mxu0
          %v3812 = vadd.f32 0.0, %v3811
          %v3813 = vpop.f32.mrb[0].mxu0
          %v3814 = vpop.f32.mrb[0].mxu0
          %v3815 = vadd.f32 0.0, %v3814
          %v3816 = vpop.f32.mrb[0].mxu0
          %3817 = vmatprep.mubr.bf16.mxu0 0
          %3818 = vmatmul.mubr.bf16.gmra.mrb[0].mxu0 %v3735
          %v3819 = vpop.f32.mrb[0].mxu0
          %v3820 = vadd.f32 0.0, %v3819
          %v3821 = vpop.f32.mrb[0].mxu0
          %v3822 = vpop.f32.mrb[0].mxu0
          %v3823 = vadd.f32 0.0, %v3822
          %v3824 = vpop.f32.mrb[0].mxu0
          %3825 = vdwg.mxu0
          %v3826 = vld [vmem:[%s10] sm:$0xff]
          %v3827 = vmul.f32 %v3796, %v3826
          %v3828 = vmul.f32 %v3799, %v3826
          %v3829 = vmul.f32 %v3804, %v3826
          %v3830 = vmul.f32 %v3807, %v3826
          %v3831 = vmul.f32 %v3812, %v3826
          %v3832 = vmul.f32 %v3815, %v3826
          %v3833 = vmul.f32 %v3820, %v3826
          %v3834 = vmul.f32 %v3823, %v3826
          %v3835 = vrot.slane %v3827, 4
          %v3836 = vadd.f32 %v3827, %v3835
          %v3837 = vrot.slane %v3836, 2
          %v3838 = vadd.f32 %v3836, %v3837
          %v3839 = vrot.slane %v3838, 1
          %v3840 = vadd.f32 %v3838, %v3839
          %v3841 = vrot.slane %v3828, 4
          %v3842 = vadd.f32 %v3828, %v3841
          %v3843 = vrot.slane %v3842, 2
          %v3844 = vadd.f32 %v3842, %v3843
          %v3845 = vrot.slane %v3844, 1
          %v3846 = vadd.f32 %v3844, %v3845
          %v3847 = vrot.slane %v3829, 4
          %v3848 = vadd.f32 %v3829, %v3847
          %v3849 = vrot.slane %v3848, 2
          %v3850 = vadd.f32 %v3848, %v3849
          %v3851 = vrot.slane %v3850, 1
          %v3852 = vadd.f32 %v3850, %v3851
          %v3853 = vrot.slane %v3830, 4
          %v3854 = vadd.f32 %v3830, %v3853
          %v3855 = vrot.slane %v3854, 2
          %v3856 = vadd.f32 %v3854, %v3855
          %v3857 = vrot.slane %v3856, 1
          %v3858 = vadd.f32 %v3856, %v3857
          %v3859 = vrot.slane %v3831, 4
          %v3860 = vadd.f32 %v3831, %v3859
          %v3861 = vrot.slane %v3860, 2
          %v3862 = vadd.f32 %v3860, %v3861
          %v3863 = vrot.slane %v3862, 1
          %v3864 = vadd.f32 %v3862, %v3863
          %v3865 = vrot.slane %v3832, 4
          %v3866 = vadd.f32 %v3832, %v3865
          %v3867 = vrot.slane %v3866, 2
          %v3868 = vadd.f32 %v3866, %v3867
          %v3869 = vrot.slane %v3868, 1
          %v3870 = vadd.f32 %v3868, %v3869
          %v3871 = vrot.slane %v3833, 4
          %v3872 = vadd.f32 %v3833, %v3871
          %v3873 = vrot.slane %v3872, 2
          %v3874 = vadd.f32 %v3872, %v3873
          %v3875 = vrot.slane %v3874, 1
          %v3876 = vadd.f32 %v3874, %v3875
          %v3877 = vrot.slane %v3834, 4
          %v3878 = vadd.f32 %v3834, %v3877
          %v3879 = vrot.slane %v3878, 2
          %v3880 = vadd.f32 %v3878, %v3879
          %v3881 = vrot.slane %v3880, 1
          %v3882 = vadd.f32 %v3880, %v3881
          %v3883 = vld [vmem:[%s11] sm:$0x1]
          %v3885 = vlaneseq
          %v3886 = vshrl.u32 %v3885, 7
          %v3887 = vsub.s32 0, %v3886
          %v3888 = vrot.slane %v3883, %v3887
          %v3890 = vadd.f32 %v3840, %v3888
          %v3891 = vadd.f32 %v3846, %v3888
          %v3892 = vadd.f32 %v3852, %v3888
          %v3893 = vadd.f32 %v3858, %v3888
          %v3894 = vadd.f32 %v3864, %v3888
          %v3895 = vadd.f32 %v3870, %v3888
          %v3896 = vadd.f32 %v3876, %v3888
          %v3897 = vadd.f32 %v3882, %v3888
          %v3906 = vrot.slane %v3891, 7
          %v3907 = vsel %vm3392, %v3906, %v3890
          %v3908 = vrot.slane %v3892, 6
          %v3909 = vsel %vm3395, %v3908, %v3907
          %v3910 = vrot.slane %v3893, 5
          %v3911 = vsel %vm3398, %v3910, %v3909
          %v3912 = vrot.slane %v3894, 4
          %v3913 = vsel %vm3401, %v3912, %v3911
          %v3914 = vrot.slane %v3895, 3
          %v3915 = vsel %vm3404, %v3914, %v3913
          %v3916 = vrot.slane %v3896, 2
          %v3917 = vsel %vm3407, %v3916, %v3915
          %v3918 = vrot.slane %v3897, 1
          %v3919 = vsel %vm3410, %v3918, %v3917
          %3921 = vst [vmem:[%s503] sm:$0xff] %v3919
        $region76: #{_lambda_.1} parent=67 // pred_fallthru
          _
        %s3922 = sand.u32 %s333, 1
        %s3923 = scalar_lea.sflag [#allocation6], %s3922
        %s3924 = sand.u32 %s333, 1
        %s3925 = smul.addr %s3924, 8
        %s3926 = scalar_lea.vmem [#allocation5], %s3925
        // Predicated region
        $region77: #{_lambda_.1} parent=67 // pred_check
          %p3927 = pneg %p343
        $region78: #{_lambda_.1} parent=67 // pred_check_branch
          %3929 = sbr.rel (%p3927) target = $region80
        $region79: #{_lambda_.1} parent=67 // pred_region
          %s3931 = ssub.s32 128, 128
          %3932 = vsyncadd %s3923, %s3931
          %s3933 = smul.addr %s30, 128
          %s3934 = scalar_lea.hbm %s12, %s3933
          %s3936 = sshll.u32 %s3926, 4
          %s3937 = int_to_ptr.vmem [resolvable:$true] %s3936
          %3939 = dma.vmem_to_hbm [thread:$0]  %s3937, 128, %s3934, %s3923
        $region80: #{_lambda_.1} parent=67 // pred_fallthru
          _
      $region68: #{_lambda_.1} parent=5 // pred_fallthru
        _
      %p3940 = scmp.le.s32.totalorder 2, %s21
      // Predicated region
      $region81: #{_lambda_.1} parent=5 // pred_check
        %p3941 = pneg %p3940
      $region82: #{_lambda_.1} parent=5 // pred_check_branch
        %3943 = sbr.rel (%p3941) target = $region84
      $region83: #{_lambda_.1} parent=5 // pred_region
        %s3944 = ssub.s32 %s21, 2
        // Predicated region
        $region85: #{_lambda_.1} parent=83 // pred_check
          %p3945 = pneg %p349
        $region86: #{_lambda_.1} parent=83 // pred_check_branch
          %3947 = sbr.rel (%p3945) target = $region88
        $region87: #{_lambda_.1} parent=83 // pred_region
          %s3948 = sand.u32 %s334, 1
          %s3949 = scalar_lea.sflag [#allocation6], %s3948
          %s3950 = sand.u32 %s334, 1
          %s3951 = smul.addr %s3950, 8
          %s3952 = scalar_lea.vmem [#allocation5], %s3951
          %3953 = dma.done %s3949, 128
        $region88: #{_lambda_.1} parent=83 // pred_fallthru
          _
      $region84: #{_lambda_.1} parent=5 // pred_fallthru
        _
    $region6: #{_lambda_.1} parent=1 // loop_footer
      %s25 = sadd.s32 1, %s21
    $region7: #{_lambda_.1} parent=1 // loop_footer_branch
      %20 = sbr.rel target = $region3
    $region8: #{_lambda_.1} parent=1 // loop_exit
      _
    %3954 = vsyncpa [#allocation6], 1
    %s3955 = scalar_lea.sflag [#allocation6], 1
    %3956 = vsyncpa %s3955, 1

</llo_original>
